<compile_context>
chip_gen: v7x
topology: tpu7x:2x2x1
jax: 0.10.0
libtpu: 0.0.40
codegen_flags: <defaults>
</compile_context>

<pallas_src>
import functools

import jax
import jax.numpy as jnp
import numpy as np
from jax import lax
from jax.experimental import pallas as pl
from jax.experimental.pallas import tpu as pltpu

NEG = -1e30                       # Python float (NOT a jax Array) -> no captured
                                  # constants inside kernels; exp(NEG - m) == 0
_VMEM_LIMIT = 32 * 1024 * 1024    # safe on v5e/v6e (128 MiB) and v7x (64 MiB)


def _round_up(v, m):
    return (v + m - 1) // m * m


# ---------------------------------------------------------------------------
# Kernel A: fused 1x1x1 Conv3d projections (q, k, v) as ONE MXU matmul / tile.
#   x is fed channels-first, voxels-last:  (C, TN)  -> lane-dense.
# ---------------------------------------------------------------------------
def _qkv_proj_kernel(x_ref, w_ref, b_ref, q_ref, k_ref, v_ref, *, cq, c, cq_pad):
    # x_ref: (C, TN);  w_ref: (Ct, C);  b_ref: (Ct, 1)  (rows: [q|pad][k|pad][v])
    y = jnp.dot(w_ref[...], x_ref[...],
                preferred_element_type=jnp.float32,
                precision=lax.Precision.HIGHEST) + b_ref[...]
    q_ref[...] = y[0:cq, :]
    k_ref[...] = y[cq_pad:cq_pad + cq, :]
    v_ref[...] = y[2 * cq_pad:2 * cq_pad + c, :]


def qkv_project(x3, w_all, b_all, cq, cq_pad, *, max_tn=512):
    B, C, N = x3.shape
    Ct = w_all.shape[0]
    TN = N if N <= max_tn else max_tn
    kern = functools.partial(_qkv_proj_kernel, cq=cq, c=C, cq_pad=cq_pad)
    return pl.pallas_call(
        kern,
        out_shape=(jax.ShapeDtypeStruct((B, cq, N), jnp.float32),
                   jax.ShapeDtypeStruct((B, cq, N), jnp.float32),
                   jax.ShapeDtypeStruct((B, C, N), jnp.float32)),
        grid=(B, pl.cdiv(N, TN)),
        in_specs=[pl.BlockSpec((None, C, TN), lambda b, i: (b, 0, i)),
                  pl.BlockSpec((Ct, C), lambda b, i: (0, 0)),
                  pl.BlockSpec((Ct, 1), lambda b, i: (0, 0))],
        out_specs=(pl.BlockSpec((None, cq, TN), lambda b, i: (b, 0, i)),
                   pl.BlockSpec((None, cq, TN), lambda b, i: (b, 0, i)),
                   pl.BlockSpec((None, C, TN), lambda b, i: (b, 0, i))),
        compiler_params=pltpu.CompilerParams(
            dimension_semantics=("parallel", "parallel"),
            vmem_limit_bytes=_VMEM_LIMIT),
    )(x3, w_all, b_all)


# ---------------------------------------------------------------------------
# Kernel B: per-line attention (used for the H, W and D directions).
#   Lines are in the lane dim (TG), line positions / channels in leading dims.
#       q: (1,  Lg, Cq, G)   queries  (line position i in dim 1)
#       k: (Lg, 1,  Cq, G)   keys     (line position j in dim 0)
#       v: (Lg, 1,  C,  G)   values   (line position j in dim 0)
#   Outputs: unnormalized per-line softmax stats for the exact joint softmax:
#       o: (Lg, C, G)   sum_j exp(e_ij - m_i) * v_j
#       m: (Lg, 1, G)   row max,   l: (Lg, 1, G)  row sum of exp
# ---------------------------------------------------------------------------
def _line_attn_kernel(q_ref, k_ref, v_ref, o_ref, m_ref, l_ref, *, masked):
    q = q_ref[...]                                     # (1,  Lg, Cq, TG)
    k = k_ref[...]                                     # (Lg, 1,  Cq, TG)
    v = v_ref[...]                                     # (Lg, 1,  C,  TG)
    lg = k.shape[0]
    tg = k.shape[3]
    # energies e[j, i, 0, g] = sum_c k[j, 0, c, g] * q[0, i, c, g]
    e = jnp.sum(k * q, axis=2, keepdims=True)          # (Lg, Lg, 1, TG)
    if masked:                                         # INF3DH / INF3DD diagonal
        jj = lax.broadcasted_iota(jnp.int32, (lg, lg, 1, tg), 0)
        ii = lax.broadcasted_iota(jnp.int32, (lg, lg, 1, tg), 1)
        e = e + jnp.where(jj == ii, NEG, 0.0)          # literal floats only
    m = jnp.max(e, axis=0, keepdims=True)              # (1, Lg, 1, TG)
    p = jnp.exp(e - m)                                 # (Lg, Lg, 1, TG)
    l = jnp.sum(p, axis=0)                             # (Lg, 1, TG)
    # o[i, c, g] = sum_j p[j, i, 0, g] * v[j, 0, c, g]
    o = p[0] * v[0]                                    # (Lg, C, TG)
    for j in range(1, lg):
        o = o + p[j] * v[j]
    o_ref[...] = o
    m_ref[...] = m[0]
    l_ref[...] = l


def line_attention(q4, k4, v4, *, masked, max_tg=512):
    _, Lg, Cq, G = q4.shape
    C = v4.shape[2]
    TG = G if G <= max_tg else max_tg
    kern = functools.partial(_line_attn_kernel, masked=masked)
    return pl.pallas_call(
        kern,
        out_shape=(jax.ShapeDtypeStruct((Lg, C, G), jnp.float32),
                   jax.ShapeDtypeStruct((Lg, 1, G), jnp.float32),
                   jax.ShapeDtypeStruct((Lg, 1, G), jnp.float32)),
        grid=(pl.cdiv(G, TG),),
        in_specs=[pl.BlockSpec((1, Lg, Cq, TG), lambda g: (0, 0, 0, g)),
                  pl.BlockSpec((Lg, 1, Cq, TG), lambda g: (0, 0, 0, g)),
                  pl.BlockSpec((Lg, 1, C, TG), lambda g: (0, 0, 0, g))],
        out_specs=(pl.BlockSpec((Lg, C, TG), lambda g: (0, 0, g)),
                   pl.BlockSpec((Lg, 1, TG), lambda g: (0, 0, g)),
                   pl.BlockSpec((Lg, 1, TG), lambda g: (0, 0, g))),
        compiler_params=pltpu.CompilerParams(
            dimension_semantics=("parallel",),
            vmem_limit_bytes=_VMEM_LIMIT),
    )(q4, k4, v4)


# ---------------------------------------------------------------------------
# Kernel C: exact joint-softmax merge of the three line passes + residual.
#   Everything is (C, TN) / (1, TN) lane-dense; gamma lives in SMEM.
# ---------------------------------------------------------------------------
def _merge_kernel(x_ref, oh_ref, ow_ref, od_ref,
                  mh_ref, lh_ref, mw_ref, lw_ref, md_ref, ld_ref,
                  g_ref, out_ref):
    mh = mh_ref[...]                                   # (1, TN)
    mw = mw_ref[...]
    md = md_ref[...]
    m = jnp.maximum(jnp.maximum(mh, mw), md)
    ah = jnp.exp(mh - m)
    aw = jnp.exp(mw - m)
    ad = jnp.exp(md - m)
    z = lh_ref[...] * ah + lw_ref[...] * aw + ld_ref[...] * ad
    num = oh_ref[...] * ah + ow_ref[...] * aw + od_ref[...] * ad   # (C, TN)
    out_ref[...] = g_ref[0, 0] * (num / z) + x_ref[...]


def cc_merge(x3, oh3, ow3, od3, mh3, lh3, mw3, lw3, md3, ld3, gamma2,
             *, max_tn=512):
    B, C, N = x3.shape
    TN = N if N <= max_tn else max_tn
    full = pl.BlockSpec((None, C, TN), lambda b, i: (b, 0, i))
    stat = pl.BlockSpec((None, 1, TN), lambda b, i: (b, 0, i))
    return pl.pallas_call(
        _merge_kernel,
        out_shape=jax.ShapeDtypeStruct((B, C, N), jnp.float32),
        grid=(B, pl.cdiv(N, TN)),
        in_specs=[full, full, full, full,
                  stat, stat, stat, stat, stat, stat,
                  pl.BlockSpec(memory_space=pltpu.MemorySpace.SMEM)],
        out_specs=full,
        compiler_params=pltpu.CompilerParams(
            dimension_semantics=("parallel", "parallel"),
            vmem_limit_bytes=_VMEM_LIMIT),
    )(x3, oh3, ow3, od3, mh3, lh3, mw3, lw3, md3, ld3, gamma2)


# ---------------------------------------------------------------------------
# SIA forward: layout glue (tiny XLA transposes) + the three kernels.
# ---------------------------------------------------------------------------
@jax.jit
def sia_forward(x, params):
    wq, bq, wk, bk, wv, bv, gamma = params
    B, C, H, W, D = x.shape
    Cq = wq.shape[0]
    N = H * W * D
    x3 = x.reshape(B, C, N)                            # n = (h*W + w)*D + d

    # fused projection weights, q/k blocks padded to 8-aligned row offsets
    cq_pad = _round_up(Cq, 8)
    pad = cq_pad - Cq
    zw = jnp.zeros((pad, C), jnp.float32)
    zb = jnp.zeros((pad,), jnp.float32)
    w_all = jnp.concatenate([wq, zw, wk, zw, wv], axis=0)
    b_all = jnp.concatenate([bq, zb, bk, zb, bv], axis=0)[:, None]
    q3, k3, v3 = qkv_project(x3, w_all, b_all, Cq, cq_pad)

    q5 = q3.reshape(B, Cq, H, W, D)
    k5 = k3.reshape(B, Cq, H, W, D)
    v5 = v3.reshape(B, C, H, W, D)

    def line_layout(t5, perm, lg, g):
        # -> (line_pos, channels, line_group) with line_group in lanes
        return t5.transpose(perm).reshape(lg, t5.shape[1], g)

    # H lines (diag masked), groups g = (b, w, d)
    GH = B * W * D
    qh = line_layout(q5, (2, 1, 0, 3, 4), H, GH)
    kh = line_layout(k5, (2, 1, 0, 3, 4), H, GH)
    vh = line_layout(v5, (2, 1, 0, 3, 4), H, GH)
    oH, mH, lH = line_attention(qh[None], kh[:, None], vh[:, None], masked=True)

    # W lines (unmasked), groups g = (b, h, d)
    GW = B * H * D
    qw = line_layout(q5, (3, 1, 0, 2, 4), W, GW)
    kw = line_layout(k5, (3, 1, 0, 2, 4), W, GW)
    vw = line_layout(v5, (3, 1, 0, 2, 4), W, GW)
    oW, mW, lW = line_attention(qw[None], kw[:, None], vw[:, None], masked=False)

    # D lines (diag masked), groups g = (b, h, w)
    GD = B * H * W
    qd = line_layout(q5, (4, 1, 0, 2, 3), D, GD)
    kd = line_layout(k5, (4, 1, 0, 2, 3), D, GD)
    vd = line_layout(v5, (4, 1, 0, 2, 3), D, GD)
    oD, mD, lD = line_attention(qd[None], kd[:, None], vd[:, None], masked=True)

    # back to the common (B, C, N) / (B, 1, N) voxel-major layout
    oh3 = oH.reshape(H, C, B, W, D).transpose(2, 1, 0, 3, 4).reshape(B, C, N)
    ow3 = oW.reshape(W, C, B, H, D).transpose(2, 1, 3, 0, 4).reshape(B, C, N)
    od3 = oD.reshape(D, C, B, H, W).transpose(2, 1, 3, 4, 0).reshape(B, C, N)
    mh3 = mH.reshape(H, B, W, D).transpose(1, 0, 2, 3).reshape(B, 1, N)
    lh3 = lH.reshape(H, B, W, D).transpose(1, 0, 2, 3).reshape(B, 1, N)
    mw3 = mW.reshape(W, B, H, D).transpose(1, 2, 0, 3).reshape(B, 1, N)
    lw3 = lW.reshape(W, B, H, D).transpose(1, 2, 0, 3).reshape(B, 1, N)
    md3 = mD.reshape(D, B, H, W).transpose(1, 2, 3, 0).reshape(B, 1, N)
    ld3 = lD.reshape(D, B, H, W).transpose(1, 2, 3, 0).reshape(B, 1, N)

    out3 = cc_merge(x3, oh3, ow3, od3, mh3, lh3, mw3, lw3, md3, ld3,
                    gamma.reshape(1, 1))
    return out3.reshape(B, C, H, W, D)


def rsia_forward(x, params, recurrence=2):
    # RSIA.forward re-applies SIA to the ORIGINAL x each iteration and returns
    # only the last output, so for any recurrence >= 1 the result equals SIA(x).
    # Compute it once (identical semantics, `recurrence`x less work).
    assert recurrence >= 1
    return sia_forward(x, params)


# ---------------------------------------------------------------------------
# Pure-JAX reference (direct transcription of the PyTorch math) for checking
# ---------------------------------------------------------------------------
def sia_reference(x, params):
    wq, bq, wk, bk, wv, bv, gamma = params
    B, C, H, W, D = x.shape
    P = lax.Precision.HIGHEST
    q = jnp.einsum('oc,bchwd->bohwd', wq, x, precision=P) + bq[None, :, None, None, None]
    k = jnp.einsum('oc,bchwd->bohwd', wk, x, precision=P) + bk[None, :, None, None, None]
    v = jnp.einsum('oc,bchwd->bohwd', wv, x, precision=P) + bv[None, :, None, None, None]
    eyeH = (jnp.arange(H)[:, None] == jnp.arange(H)[None, :]).astype(jnp.float32) * NEG
    eyeD = (jnp.arange(D)[:, None] == jnp.arange(D)[None, :]).astype(jnp.float32) * NEG
    eH = jnp.einsum('bchwd,bcjwd->bhwdj', q, k, precision=P) + eyeH[None, :, None, None, :]
    eW = jnp.einsum('bchwd,bchjd->bhwdj', q, k, precision=P)
    eD = jnp.einsum('bchwd,bchwj->bhwdj', q, k, precision=P) + eyeD[None, None, None, :, :]
    a = jax.nn.softmax(jnp.concatenate([eH, eW, eD], axis=-1), axis=-1)
    aH, aW, aD = a[..., :H], a[..., H:H + W], a[..., H + W:]
    outH = jnp.einsum('bhwdj,bcjwd->bchwd', aH, v, precision=P)
    outW = jnp.einsum('bhwdj,bchjd->bchwd', aW, v, precision=P)
    outD = jnp.einsum('bhwdj,bchwj->bchwd', aD, v, precision=P)
    return gamma * (outH + outW + outD) + x


# ---------------------------------------------------------------------------
if __name__ == "__main__":
    B, C, H, W, D = 2, 16, 8, 8, 8
    Cq = C // 8                                      # query/key channels = in_dim // 8

    key = jax.random.PRNGKey(0)
    r0, r1, r2, r3, r4, r5, r6 = jax.random.split(key, 7)
    x = jax.random.normal(r0, (B, C, H, W, D), jnp.float32)

    s = 1.0 / float(np.sqrt(C))
    wq = jax.random.normal(r1, (Cq, C), jnp.float32) * s
    bq = jax.random.normal(r2, (Cq,), jnp.float32) * 0.1
    wk = jax.random.normal(r3, (Cq, C), jnp.float32) * s
    bk = jax.random.normal(r4, (Cq,), jnp.float32) * 0.1
    wv = jax.random.normal(r5, (C, C), jnp.float32) * s
    bv = jax.random.normal(r6, (C,), jnp.float32) * 0.1
    # NOTE: PyTorch initialises gamma to 0 (output == x exactly); use a nonzero
    # gamma so the attention path is actually exercised.
    gamma = jnp.array([0.5], jnp.float32)
    params = (wq, bq, wk, bk, wv, bv, gamma)

    out = rsia_forward(x, params, recurrence=2)
    out = jax.block_until_ready(out)

    ref = sia_reference(x, params)
    assert out.shape == x.shape and out.dtype == x.dtype
    if not np.allclose(np.asarray(out), np.asarray(ref), rtol=5e-3, atol=5e-3):
        raise AssertionError("Pallas kernel output mismatch vs JAX reference")
    print("KERNEL_OK")
</pallas_src>

<mosaic_0001>
module attributes {stable_mosaic.version = 11 : i64} {
  func.func @_qkv_proj_kernel(%arg0: i32, %arg1: i32, %arg2: memref<1x16x512xf32, #tpu.memory_space<vmem>>, %arg3: memref<32x16xf32, #tpu.memory_space<vmem>>, %arg4: memref<32x1xf32, #tpu.memory_space<vmem>>, %arg5: memref<1x2x512xf32, #tpu.memory_space<vmem>>, %arg6: memref<1x2x512xf32, #tpu.memory_space<vmem>>, %arg7: memref<1x16x512xf32, #tpu.memory_space<vmem>>) attributes {dimension_semantics = [#tpu.dimension_semantics<parallel>, #tpu.dimension_semantics<parallel>], iteration_bounds = array<i64: 2, 1>, scalar_prefetch = 0 : i64, scratch_operands = 0 : i64, tpu.core_type = #tpu.core_type<tc>, window_params = [{transform_indices = @transform_0, window_bounds = array<i64: 1, 16, 512>}, {pipeline_mode = #tpu.pipeline_mode<synchronous>, transform_indices = @transform_1, window_bounds = array<i64: 32, 16>}, {pipeline_mode = #tpu.pipeline_mode<synchronous>, transform_indices = @transform_2, window_bounds = array<i64: 32, 1>}, {transform_indices = @transform_3, window_bounds = array<i64: 1, 2, 512>}, {transform_indices = @transform_4, window_bounds = array<i64: 1, 2, 512>}, {transform_indices = @transform_5, window_bounds = array<i64: 1, 16, 512>}]} {
    %c0 = arith.constant 0 : index
    %c0_0 = arith.constant 0 : index
    %0 = vector.load %arg3[%c0, %c0_0] : memref<32x16xf32, #tpu.memory_space<vmem>>, vector<32x16xf32>
    %c0_1 = arith.constant 0 : index
    %c0_2 = arith.constant 0 : index
    %c0_3 = arith.constant 0 : index
    %1 = vector.load %arg2[%c0_1, %c0_2, %c0_3] : memref<1x16x512xf32, #tpu.memory_space<vmem>>, vector<1x16x512xf32>
    %2 = vector.shape_cast %1 : vector<1x16x512xf32> to vector<16x512xf32>
    %cst = arith.constant dense<0.000000e+00> : vector<32x512xf32>
    %3 = tpu.matmul %0, %2, %cst {dimension_numbers = #tpu.dot_dimension_numbers<[1], [0], [0], [1], [0, 0, 1, 1], [], []>, precision = #tpu.contract_precision<fp32>} : vector<32x16xf32>, vector<16x512xf32>, vector<32x512xf32> -> vector<32x512xf32>
    %c0_4 = arith.constant 0 : index
    %c0_5 = arith.constant 0 : index
    %4 = vector.load %arg4[%c0_4, %c0_5] : memref<32x1xf32, #tpu.memory_space<vmem>>, vector<32x1xf32>
    %5 = vector.broadcast %4 : vector<32x1xf32> to vector<32x512xf32>
    %6 = arith.addf %3, %5 : vector<32x512xf32>
    %7 = vector.extract_strided_slice %6 {offsets = [0, 0], sizes = [2, 512], strides = [1, 1]} : vector<32x512xf32> to vector<2x512xf32>
    %c0_6 = arith.constant 0 : index
    %c0_7 = arith.constant 0 : index
    %c0_8 = arith.constant 0 : index
    %8 = vector.load %arg5[%c0_6, %c0_7, %c0_8] : memref<1x2x512xf32, #tpu.memory_space<vmem>>, vector<1x2x512xf32>
    %9 = vector.shape_cast %8 : vector<1x2x512xf32> to vector<2x512xf32>
    %10 = vector.shape_cast %7 : vector<2x512xf32> to vector<1x2x512xf32>
    tpu.vector_store %arg5[%c0_6, %c0_7, %c0_8], %10 {strides = array<i32>} : memref<1x2x512xf32, #tpu.memory_space<vmem>>, vector<1x2x512xf32>,
    %11 = vector.extract_strided_slice %6 {offsets = [8, 0], sizes = [2, 512], strides = [1, 1]} : vector<32x512xf32> to vector<2x512xf32>
    %c0_9 = arith.constant 0 : index
    %c0_10 = arith.constant 0 : index
    %c0_11 = arith.constant 0 : index
    %12 = vector.load %arg6[%c0_9, %c0_10, %c0_11] : memref<1x2x512xf32, #tpu.memory_space<vmem>>, vector<1x2x512xf32>
    %13 = vector.shape_cast %12 : vector<1x2x512xf32> to vector<2x512xf32>
    %14 = vector.shape_cast %11 : vector<2x512xf32> to vector<1x2x512xf32>
    tpu.vector_store %arg6[%c0_9, %c0_10, %c0_11], %14 {strides = array<i32>} : memref<1x2x512xf32, #tpu.memory_space<vmem>>, vector<1x2x512xf32>,
    %15 = vector.extract_strided_slice %6 {offsets = [16, 0], sizes = [16, 512], strides = [1, 1]} : vector<32x512xf32> to vector<16x512xf32>
    %c0_12 = arith.constant 0 : index
    %c0_13 = arith.constant 0 : index
    %c0_14 = arith.constant 0 : index
    %16 = vector.load %arg7[%c0_12, %c0_13, %c0_14] : memref<1x16x512xf32, #tpu.memory_space<vmem>>, vector<1x16x512xf32>
    %17 = vector.shape_cast %16 : vector<1x16x512xf32> to vector<16x512xf32>
    %18 = vector.shape_cast %15 : vector<16x512xf32> to vector<1x16x512xf32>
    tpu.vector_store %arg7[%c0_12, %c0_13, %c0_14], %18 {strides = array<i32>} : memref<1x16x512xf32, #tpu.memory_space<vmem>>, vector<1x16x512xf32>,
    return
  }
  func.func @transform_0(%arg0: i32, %arg1: i32) -> (i32, i32, i32) {
    %c0_i32 = arith.constant 0 : i32
    %c0_i32_0 = arith.constant 0 : i32
    return %arg0, %c0_i32, %arg1 : i32, i32, i32
  }
  func.func @transform_1(%arg0: i32, %arg1: i32) -> (i32, i32) {
    %c0_i32 = arith.constant 0 : i32
    %c0_i32_0 = arith.constant 0 : i32
    %c0_i32_1 = arith.constant 0 : i32
    return %c0_i32, %c0_i32_0 : i32, i32
  }
  func.func @transform_2(%arg0: i32, %arg1: i32) -> (i32, i32) {
    %c0_i32 = arith.constant 0 : i32
    %c0_i32_0 = arith.constant 0 : i32
    %c0_i32_1 = arith.constant 0 : i32
    return %c0_i32, %c0_i32_0 : i32, i32
  }
  func.func @transform_3(%arg0: i32, %arg1: i32) -> (i32, i32, i32) {
    %c0_i32 = arith.constant 0 : i32
    %c0_i32_0 = arith.constant 0 : i32
    return %arg0, %c0_i32, %arg1 : i32, i32, i32
  }
  func.func @transform_4(%arg0: i32, %arg1: i32) -> (i32, i32, i32) {
    %c0_i32 = arith.constant 0 : i32
    %c0_i32_0 = arith.constant 0 : i32
    return %arg0, %c0_i32, %arg1 : i32, i32, i32
  }
  func.func @transform_5(%arg0: i32, %arg1: i32) -> (i32, i32, i32) {
    %c0_i32 = arith.constant 0 : i32
    %c0_i32_0 = arith.constant 0 : i32
    return %arg0, %c0_i32, %arg1 : i32, i32, i32
  }
}

module attributes {stable_mosaic.version = 11 : i64} {
  func.func @_line_attn_kernel(%arg0: i32, %arg1: memref<1x8x2x128xf32, #tpu.memory_space<vmem>>, %arg2: memref<8x1x2x128xf32, #tpu.memory_space<vmem>>, %arg3: memref<8x1x16x128xf32, #tpu.memory_space<vmem>>, %arg4: memref<8x16x128xf32, #tpu.memory_space<vmem>>, %arg5: memref<8x1x128xf32, #tpu.memory_space<vmem>>, %arg6: memref<8x1x128xf32, #tpu.memory_space<vmem>>) attributes {dimension_semantics = [#tpu.dimension_semantics<parallel>], iteration_bounds = array<i64: 1>, scalar_prefetch = 0 : i64, scratch_operands = 0 : i64, tpu.core_type = #tpu.core_type<tc>, window_params = [{transform_indices = @transform_0, window_bounds = array<i64: 1, 8, 2, 128>}, {transform_indices = @transform_1, window_bounds = array<i64: 8, 1, 2, 128>}, {transform_indices = @transform_2, window_bounds = array<i64: 8, 1, 16, 128>}, {transform_indices = @transform_3, window_bounds = array<i64: 8, 16, 128>}, {transform_indices = @transform_4, window_bounds = array<i64: 8, 1, 128>}, {transform_indices = @transform_5, window_bounds = array<i64: 8, 1, 128>}]} {
    %c0 = arith.constant 0 : index
    %c0_0 = arith.constant 0 : index
    %c0_1 = arith.constant 0 : index
    %c0_2 = arith.constant 0 : index
    %0 = vector.load %arg1[%c0, %c0_0, %c0_1, %c0_2] : memref<1x8x2x128xf32, #tpu.memory_space<vmem>>, vector<1x8x2x128xf32>
    %c0_3 = arith.constant 0 : index
    %c0_4 = arith.constant 0 : index
    %c0_5 = arith.constant 0 : index
    %c0_6 = arith.constant 0 : index
    %1 = vector.load %arg2[%c0_3, %c0_4, %c0_5, %c0_6] : memref<8x1x2x128xf32, #tpu.memory_space<vmem>>, vector<8x1x2x128xf32>
    %c0_7 = arith.constant 0 : index
    %c0_8 = arith.constant 0 : index
    %c0_9 = arith.constant 0 : index
    %c0_10 = arith.constant 0 : index
    %2 = vector.load %arg3[%c0_7, %c0_8, %c0_9, %c0_10] : memref<8x1x16x128xf32, #tpu.memory_space<vmem>>, vector<8x1x16x128xf32>
    %3 = vector.broadcast %1 : vector<8x1x2x128xf32> to vector<8x8x2x128xf32>
    %4 = vector.broadcast %0 : vector<1x8x2x128xf32> to vector<8x8x2x128xf32>
    %5 = arith.mulf %3, %4 : vector<8x8x2x128xf32>
    %cst = arith.constant dense<0.000000e+00> : vector<8x8x128xf32>
    %6 = vector.multi_reduction <add>, %5, %cst [2] : vector<8x8x2x128xf32> to vector<8x8x128xf32>
    %7 = vector.shape_cast %6 : vector<8x8x128xf32> to vector<8x8x1x128xf32>
    %8 = tpu.iota {dimensions = array<i32: 0>} : vector<8x8x1x128xi32>
    %9 = tpu.iota {dimensions = array<i32: 1>} : vector<8x8x1x128xi32>
    %10 = arith.cmpi eq, %8, %9 : vector<8x8x1x128xi32>
    %cst_11 = arith.constant -1.000000e+30 : f32
    %cst_12 = arith.constant 0.000000e+00 : f32
    %11 = vector.broadcast %cst_11 : f32 to vector<8x8x1x128xf32>
    %12 = vector.broadcast %cst_12 : f32 to vector<8x8x1x128xf32>
    %13 = arith.select %10, %11, %12 : vector<8x8x1x128xi1>, vector<8x8x1x128xf32>
    %14 = arith.addf %7, %13 : vector<8x8x1x128xf32>
    %cst_13 = arith.constant dense<0xFF800000> : vector<8x1x128xf32>
    %15 = vector.multi_reduction <maximumf>, %14, %cst_13 [0] : vector<8x8x1x128xf32> to vector<8x1x128xf32>
    %16 = vector.shape_cast %15 : vector<8x1x128xf32> to vector<1x8x1x128xf32>
    %17 = vector.broadcast %16 : vector<1x8x1x128xf32> to vector<8x8x1x128xf32>
    %18 = arith.subf %14, %17 : vector<8x8x1x128xf32>
    %19 = math.exp %18 : vector<8x8x1x128xf32>
    %cst_14 = arith.constant dense<0.000000e+00> : vector<8x1x128xf32>
    %20 = vector.multi_reduction <add>, %19, %cst_14 [0] : vector<8x8x1x128xf32> to vector<8x1x128xf32>
    %21 = vector.extract_strided_slice %19 {offsets = [0, 0, 0, 0], sizes = [1, 8, 1, 128], strides = [1, 1, 1, 1]} : vector<8x8x1x128xf32> to vector<1x8x1x128xf32>
    %22 = vector.shape_cast %21 : vector<1x8x1x128xf32> to vector<8x1x128xf32>
    %23 = vector.extract_strided_slice %2 {offsets = [0, 0, 0, 0], sizes = [1, 1, 16, 128], strides = [1, 1, 1, 1]} : vector<8x1x16x128xf32> to vector<1x1x16x128xf32>
    %24 = vector.shape_cast %23 : vector<1x1x16x128xf32> to vector<1x16x128xf32>
    %25 = vector.broadcast %22 : vector<8x1x128xf32> to vector<8x16x128xf32>
    %26 = vector.broadcast %24 : vector<1x16x128xf32> to vector<8x16x128xf32>
    %27 = arith.mulf %25, %26 : vector<8x16x128xf32>
    %28 = vector.extract_strided_slice %19 {offsets = [1, 0, 0, 0], sizes = [1, 8, 1, 128], strides = [1, 1, 1, 1]} : vector<8x8x1x128xf32> to vector<1x8x1x128xf32>
    %29 = vector.shape_cast %28 : vector<1x8x1x128xf32> to vector<8x1x128xf32>
    %30 = vector.extract_strided_slice %2 {offsets = [1, 0, 0, 0], sizes = [1, 1, 16, 128], strides = [1, 1, 1, 1]} : vector<8x1x16x128xf32> to vector<1x1x16x128xf32>
    %31 = vector.shape_cast %30 : vector<1x1x16x128xf32> to vector<1x16x128xf32>
    %32 = vector.broadcast %29 : vector<8x1x128xf32> to vector<8x16x128xf32>
    %33 = vector.broadcast %31 : vector<1x16x128xf32> to vector<8x16x128xf32>
    %34 = arith.mulf %32, %33 : vector<8x16x128xf32>
    %35 = arith.addf %27, %34 : vector<8x16x128xf32>
    %36 = vector.extract_strided_slice %19 {offsets = [2, 0, 0, 0], sizes = [1, 8, 1, 128], strides = [1, 1, 1, 1]} : vector<8x8x1x128xf32> to vector<1x8x1x128xf32>
    %37 = vector.shape_cast %36 : vector<1x8x1x128xf32> to vector<8x1x128xf32>
    %38 = vector.extract_strided_slice %2 {offsets = [2, 0, 0, 0], sizes = [1, 1, 16, 128], strides = [1, 1, 1, 1]} : vector<8x1x16x128xf32> to vector<1x1x16x128xf32>
    %39 = vector.shape_cast %38 : vector<1x1x16x128xf32> to vector<1x16x128xf32>
    %40 = vector.broadcast %37 : vector<8x1x128xf32> to vector<8x16x128xf32>
    %41 = vector.broadcast %39 : vector<1x16x128xf32> to vector<8x16x128xf32>
    %42 = arith.mulf %40, %41 : vector<8x16x128xf32>
    %43 = arith.addf %35, %42 : vector<8x16x128xf32>
    %44 = vector.extract_strided_slice %19 {offsets = [3, 0, 0, 0], sizes = [1, 8, 1, 128], strides = [1, 1, 1, 1]} : vector<8x8x1x128xf32> to vector<1x8x1x128xf32>
    %45 = vector.shape_cast %44 : vector<1x8x1x128xf32> to vector<8x1x128xf32>
    %46 = vector.extract_strided_slice %2 {offsets = [3, 0, 0, 0], sizes = [1, 1, 16, 128], strides = [1, 1, 1, 1]} : vector<8x1x16x128xf32> to vector<1x1x16x128xf32>
    %47 = vector.shape_cast %46 : vector<1x1x16x128xf32> to vector<1x16x128xf32>
    %48 = vector.broadcast %45 : vector<8x1x128xf32> to vector<8x16x128xf32>
    %49 = vector.broadcast %47 : vector<1x16x128xf32> to vector<8x16x128xf32>
    %50 = arith.mulf %48, %49 : vector<8x16x128xf32>
    %51 = arith.addf %43, %50 : vector<8x16x128xf32>
    %52 = vector.extract_strided_slice %19 {offsets = [4, 0, 0, 0], sizes = [1, 8, 1, 128], strides = [1, 1, 1, 1]} : vector<8x8x1x128xf32> to vector<1x8x1x128xf32>
    %53 = vector.shape_cast %52 : vector<1x8x1x128xf32> to vector<8x1x128xf32>
    %54 = vector.extract_strided_slice %2 {offsets = [4, 0, 0, 0], sizes = [1, 1, 16, 128], strides = [1, 1, 1, 1]} : vector<8x1x16x128xf32> to vector<1x1x16x128xf32>
    %55 = vector.shape_cast %54 : vector<1x1x16x128xf32> to vector<1x16x128xf32>
    %56 = vector.broadcast %53 : vector<8x1x128xf32> to vector<8x16x128xf32>
    %57 = vector.broadcast %55 : vector<1x16x128xf32> to vector<8x16x128xf32>
    %58 = arith.mulf %56, %57 : vector<8x16x128xf32>
    %59 = arith.addf %51, %58 : vector<8x16x128xf32>
    %60 = vector.extract_strided_slice %19 {offsets = [5, 0, 0, 0], sizes = [1, 8, 1, 128], strides = [1, 1, 1, 1]} : vector<8x8x1x128xf32> to vector<1x8x1x128xf32>
    %61 = vector.shape_cast %60 : vector<1x8x1x128xf32> to vector<8x1x128xf32>
    %62 = vector.extract_strided_slice %2 {offsets = [5, 0, 0, 0], sizes = [1, 1, 16, 128], strides = [1, 1, 1, 1]} : vector<8x1x16x128xf32> to vector<1x1x16x128xf32>
    %63 = vector.shape_cast %62 : vector<1x1x16x128xf32> to vector<1x16x128xf32>
    %64 = vector.broadcast %61 : vector<8x1x128xf32> to vector<8x16x128xf32>
    %65 = vector.broadcast %63 : vector<1x16x128xf32> to vector<8x16x128xf32>
    %66 = arith.mulf %64, %65 : vector<8x16x128xf32>
    %67 = arith.addf %59, %66 : vector<8x16x128xf32>
    %68 = vector.extract_strided_slice %19 {offsets = [6, 0, 0, 0], sizes = [1, 8, 1, 128], strides = [1, 1, 1, 1]} : vector<8x8x1x128xf32> to vector<1x8x1x128xf32>
    %69 = vector.shape_cast %68 : vector<1x8x1x128xf32> to vector<8x1x128xf32>
    %70 = vector.extract_strided_slice %2 {offsets = [6, 0, 0, 0], sizes = [1, 1, 16, 128], strides = [1, 1, 1, 1]} : vector<8x1x16x128xf32> to vector<1x1x16x128xf32>
    %71 = vector.shape_cast %70 : vector<1x1x16x128xf32> to vector<1x16x128xf32>
    %72 = vector.broadcast %69 : vector<8x1x128xf32> to vector<8x16x128xf32>
    %73 = vector.broadcast %71 : vector<1x16x128xf32> to vector<8x16x128xf32>
    %74 = arith.mulf %72, %73 : vector<8x16x128xf32>
    %75 = arith.addf %67, %74 : vector<8x16x128xf32>
    %76 = vector.extract_strided_slice %19 {offsets = [7, 0, 0, 0], sizes = [1, 8, 1, 128], strides = [1, 1, 1, 1]} : vector<8x8x1x128xf32> to vector<1x8x1x128xf32>
    %77 = vector.shape_cast %76 : vector<1x8x1x128xf32> to vector<8x1x128xf32>
    %78 = vector.extract_strided_slice %2 {offsets = [7, 0, 0, 0], sizes = [1, 1, 16, 128], strides = [1, 1, 1, 1]} : vector<8x1x16x128xf32> to vector<1x1x16x128xf32>
    %79 = vector.shape_cast %78 : vector<1x1x16x128xf32> to vector<1x16x128xf32>
    %80 = vector.broadcast %77 : vector<8x1x128xf32> to vector<8x16x128xf32>
    %81 = vector.broadcast %79 : vector<1x16x128xf32> to vector<8x16x128xf32>
    %82 = arith.mulf %80, %81 : vector<8x16x128xf32>
    %83 = arith.addf %75, %82 : vector<8x16x128xf32>
    %c0_15 = arith.constant 0 : index
    %c0_16 = arith.constant 0 : index
    %c0_17 = arith.constant 0 : index
    %84 = vector.load %arg4[%c0_15, %c0_16, %c0_17] : memref<8x16x128xf32, #tpu.memory_space<vmem>>, vector<8x16x128xf32>
    tpu.vector_store %arg4[%c0_15, %c0_16, %c0_17], %83 {strides = array<i32>} : memref<8x16x128xf32, #tpu.memory_space<vmem>>, vector<8x16x128xf32>,
    %85 = vector.shape_cast %16 : vector<1x8x1x128xf32> to vector<8x1x128xf32>
    %c0_18 = arith.constant 0 : index
    %c0_19 = arith.constant 0 : index
    %c0_20 = arith.constant 0 : index
    %86 = vector.load %arg5[%c0_18, %c0_19, %c0_20] : memref<8x1x128xf32, #tpu.memory_space<vmem>>, vector<8x1x128xf32>
    tpu.vector_store %arg5[%c0_18, %c0_19, %c0_20], %85 {strides = array<i32>} : memref<8x1x128xf32, #tpu.memory_space<vmem>>, vector<8x1x128xf32>,
    %c0_21 = arith.constant 0 : index
    %c0_22 = arith.constant 0 : index
    %c0_23 = arith.constant 0 : index
    %87 = vector.load %arg6[%c0_21, %c0_22, %c0_23] : memref<8x1x128xf32, #tpu.memory_space<vmem>>, vector<8x1x128xf32>
    tpu.vector_store %arg6[%c0_21, %c0_22, %c0_23], %20 {strides = array<i32>} : memref<8x1x128xf32, #tpu.memory_space<vmem>>, vector<8x1x128xf32>,
    return
  }
  func.func @transform_0(%arg0: i32) -> (i32, i32, i32, i32) {
    %c0_i32 = arith.constant 0 : i32
    %c0_i32_0 = arith.constant 0 : i32
    %c0_i32_1 = arith.constant 0 : i32
    %c0_i32_2 = arith.constant 0 : i32
    return %c0_i32, %c0_i32_0, %c0_i32_1, %arg0 : i32, i32, i32, i32
  }
  func.func @transform_1(%arg0: i32) -> (i32, i32, i32, i32) {
    %c0_i32 = arith.constant 0 : i32
    %c0_i32_0 = arith.constant 0 : i32
    %c0_i32_1 = arith.constant 0 : i32
    %c0_i32_2 = arith.constant 0 : i32
    return %c0_i32, %c0_i32_0, %c0_i32_1, %arg0 : i32, i32, i32, i32
  }
  func.func @transform_2(%arg0: i32) -> (i32, i32, i32, i32) {
    %c0_i32 = arith.constant 0 : i32
    %c0_i32_0 = arith.constant 0 : i32
    %c0_i32_1 = arith.constant 0 : i32
    %c0_i32_2 = arith.constant 0 : i32
    return %c0_i32, %c0_i32_0, %c0_i32_1, %arg0 : i32, i32, i32, i32
  }
  func.func @transform_3(%arg0: i32) -> (i32, i32, i32) {
    %c0_i32 = arith.constant 0 : i32
    %c0_i32_0 = arith.constant 0 : i32
    %c0_i32_1 = arith.constant 0 : i32
    return %c0_i32, %c0_i32_0, %arg0 : i32, i32, i32
  }
  func.func @transform_4(%arg0: i32) -> (i32, i32, i32) {
    %c0_i32 = arith.constant 0 : i32
    %c0_i32_0 = arith.constant 0 : i32
    %c0_i32_1 = arith.constant 0 : i32
    return %c0_i32, %c0_i32_0, %arg0 : i32, i32, i32
  }
  func.func @transform_5(%arg0: i32) -> (i32, i32, i32) {
    %c0_i32 = arith.constant 0 : i32
    %c0_i32_0 = arith.constant 0 : i32
    %c0_i32_1 = arith.constant 0 : i32
    return %c0_i32, %c0_i32_0, %arg0 : i32, i32, i32
  }
}

module attributes {stable_mosaic.version = 11 : i64} {
  func.func @_line_attn_kernel(%arg0: i32, %arg1: memref<1x8x2x128xf32, #tpu.memory_space<vmem>>, %arg2: memref<8x1x2x128xf32, #tpu.memory_space<vmem>>, %arg3: memref<8x1x16x128xf32, #tpu.memory_space<vmem>>, %arg4: memref<8x16x128xf32, #tpu.memory_space<vmem>>, %arg5: memref<8x1x128xf32, #tpu.memory_space<vmem>>, %arg6: memref<8x1x128xf32, #tpu.memory_space<vmem>>) attributes {dimension_semantics = [#tpu.dimension_semantics<parallel>], iteration_bounds = array<i64: 1>, scalar_prefetch = 0 : i64, scratch_operands = 0 : i64, tpu.core_type = #tpu.core_type<tc>, window_params = [{transform_indices = @transform_0, window_bounds = array<i64: 1, 8, 2, 128>}, {transform_indices = @transform_1, window_bounds = array<i64: 8, 1, 2, 128>}, {transform_indices = @transform_2, window_bounds = array<i64: 8, 1, 16, 128>}, {transform_indices = @transform_3, window_bounds = array<i64: 8, 16, 128>}, {transform_indices = @transform_4, window_bounds = array<i64: 8, 1, 128>}, {transform_indices = @transform_5, window_bounds = array<i64: 8, 1, 128>}]} {
    %c0 = arith.constant 0 : index
    %c0_0 = arith.constant 0 : index
    %c0_1 = arith.constant 0 : index
    %c0_2 = arith.constant 0 : index
    %0 = vector.load %arg1[%c0, %c0_0, %c0_1, %c0_2] : memref<1x8x2x128xf32, #tpu.memory_space<vmem>>, vector<1x8x2x128xf32>
    %c0_3 = arith.constant 0 : index
    %c0_4 = arith.constant 0 : index
    %c0_5 = arith.constant 0 : index
    %c0_6 = arith.constant 0 : index
    %1 = vector.load %arg2[%c0_3, %c0_4, %c0_5, %c0_6] : memref<8x1x2x128xf32, #tpu.memory_space<vmem>>, vector<8x1x2x128xf32>
    %c0_7 = arith.constant 0 : index
    %c0_8 = arith.constant 0 : index
    %c0_9 = arith.constant 0 : index
    %c0_10 = arith.constant 0 : index
    %2 = vector.load %arg3[%c0_7, %c0_8, %c0_9, %c0_10] : memref<8x1x16x128xf32, #tpu.memory_space<vmem>>, vector<8x1x16x128xf32>
    %3 = vector.broadcast %1 : vector<8x1x2x128xf32> to vector<8x8x2x128xf32>
    %4 = vector.broadcast %0 : vector<1x8x2x128xf32> to vector<8x8x2x128xf32>
    %5 = arith.mulf %3, %4 : vector<8x8x2x128xf32>
    %cst = arith.constant dense<0.000000e+00> : vector<8x8x128xf32>
    %6 = vector.multi_reduction <add>, %5, %cst [2] : vector<8x8x2x128xf32> to vector<8x8x128xf32>
    %7 = vector.shape_cast %6 : vector<8x8x128xf32> to vector<8x8x1x128xf32>
    %cst_11 = arith.constant dense<0xFF800000> : vector<8x1x128xf32>
    %8 = vector.multi_reduction <maximumf>, %7, %cst_11 [0] : vector<8x8x1x128xf32> to vector<8x1x128xf32>
    %9 = vector.shape_cast %8 : vector<8x1x128xf32> to vector<1x8x1x128xf32>
    %10 = vector.broadcast %9 : vector<1x8x1x128xf32> to vector<8x8x1x128xf32>
    %11 = arith.subf %7, %10 : vector<8x8x1x128xf32>
    %12 = math.exp %11 : vector<8x8x1x128xf32>
    %cst_12 = arith.constant dense<0.000000e+00> : vector<8x1x128xf32>
    %13 = vector.multi_reduction <add>, %12, %cst_12 [0] : vector<8x8x1x128xf32> to vector<8x1x128xf32>
    %14 = vector.extract_strided_slice %12 {offsets = [0, 0, 0, 0], sizes = [1, 8, 1, 128], strides = [1, 1, 1, 1]} : vector<8x8x1x128xf32> to vector<1x8x1x128xf32>
    %15 = vector.shape_cast %14 : vector<1x8x1x128xf32> to vector<8x1x128xf32>
    %16 = vector.extract_strided_slice %2 {offsets = [0, 0, 0, 0], sizes = [1, 1, 16, 128], strides = [1, 1, 1, 1]} : vector<8x1x16x128xf32> to vector<1x1x16x128xf32>
    %17 = vector.shape_cast %16 : vector<1x1x16x128xf32> to vector<1x16x128xf32>
    %18 = vector.broadcast %15 : vector<8x1x128xf32> to vector<8x16x128xf32>
    %19 = vector.broadcast %17 : vector<1x16x128xf32> to vector<8x16x128xf32>
    %20 = arith.mulf %18, %19 : vector<8x16x128xf32>
    %21 = vector.extract_strided_slice %12 {offsets = [1, 0, 0, 0], sizes = [1, 8, 1, 128], strides = [1, 1, 1, 1]} : vector<8x8x1x128xf32> to vector<1x8x1x128xf32>
    %22 = vector.shape_cast %21 : vector<1x8x1x128xf32> to vector<8x1x128xf32>
    %23 = vector.extract_strided_slice %2 {offsets = [1, 0, 0, 0], sizes = [1, 1, 16, 128], strides = [1, 1, 1, 1]} : vector<8x1x16x128xf32> to vector<1x1x16x128xf32>
    %24 = vector.shape_cast %23 : vector<1x1x16x128xf32> to vector<1x16x128xf32>
    %25 = vector.broadcast %22 : vector<8x1x128xf32> to vector<8x16x128xf32>
    %26 = vector.broadcast %24 : vector<1x16x128xf32> to vector<8x16x128xf32>
    %27 = arith.mulf %25, %26 : vector<8x16x128xf32>
    %28 = arith.addf %20, %27 : vector<8x16x128xf32>
    %29 = vector.extract_strided_slice %12 {offsets = [2, 0, 0, 0], sizes = [1, 8, 1, 128], strides = [1, 1, 1, 1]} : vector<8x8x1x128xf32> to vector<1x8x1x128xf32>
    %30 = vector.shape_cast %29 : vector<1x8x1x128xf32> to vector<8x1x128xf32>
    %31 = vector.extract_strided_slice %2 {offsets = [2, 0, 0, 0], sizes = [1, 1, 16, 128], strides = [1, 1, 1, 1]} : vector<8x1x16x128xf32> to vector<1x1x16x128xf32>
    %32 = vector.shape_cast %31 : vector<1x1x16x128xf32> to vector<1x16x128xf32>
    %33 = vector.broadcast %30 : vector<8x1x128xf32> to vector<8x16x128xf32>
    %34 = vector.broadcast %32 : vector<1x16x128xf32> to vector<8x16x128xf32>
    %35 = arith.mulf %33, %34 : vector<8x16x128xf32>
    %36 = arith.addf %28, %35 : vector<8x16x128xf32>
    %37 = vector.extract_strided_slice %12 {offsets = [3, 0, 0, 0], sizes = [1, 8, 1, 128], strides = [1, 1, 1, 1]} : vector<8x8x1x128xf32> to vector<1x8x1x128xf32>
    %38 = vector.shape_cast %37 : vector<1x8x1x128xf32> to vector<8x1x128xf32>
    %39 = vector.extract_strided_slice %2 {offsets = [3, 0, 0, 0], sizes = [1, 1, 16, 128], strides = [1, 1, 1, 1]} : vector<8x1x16x128xf32> to vector<1x1x16x128xf32>
    %40 = vector.shape_cast %39 : vector<1x1x16x128xf32> to vector<1x16x128xf32>
    %41 = vector.broadcast %38 : vector<8x1x128xf32> to vector<8x16x128xf32>
    %42 = vector.broadcast %40 : vector<1x16x128xf32> to vector<8x16x128xf32>
    %43 = arith.mulf %41, %42 : vector<8x16x128xf32>
    %44 = arith.addf %36, %43 : vector<8x16x128xf32>
    %45 = vector.extract_strided_slice %12 {offsets = [4, 0, 0, 0], sizes = [1, 8, 1, 128], strides = [1, 1, 1, 1]} : vector<8x8x1x128xf32> to vector<1x8x1x128xf32>
    %46 = vector.shape_cast %45 : vector<1x8x1x128xf32> to vector<8x1x128xf32>
    %47 = vector.extract_strided_slice %2 {offsets = [4, 0, 0, 0], sizes = [1, 1, 16, 128], strides = [1, 1, 1, 1]} : vector<8x1x16x128xf32> to vector<1x1x16x128xf32>
    %48 = vector.shape_cast %47 : vector<1x1x16x128xf32> to vector<1x16x128xf32>
    %49 = vector.broadcast %46 : vector<8x1x128xf32> to vector<8x16x128xf32>
    %50 = vector.broadcast %48 : vector<1x16x128xf32> to vector<8x16x128xf32>
    %51 = arith.mulf %49, %50 : vector<8x16x128xf32>
    %52 = arith.addf %44, %51 : vector<8x16x128xf32>
    %53 = vector.extract_strided_slice %12 {offsets = [5, 0, 0, 0], sizes = [1, 8, 1, 128], strides = [1, 1, 1, 1]} : vector<8x8x1x128xf32> to vector<1x8x1x128xf32>
    %54 = vector.shape_cast %53 : vector<1x8x1x128xf32> to vector<8x1x128xf32>
    %55 = vector.extract_strided_slice %2 {offsets = [5, 0, 0, 0], sizes = [1, 1, 16, 128], strides = [1, 1, 1, 1]} : vector<8x1x16x128xf32> to vector<1x1x16x128xf32>
    %56 = vector.shape_cast %55 : vector<1x1x16x128xf32> to vector<1x16x128xf32>
    %57 = vector.broadcast %54 : vector<8x1x128xf32> to vector<8x16x128xf32>
    %58 = vector.broadcast %56 : vector<1x16x128xf32> to vector<8x16x128xf32>
    %59 = arith.mulf %57, %58 : vector<8x16x128xf32>
    %60 = arith.addf %52, %59 : vector<8x16x128xf32>
    %61 = vector.extract_strided_slice %12 {offsets = [6, 0, 0, 0], sizes = [1, 8, 1, 128], strides = [1, 1, 1, 1]} : vector<8x8x1x128xf32> to vector<1x8x1x128xf32>
    %62 = vector.shape_cast %61 : vector<1x8x1x128xf32> to vector<8x1x128xf32>
    %63 = vector.extract_strided_slice %2 {offsets = [6, 0, 0, 0], sizes = [1, 1, 16, 128], strides = [1, 1, 1, 1]} : vector<8x1x16x128xf32> to vector<1x1x16x128xf32>
    %64 = vector.shape_cast %63 : vector<1x1x16x128xf32> to vector<1x16x128xf32>
    %65 = vector.broadcast %62 : vector<8x1x128xf32> to vector<8x16x128xf32>
    %66 = vector.broadcast %64 : vector<1x16x128xf32> to vector<8x16x128xf32>
    %67 = arith.mulf %65, %66 : vector<8x16x128xf32>
    %68 = arith.addf %60, %67 : vector<8x16x128xf32>
    %69 = vector.extract_strided_slice %12 {offsets = [7, 0, 0, 0], sizes = [1, 8, 1, 128], strides = [1, 1, 1, 1]} : vector<8x8x1x128xf32> to vector<1x8x1x128xf32>
    %70 = vector.shape_cast %69 : vector<1x8x1x128xf32> to vector<8x1x128xf32>
    %71 = vector.extract_strided_slice %2 {offsets = [7, 0, 0, 0], sizes = [1, 1, 16, 128], strides = [1, 1, 1, 1]} : vector<8x1x16x128xf32> to vector<1x1x16x128xf32>
    %72 = vector.shape_cast %71 : vector<1x1x16x128xf32> to vector<1x16x128xf32>
    %73 = vector.broadcast %70 : vector<8x1x128xf32> to vector<8x16x128xf32>
    %74 = vector.broadcast %72 : vector<1x16x128xf32> to vector<8x16x128xf32>
    %75 = arith.mulf %73, %74 : vector<8x16x128xf32>
    %76 = arith.addf %68, %75 : vector<8x16x128xf32>
    %c0_13 = arith.constant 0 : index
    %c0_14 = arith.constant 0 : index
    %c0_15 = arith.constant 0 : index
    %77 = vector.load %arg4[%c0_13, %c0_14, %c0_15] : memref<8x16x128xf32, #tpu.memory_space<vmem>>, vector<8x16x128xf32>
    tpu.vector_store %arg4[%c0_13, %c0_14, %c0_15], %76 {strides = array<i32>} : memref<8x16x128xf32, #tpu.memory_space<vmem>>, vector<8x16x128xf32>,
    %78 = vector.shape_cast %9 : vector<1x8x1x128xf32> to vector<8x1x128xf32>
    %c0_16 = arith.constant 0 : index
    %c0_17 = arith.constant 0 : index
    %c0_18 = arith.constant 0 : index
    %79 = vector.load %arg5[%c0_16, %c0_17, %c0_18] : memref<8x1x128xf32, #tpu.memory_space<vmem>>, vector<8x1x128xf32>
    tpu.vector_store %arg5[%c0_16, %c0_17, %c0_18], %78 {strides = array<i32>} : memref<8x1x128xf32, #tpu.memory_space<vmem>>, vector<8x1x128xf32>,
    %c0_19 = arith.constant 0 : index
    %c0_20 = arith.constant 0 : index
    %c0_21 = arith.constant 0 : index
    %80 = vector.load %arg6[%c0_19, %c0_20, %c0_21] : memref<8x1x128xf32, #tpu.memory_space<vmem>>, vector<8x1x128xf32>
    tpu.vector_store %arg6[%c0_19, %c0_20, %c0_21], %13 {strides = array<i32>} : memref<8x1x128xf32, #tpu.memory_space<vmem>>, vector<8x1x128xf32>,
    return
  }
  func.func @transform_0(%arg0: i32) -> (i32, i32, i32, i32) {
    %c0_i32 = arith.constant 0 : i32
    %c0_i32_0 = arith.constant 0 : i32
    %c0_i32_1 = arith.constant 0 : i32
    %c0_i32_2 = arith.constant 0 : i32
    return %c0_i32, %c0_i32_0, %c0_i32_1, %arg0 : i32, i32, i32, i32
  }
  func.func @transform_1(%arg0: i32) -> (i32, i32, i32, i32) {
    %c0_i32 = arith.constant 0 : i32
    %c0_i32_0 = arith.constant 0 : i32
    %c0_i32_1 = arith.constant 0 : i32
    %c0_i32_2 = arith.constant 0 : i32
    return %c0_i32, %c0_i32_0, %c0_i32_1, %arg0 : i32, i32, i32, i32
  }
  func.func @transform_2(%arg0: i32) -> (i32, i32, i32, i32) {
    %c0_i32 = arith.constant 0 : i32
    %c0_i32_0 = arith.constant 0 : i32
    %c0_i32_1 = arith.constant 0 : i32
    %c0_i32_2 = arith.constant 0 : i32
    return %c0_i32, %c0_i32_0, %c0_i32_1, %arg0 : i32, i32, i32, i32
  }
  func.func @transform_3(%arg0: i32) -> (i32, i32, i32) {
    %c0_i32 = arith.constant 0 : i32
    %c0_i32_0 = arith.constant 0 : i32
    %c0_i32_1 = arith.constant 0 : i32
    return %c0_i32, %c0_i32_0, %arg0 : i32, i32, i32
  }
  func.func @transform_4(%arg0: i32) -> (i32, i32, i32) {
    %c0_i32 = arith.constant 0 : i32
    %c0_i32_0 = arith.constant 0 : i32
    %c0_i32_1 = arith.constant 0 : i32
    return %c0_i32, %c0_i32_0, %arg0 : i32, i32, i32
  }
  func.func @transform_5(%arg0: i32) -> (i32, i32, i32) {
    %c0_i32 = arith.constant 0 : i32
    %c0_i32_0 = arith.constant 0 : i32
    %c0_i32_1 = arith.constant 0 : i32
    return %c0_i32, %c0_i32_0, %arg0 : i32, i32, i32
  }
}

module attributes {stable_mosaic.version = 11 : i64} {
  func.func @_merge_kernel(%arg0: i32, %arg1: i32, %arg2: memref<1x16x512xf32, #tpu.memory_space<vmem>>, %arg3: memref<1x16x512xf32, #tpu.memory_space<vmem>>, %arg4: memref<1x16x512xf32, #tpu.memory_space<vmem>>, %arg5: memref<1x16x512xf32, #tpu.memory_space<vmem>>, %arg6: memref<1x1x512xf32, #tpu.memory_space<vmem>>, %arg7: memref<1x1x512xf32, #tpu.memory_space<vmem>>, %arg8: memref<1x1x512xf32, #tpu.memory_space<vmem>>, %arg9: memref<1x1x512xf32, #tpu.memory_space<vmem>>, %arg10: memref<1x1x512xf32, #tpu.memory_space<vmem>>, %arg11: memref<1x1x512xf32, #tpu.memory_space<vmem>>, %arg12: memref<1x1xf32, #tpu.memory_space<smem>>, %arg13: memref<1x16x512xf32, #tpu.memory_space<vmem>>) attributes {dimension_semantics = [#tpu.dimension_semantics<parallel>, #tpu.dimension_semantics<parallel>], iteration_bounds = array<i64: 2, 1>, scalar_prefetch = 0 : i64, scratch_operands = 0 : i64, tpu.core_type = #tpu.core_type<tc>, window_params = [{transform_indices = @transform_0, window_bounds = array<i64: 1, 16, 512>}, {transform_indices = @transform_1, window_bounds = array<i64: 1, 16, 512>}, {transform_indices = @transform_2, window_bounds = array<i64: 1, 16, 512>}, {transform_indices = @transform_3, window_bounds = array<i64: 1, 16, 512>}, {transform_indices = @transform_4, window_bounds = array<i64: 1, 1, 512>}, {transform_indices = @transform_5, window_bounds = array<i64: 1, 1, 512>}, {transform_indices = @transform_6, window_bounds = array<i64: 1, 1, 512>}, {transform_indices = @transform_7, window_bounds = array<i64: 1, 1, 512>}, {transform_indices = @transform_8, window_bounds = array<i64: 1, 1, 512>}, {transform_indices = @transform_9, window_bounds = array<i64: 1, 1, 512>}, {transform_indices = @transform_10, window_bounds = array<i64: 1, 1>}, {transform_indices = @transform_11, window_bounds = array<i64: 1, 16, 512>}]} {
    %c0 = arith.constant 0 : index
    %c0_0 = arith.constant 0 : index
    %c0_1 = arith.constant 0 : index
    %0 = vector.load %arg6[%c0, %c0_0, %c0_1] : memref<1x1x512xf32, #tpu.memory_space<vmem>>, vector<1x1x512xf32>
    %1 = vector.shape_cast %0 : vector<1x1x512xf32> to vector<1x512xf32>
    %c0_2 = arith.constant 0 : index
    %c0_3 = arith.constant 0 : index
    %c0_4 = arith.constant 0 : index
    %2 = vector.load %arg8[%c0_2, %c0_3, %c0_4] : memref<1x1x512xf32, #tpu.memory_space<vmem>>, vector<1x1x512xf32>
    %3 = vector.shape_cast %2 : vector<1x1x512xf32> to vector<1x512xf32>
    %c0_5 = arith.constant 0 : index
    %c0_6 = arith.constant 0 : index
    %c0_7 = arith.constant 0 : index
    %4 = vector.load %arg10[%c0_5, %c0_6, %c0_7] : memref<1x1x512xf32, #tpu.memory_space<vmem>>, vector<1x1x512xf32>
    %5 = vector.shape_cast %4 : vector<1x1x512xf32> to vector<1x512xf32>
    %6 = arith.maximumf %1, %3 : vector<1x512xf32>
    %7 = arith.maximumf %6, %5 : vector<1x512xf32>
    %8 = arith.subf %1, %7 : vector<1x512xf32>
    %9 = math.exp %8 : vector<1x512xf32>
    %10 = arith.subf %3, %7 : vector<1x512xf32>
    %11 = math.exp %10 : vector<1x512xf32>
    %12 = arith.subf %5, %7 : vector<1x512xf32>
    %13 = math.exp %12 : vector<1x512xf32>
    %c0_8 = arith.constant 0 : index
    %c0_9 = arith.constant 0 : index
    %c0_10 = arith.constant 0 : index
    %14 = vector.load %arg7[%c0_8, %c0_9, %c0_10] : memref<1x1x512xf32, #tpu.memory_space<vmem>>, vector<1x1x512xf32>
    %15 = vector.shape_cast %14 : vector<1x1x512xf32> to vector<1x512xf32>
    %16 = arith.mulf %15, %9 : vector<1x512xf32>
    %c0_11 = arith.constant 0 : index
    %c0_12 = arith.constant 0 : index
    %c0_13 = arith.constant 0 : index
    %17 = vector.load %arg9[%c0_11, %c0_12, %c0_13] : memref<1x1x512xf32, #tpu.memory_space<vmem>>, vector<1x1x512xf32>
    %18 = vector.shape_cast %17 : vector<1x1x512xf32> to vector<1x512xf32>
    %19 = arith.mulf %18, %11 : vector<1x512xf32>
    %20 = arith.addf %16, %19 : vector<1x512xf32>
    %c0_14 = arith.constant 0 : index
    %c0_15 = arith.constant 0 : index
    %c0_16 = arith.constant 0 : index
    %21 = vector.load %arg11[%c0_14, %c0_15, %c0_16] : memref<1x1x512xf32, #tpu.memory_space<vmem>>, vector<1x1x512xf32>
    %22 = vector.shape_cast %21 : vector<1x1x512xf32> to vector<1x512xf32>
    %23 = arith.mulf %22, %13 : vector<1x512xf32>
    %24 = arith.addf %20, %23 : vector<1x512xf32>
    %c0_17 = arith.constant 0 : index
    %c0_18 = arith.constant 0 : index
    %c0_19 = arith.constant 0 : index
    %25 = vector.load %arg3[%c0_17, %c0_18, %c0_19] : memref<1x16x512xf32, #tpu.memory_space<vmem>>, vector<1x16x512xf32>
    %26 = vector.shape_cast %25 : vector<1x16x512xf32> to vector<16x512xf32>
    %27 = vector.broadcast %9 : vector<1x512xf32> to vector<16x512xf32>
    %28 = arith.mulf %26, %27 : vector<16x512xf32>
    %c0_20 = arith.constant 0 : index
    %c0_21 = arith.constant 0 : index
    %c0_22 = arith.constant 0 : index
    %29 = vector.load %arg4[%c0_20, %c0_21, %c0_22] : memref<1x16x512xf32, #tpu.memory_space<vmem>>, vector<1x16x512xf32>
    %30 = vector.shape_cast %29 : vector<1x16x512xf32> to vector<16x512xf32>
    %31 = vector.broadcast %11 : vector<1x512xf32> to vector<16x512xf32>
    %32 = arith.mulf %30, %31 : vector<16x512xf32>
    %33 = arith.addf %28, %32 : vector<16x512xf32>
    %c0_23 = arith.constant 0 : index
    %c0_24 = arith.constant 0 : index
    %c0_25 = arith.constant 0 : index
    %34 = vector.load %arg5[%c0_23, %c0_24, %c0_25] : memref<1x16x512xf32, #tpu.memory_space<vmem>>, vector<1x16x512xf32>
    %35 = vector.shape_cast %34 : vector<1x16x512xf32> to vector<16x512xf32>
    %36 = vector.broadcast %13 : vector<1x512xf32> to vector<16x512xf32>
    %37 = arith.mulf %35, %36 : vector<16x512xf32>
    %38 = arith.addf %33, %37 : vector<16x512xf32>
    %c0_26 = arith.constant 0 : index
    %c0_27 = arith.constant 0 : index
    %39 = memref.load %arg12[%c0_26, %c0_27] : memref<1x1xf32, #tpu.memory_space<smem>>
    %40 = vector.broadcast %24 : vector<1x512xf32> to vector<16x512xf32>
    %41 = arith.divf %38, %40 : vector<16x512xf32>
    %42 = vector.broadcast %39 : f32 to vector<16x512xf32>
    %43 = arith.mulf %42, %41 : vector<16x512xf32>
    %c0_28 = arith.constant 0 : index
    %c0_29 = arith.constant 0 : index
    %c0_30 = arith.constant 0 : index
    %44 = vector.load %arg2[%c0_28, %c0_29, %c0_30] : memref<1x16x512xf32, #tpu.memory_space<vmem>>, vector<1x16x512xf32>
    %45 = vector.shape_cast %44 : vector<1x16x512xf32> to vector<16x512xf32>
    %46 = arith.addf %43, %45 : vector<16x512xf32>
    %c0_31 = arith.constant 0 : index
    %c0_32 = arith.constant 0 : index
    %c0_33 = arith.constant 0 : index
    %47 = vector.load %arg13[%c0_31, %c0_32, %c0_33] : memref<1x16x512xf32, #tpu.memory_space<vmem>>, vector<1x16x512xf32>
    %48 = vector.shape_cast %47 : vector<1x16x512xf32> to vector<16x512xf32>
    %49 = vector.shape_cast %46 : vector<16x512xf32> to vector<1x16x512xf32>
    tpu.vector_store %arg13[%c0_31, %c0_32, %c0_33], %49 {strides = array<i32>} : memref<1x16x512xf32, #tpu.memory_space<vmem>>, vector<1x16x512xf32>,
    return
  }
  func.func @transform_0(%arg0: i32, %arg1: i32) -> (i32, i32, i32) {
    %c0_i32 = arith.constant 0 : i32
    %c0_i32_0 = arith.constant 0 : i32
    return %arg0, %c0_i32, %arg1 : i32, i32, i32
  }
  func.func @transform_1(%arg0: i32, %arg1: i32) -> (i32, i32, i32) {
    %c0_i32 = arith.constant 0 : i32
    %c0_i32_0 = arith.constant 0 : i32
    return %arg0, %c0_i32, %arg1 : i32, i32, i32
  }
  func.func @transform_2(%arg0: i32, %arg1: i32) -> (i32, i32, i32) {
    %c0_i32 = arith.constant 0 : i32
    %c0_i32_0 = arith.constant 0 : i32
    return %arg0, %c0_i32, %arg1 : i32, i32, i32
  }
  func.func @transform_3(%arg0: i32, %arg1: i32) -> (i32, i32, i32) {
    %c0_i32 = arith.constant 0 : i32
    %c0_i32_0 = arith.constant 0 : i32
    return %arg0, %c0_i32, %arg1 : i32, i32, i32
  }
  func.func @transform_4(%arg0: i32, %arg1: i32) -> (i32, i32, i32) {
    %c0_i32 = arith.constant 0 : i32
    %c0_i32_0 = arith.constant 0 : i32
    return %arg0, %c0_i32, %arg1 : i32, i32, i32
  }
  func.func @transform_5(%arg0: i32, %arg1: i32) -> (i32, i32, i32) {
    %c0_i32 = arith.constant 0 : i32
    %c0_i32_0 = arith.constant 0 : i32
    return %arg0, %c0_i32, %arg1 : i32, i32, i32
  }
  func.func @transform_6(%arg0: i32, %arg1: i32) -> (i32, i32, i32) {
    %c0_i32 = arith.constant 0 : i32
    %c0_i32_0 = arith.constant 0 : i32
    return %arg0, %c0_i32, %arg1 : i32, i32, i32
  }
  func.func @transform_7(%arg0: i32, %arg1: i32) -> (i32, i32, i32) {
    %c0_i32 = arith.constant 0 : i32
    %c0_i32_0 = arith.constant 0 : i32
    return %arg0, %c0_i32, %arg1 : i32, i32, i32
  }
  func.func @transform_8(%arg0: i32, %arg1: i32) -> (i32, i32, i32) {
    %c0_i32 = arith.constant 0 : i32
    %c0_i32_0 = arith.constant 0 : i32
    return %arg0, %c0_i32, %arg1 : i32, i32, i32
  }
  func.func @transform_9(%arg0: i32, %arg1: i32) -> (i32, i32, i32) {
    %c0_i32 = arith.constant 0 : i32
    %c0_i32_0 = arith.constant 0 : i32
    return %arg0, %c0_i32, %arg1 : i32, i32, i32
  }
  func.func @transform_10(%arg0: i32, %arg1: i32) -> (i32, i32) {
    %c0_i32 = arith.constant 0 : i32
    %c0_i32_0 = arith.constant 0 : i32
    %c0_i32_1 = arith.constant 0 : i32
    return %c0_i32, %c0_i32_0 : i32, i32
  }
  func.func @transform_11(%arg0: i32, %arg1: i32) -> (i32, i32, i32) {
    %c0_i32 = arith.constant 0 : i32
    %c0_i32_0 = arith.constant 0 : i32
    return %arg0, %c0_i32, %arg1 : i32, i32, i32
  }
}

</mosaic_0001>

<llo_original>
// kernel: sia_forward.5
$region0: #{sia_forward.5}
  #allocation0 [shape = 'u32[]', space=smem, size = 0x4, offset = 0x4, fixed_abs, tag = 'smem constant byte address 0x4 - core index']
  #allocation1 [shape = 'u32[144,128]{1,0:T(1,128)}', space=vmem, size = 0x12000, scoped, tag = 'internal scratch']
  %s0 = inlined_call_operand.vmem [shape: f32[2,16,512], index: 0, kind: input, shape index: {}]
  %s1 = inlined_call_operand.vmem [shape: f32[32,16], index: 1, kind: input, shape index: {}]
  %s2 = inlined_call_operand.vmem [shape: f32[32,1], index: 2, kind: input, shape index: {}]
  %s3 = inlined_call_operand.vmem [shape: f32[2,2,512], index: 3, kind: output, shape index: {0}]
  %s4 = inlined_call_operand.vmem [shape: f32[2,2,512], index: 4, kind: output, shape index: {1}]
  %s5 = inlined_call_operand.vmem [shape: f32[2,16,512], index: 5, kind: output, shape index: {2}]
  %6 = xla_tuple %s3, %s4, %s5
  %s7 = sld [smem:[#allocation0]]
  $region61: #{sia_forward.5} parent=0
    _
  %s9 = ssub.s32 1, %s7
  %s10 = scalar_select 0, %s9, %s7
  loop: start=0, step=1, limit=4
  $region2: #{sia_forward.5} parent=0 // loop_pre_header
    _
  $region3: #{sia_forward.5} parent=0 // loop_header
    %s12 = sphi 0, %s16
    %p13 = scmp.ge.s32.totalorder %s12, 4
    %s19 = sphi 0, %s31
    %s20 = sphi 0, %s27
    %s21 = sphi 0, %s19
    %s22 = sphi 0, %s20
    %s23 = sphi 0, %s21
    %s24 = sphi 0, %s22
    %s36 = sphi 0, %s38
    %s39 = sphi 0, %s36
    %s40 = sphi 0, %s39
    %s56 = sphi 0, %s40
    %s60 = sphi 0, %s60
    %s62 = sphi 0, %s60
    %s63 = sphi 0, %s62
    %s77 = sphi 0, %s63
    %s81 = sphi 0, %s81
    %s83 = sphi 0, %s81
    %s84 = sphi 0, %s83
    %s98 = sphi 0, %s84
    %s106 = sphi 0, %s108
    %s109 = sphi 0, %s106
    %s110 = sphi 0, %s109
    %s126 = sphi 0, %s110
    %s134 = sphi 0, %s136
    %s137 = sphi 0, %s134
    %s138 = sphi 0, %s137
    %s154 = sphi 0, %s138
    %s162 = sphi 0, %s164
    %s165 = sphi 0, %s162
    %s166 = sphi 0, %s165
    %s182 = sphi 0, %s166
  $region4: #{sia_forward.5} parent=0 // loop_header_branch
    %15 = sbr.rel (%p13) target = $region8
  $region5: #{sia_forward.5} parent=0 // loop_body
    %s17 = ssub.s32 %s12, 1
    %s18 = ssub.s32 %s12, 2
    %s25 = sadd.s32 1, %s20
    %p26 = scmp.ge.s32.totalorder %s25, 1
    %s27 = scalar_select %p26, 0, %s25
    %s28 = sadd.s32 1, %s19
    %s29 = scalar_select %p26, %s28, %s19
    %p30 = scmp.ge.s32.totalorder %s29, 2
    %s31 = scalar_select %p30, 0, %s29
    %s32 = ssub.s32 %s19, %s31
    %s33 = ssub.s32 %s20, %s27
    %s34 = sor.u32 %s32, %s33
    %p35 = scmp.eq.s32.totalorder %s34, 0
    %s37 = sadd.s32 %s36, 1
    %s38 = scalar_select %p35, %s36, %s37
    %p41 = pneg %p35
    %p42 = scmp.eq.s32.totalorder %s12, 1
    %p43 = por %p41, %p42
    %p44 = scmp.ne.s32.totalorder %s36, %s39
    %p45 = scmp.eq.s32.totalorder %s12, 0
    %p46 = por %p44, %p45
    %p47 = scmp.ne.s32.totalorder %s36, %s39
    %p48 = scmp.eq.s32.totalorder %s17, 1
    %p49 = por %p47, %p48
    %p50 = scmp.ne.s32.totalorder %s39, %s40
    %p51 = scmp.eq.s32.totalorder %s17, 0
    %p52 = por %p50, %p51
    %p53 = scmp.ne.s32.totalorder %s39, %s40
    %p54 = scmp.eq.s32.totalorder %s18, 1
    %p55 = por %p53, %p54
    %p57 = scmp.ne.s32.totalorder %s40, %s56
    %p58 = scmp.eq.s32.totalorder %s18, 0
    %p59 = por %p57, %p58
    %s61 = sadd.s32 %s60, 1
    %p64 = scmp.eq.s32.totalorder %s12, 1
    %p65 = scmp.ne.s32.totalorder %s60, %s62
    %p66 = scmp.eq.s32.totalorder %s12, 0
    %p67 = por %p65, %p66
    %p68 = scmp.ne.s32.totalorder %s60, %s62
    %p69 = scmp.eq.s32.totalorder %s17, 1
    %p70 = por %p68, %p69
    %p71 = scmp.ne.s32.totalorder %s62, %s63
    %p72 = scmp.eq.s32.totalorder %s17, 0
    %p73 = por %p71, %p72
    %p74 = scmp.ne.s32.totalorder %s62, %s63
    %p75 = scmp.eq.s32.totalorder %s18, 1
    %p76 = por %p74, %p75
    %p78 = scmp.ne.s32.totalorder %s63, %s77
    %p79 = scmp.eq.s32.totalorder %s18, 0
    %p80 = por %p78, %p79
    %s82 = sadd.s32 %s81, 1
    %p85 = scmp.eq.s32.totalorder %s12, 1
    %p86 = scmp.ne.s32.totalorder %s81, %s83
    %p87 = scmp.eq.s32.totalorder %s12, 0
    %p88 = por %p86, %p87
    %p89 = scmp.ne.s32.totalorder %s81, %s83
    %p90 = scmp.eq.s32.totalorder %s17, 1
    %p91 = por %p89, %p90
    %p92 = scmp.ne.s32.totalorder %s83, %s84
    %p93 = scmp.eq.s32.totalorder %s17, 0
    %p94 = por %p92, %p93
    %p95 = scmp.ne.s32.totalorder %s83, %s84
    %p96 = scmp.eq.s32.totalorder %s18, 1
    %p97 = por %p95, %p96
    %p99 = scmp.ne.s32.totalorder %s84, %s98
    %p100 = scmp.eq.s32.totalorder %s18, 0
    %p101 = por %p99, %p100
    %s102 = ssub.s32 %s19, %s31
    %s103 = ssub.s32 %s20, %s27
    %s104 = sor.u32 %s102, %s103
    %p105 = scmp.eq.s32.totalorder %s104, 0
    %s107 = sadd.s32 %s106, 1
    %s108 = scalar_select %p105, %s106, %s107
    %p111 = pneg %p105
    %p112 = scmp.eq.s32.totalorder %s12, 1
    %p113 = por %p111, %p112
    %p114 = scmp.ne.s32.totalorder %s106, %s109
    %p115 = scmp.eq.s32.totalorder %s12, 0
    %p116 = por %p114, %p115
    %p117 = scmp.ne.s32.totalorder %s106, %s109
    %p118 = scmp.eq.s32.totalorder %s17, 1
    %p119 = por %p117, %p118
    %p120 = scmp.ne.s32.totalorder %s109, %s110
    %p121 = scmp.eq.s32.totalorder %s17, 0
    %p122 = por %p120, %p121
    %p123 = scmp.ne.s32.totalorder %s109, %s110
    %p124 = scmp.eq.s32.totalorder %s18, 1
    %p125 = por %p123, %p124
    %p127 = scmp.ne.s32.totalorder %s110, %s126
    %p128 = scmp.eq.s32.totalorder %s18, 0
    %p129 = por %p127, %p128
    %s130 = ssub.s32 %s19, %s31
    %s131 = ssub.s32 %s20, %s27
    %s132 = sor.u32 %s130, %s131
    %p133 = scmp.eq.s32.totalorder %s132, 0
    %s135 = sadd.s32 %s134, 1
    %s136 = scalar_select %p133, %s134, %s135
    %p139 = pneg %p133
    %p140 = scmp.eq.s32.totalorder %s12, 1
    %p141 = por %p139, %p140
    %p142 = scmp.ne.s32.totalorder %s134, %s137
    %p143 = scmp.eq.s32.totalorder %s12, 0
    %p144 = por %p142, %p143
    %p145 = scmp.ne.s32.totalorder %s134, %s137
    %p146 = scmp.eq.s32.totalorder %s17, 1
    %p147 = por %p145, %p146
    %p148 = scmp.ne.s32.totalorder %s137, %s138
    %p149 = scmp.eq.s32.totalorder %s17, 0
    %p150 = por %p148, %p149
    %p151 = scmp.ne.s32.totalorder %s137, %s138
    %p152 = scmp.eq.s32.totalorder %s18, 1
    %p153 = por %p151, %p152
    %p155 = scmp.ne.s32.totalorder %s138, %s154
    %p156 = scmp.eq.s32.totalorder %s18, 0
    %p157 = por %p155, %p156
    %s158 = ssub.s32 %s19, %s31
    %s159 = ssub.s32 %s20, %s27
    %s160 = sor.u32 %s158, %s159
    %p161 = scmp.eq.s32.totalorder %s160, 0
    %s163 = sadd.s32 %s162, 1
    %s164 = scalar_select %p161, %s162, %s163
    %p167 = pneg %p161
    %p168 = scmp.eq.s32.totalorder %s12, 1
    %p169 = por %p167, %p168
    %p170 = scmp.ne.s32.totalorder %s162, %s165
    %p171 = scmp.eq.s32.totalorder %s12, 0
    %p172 = por %p170, %p171
    %p173 = scmp.ne.s32.totalorder %s162, %s165
    %p174 = scmp.eq.s32.totalorder %s17, 1
    %p175 = por %p173, %p174
    %p176 = scmp.ne.s32.totalorder %s165, %s166
    %p177 = scmp.eq.s32.totalorder %s17, 0
    %p178 = por %p176, %p177
    %p179 = scmp.ne.s32.totalorder %s165, %s166
    %p180 = scmp.eq.s32.totalorder %s18, 1
    %p181 = por %p179, %p180
    %p183 = scmp.ne.s32.totalorder %s166, %s182
    %p184 = scmp.eq.s32.totalorder %s18, 0
    %p185 = por %p183, %p184
    %p186 = scmp.le.s32.totalorder 1, %s12
    %p187 = scmp.lt.s32.totalorder %s12, 3
    %p188 = pnand %p186, %p187
    %p189 = pneg %p188
    // Predicated region
    $region9: #{sia_forward.5} parent=5 // pred_check
      _
    $region10: #{sia_forward.5} parent=5 // pred_check_branch
      %191 = sbr.rel (%p188) target = $region12
    $region11: #{sia_forward.5} parent=5 // pred_region
      %s192 = ssub.s32 %s12, 1
      // Predicated region
      $region13: #{sia_forward.5} parent=11 // pred_check
        %p193 = pneg %p73
      $region14: #{sia_forward.5} parent=11 // pred_check_branch
        %195 = sbr.rel (%p193) target = $region16
      $region15: #{sia_forward.5} parent=11 // pred_region
        _
      $region16: #{sia_forward.5} parent=11 // pred_fallthru
        _
      // Predicated region
      $region17: #{sia_forward.5} parent=11 // pred_check
        %p196 = pneg %p94
      $region18: #{sia_forward.5} parent=11 // pred_check_branch
        %198 = sbr.rel (%p196) target = $region20
      $region19: #{sia_forward.5} parent=11 // pred_region
        _
      $region20: #{sia_forward.5} parent=11 // pred_fallthru
        _
    $region12: #{sia_forward.5} parent=5 // pred_fallthru
      _
    %p199 = scmp.lt.s32.totalorder %s12, 2
    // Predicated region
    $region21: #{sia_forward.5} parent=5 // pred_check
      %p200 = pneg %p199
    $region22: #{sia_forward.5} parent=5 // pred_check_branch
      %202 = sbr.rel (%p200) target = $region24
    $region23: #{sia_forward.5} parent=5 // pred_region
      // Predicated region
      $region25: #{sia_forward.5} parent=23 // pred_check
        %p203 = pneg %p46
      $region26: #{sia_forward.5} parent=23 // pred_check_branch
        %205 = sbr.rel (%p203) target = $region28
      $region27: #{sia_forward.5} parent=23 // pred_region
        %s206 = smul.u32 4, %s20
        %p207 = scmp.lt.s32.totalorder %s19, 1
        %s208 = scalar_select %p207, %s19, 1
        %p209 = scmp.lt.s32.totalorder %s206, 3
        %s210 = scalar_select %p209, %s206, 3
        %s211 = smul.addr %s208, 8
        %s212 = sadd.s32 %s210, %s211
        %s213 = smul.addr %s212, 8
        %s214 = scalar_lea.vmem %s0, %s213
        %s215 = smul.u32 4, %s20
      $region28: #{sia_forward.5} parent=23 // pred_fallthru
        _
    $region24: #{sia_forward.5} parent=5 // pred_fallthru
      _
    %p216 = scmp.le.s32.totalorder 1, %s12
    %p217 = scmp.lt.s32.totalorder %s12, 3
    %p218 = pnand %p216, %p217
    %p219 = pneg %p218
    // Predicated region
    $region29: #{sia_forward.5} parent=5 // pred_check
      _
    $region30: #{sia_forward.5} parent=5 // pred_check_branch
      %221 = sbr.rel (%p218) target = $region32
    $region31: #{sia_forward.5} parent=5 // pred_region
      %s222 = ssub.s32 %s12, 1
      %s223 = smul.u32 4, %s22
      %p224 = scmp.lt.s32.totalorder %s21, 1
      %s225 = scalar_select %p224, %s21, 1
      %p226 = scmp.lt.s32.totalorder %s223, 3
      %s227 = scalar_select %p226, %s223, 3
      %s228 = smul.addr %s225, 8
      %s229 = sadd.s32 %s227, %s228
      %s230 = smul.addr %s229, 8
      %s231 = scalar_lea.vmem %s0, %s230
      %p232 = pneg %p52
      %p233 = pneg %p49
      %p234 = pneg %p73
      %p235 = pneg %p70
      %p236 = pneg %p94
      %p237 = pneg %p91
      %p238 = pneg %p122
      %p239 = pneg %p119
      %s240 = smul.u32 4, %s22
      %p241 = scmp.lt.s32.totalorder %s21, 1
      %s242 = scalar_select %p241, %s21, 1
      %p243 = scmp.lt.s32.totalorder %s240, 3
      %s244 = scalar_select %p243, %s240, 3
      %s245 = smul.addr %s242, 4
      %s246 = sadd.s32 %s244, %s245
      %s247 = smul.addr %s246, 2
      %s248 = scalar_lea.vmem %s3, %s247
      %p249 = pneg %p150
      %p250 = pneg %p147
      %s251 = smul.u32 4, %s22
      %p252 = scmp.lt.s32.totalorder %s21, 1
      %s253 = scalar_select %p252, %s21, 1
      %p254 = scmp.lt.s32.totalorder %s251, 3
      %s255 = scalar_select %p254, %s251, 3
      %s256 = smul.addr %s253, 4
      %s257 = sadd.s32 %s255, %s256
      %s258 = smul.addr %s257, 2
      %s259 = scalar_lea.vmem %s4, %s258
      %p260 = pneg %p178
      %p261 = pneg %p175
      %s262 = smul.u32 4, %s22
      %p263 = scmp.lt.s32.totalorder %s21, 1
      %s264 = scalar_select %p263, %s21, 1
      %p265 = scmp.lt.s32.totalorder %s262, 3
      %s266 = scalar_select %p265, %s262, 3
      %s267 = smul.addr %s264, 8
      %s268 = sadd.s32 %s266, %s267
      %s269 = smul.addr %s268, 8
      %s270 = scalar_lea.vmem %s5, %s269
      %s271 = smul.u32 4, %s22
      %p272 = scmp.lt.s32.totalorder %s21, 1
      %s273 = scalar_select %p272, %s21, 1
      %p274 = scmp.lt.s32.totalorder %s271, 3
      %s275 = scalar_select %p274, %s271, 3
      %s276 = smul.addr %s273, 8
      %s277 = sadd.s32 %s275, %s276
      %s278 = smul.addr %s277, 8
      %s279 = scalar_lea.vmem %s0, %s278
      %s280 = smul.u32 4, %s22
      %s281 = smul.u32 4, %s22
      %p282 = scmp.lt.s32.totalorder %s21, 1
      %s283 = scalar_select %p282, %s21, 1
      %p284 = scmp.lt.s32.totalorder %s281, 3
      %s285 = scalar_select %p284, %s281, 3
      %s286 = smul.addr %s283, 4
      %s287 = sadd.s32 %s285, %s286
      %s288 = smul.addr %s287, 2
      %s289 = scalar_lea.vmem %s3, %s288
      %s290 = smul.u32 4, %s22
      %s291 = smul.u32 4, %s22
      %p292 = scmp.lt.s32.totalorder %s21, 1
      %s293 = scalar_select %p292, %s21, 1
      %p294 = scmp.lt.s32.totalorder %s291, 3
      %s295 = scalar_select %p294, %s291, 3
      %s296 = smul.addr %s293, 4
      %s297 = sadd.s32 %s295, %s296
      %s298 = smul.addr %s297, 2
      %s299 = scalar_lea.vmem %s4, %s298
      %s300 = smul.u32 4, %s22
      %s301 = smul.u32 4, %s22
      %p302 = scmp.lt.s32.totalorder %s21, 1
      %s303 = scalar_select %p302, %s21, 1
      %p304 = scmp.lt.s32.totalorder %s301, 3
      %s305 = scalar_select %p304, %s301, 3
      %s306 = smul.addr %s303, 8
      %s307 = sadd.s32 %s305, %s306
      %s308 = smul.addr %s307, 8
      %s309 = scalar_lea.vmem %s5, %s308
      %s310 = smul.u32 4, %s22
      %v311 = vld [vmem:[%s1] sm:$0xff]
      %v312 = vld [vmem:[%s1 + $0x8] sm:$0xff]
      %v313 = vld [vmem:[%s1 + $0x10] sm:$0xff]
      %v314 = vld [vmem:[%s1 + $0x18] sm:$0xff]
      %v315 = vld [vmem:[%s279] sm:$0xff]
      %v316 = vld [vmem:[%s279 + $0x8] sm:$0xff]
      %v317 = vld [vmem:[%s279 + $0x10] sm:$0xff]
      %v318 = vld [vmem:[%s279 + $0x18] sm:$0xff]
      %v319 = vld [vmem:[%s279 + $0x20] sm:$0xff]
      %v320 = vld [vmem:[%s279 + $0x28] sm:$0xff]
      %v321 = vld [vmem:[%s279 + $0x30] sm:$0xff]
      %v322 = vld [vmem:[%s279 + $0x38] sm:$0xff]
      %v323 = vld [vmem:[%s2] sm:$0xff]
      %v324 = vld [vmem:[%s2 + $0x8] sm:$0xff]
      %v325 = vld [vmem:[%s2 + $0x10] sm:$0xff]
      %v326 = vld [vmem:[%s2 + $0x18] sm:$0xff]
      %328 = vset.pattern.permute.xlu0 0
      %329 = vperm.xlu0 %328, %v323
      %v330 = vpop.permute.xlu0 %329
      %333 = vset.pattern.permute.xlu0 0
      %334 = vperm.xlu0 %333, %v324
      %v335 = vpop.permute.xlu0 %334
      %338 = vset.pattern.permute.xlu0 0
      %339 = vperm.xlu0 %338, %v325
      %v340 = vpop.permute.xlu0 %339
      %343 = vset.pattern.permute.xlu0 0
      %344 = vperm.xlu0 %343, %v326
      %v345 = vpop.permute.xlu0 %344
      %vm347 = vcmask 130048
      %v349 = vsel %vm347, %v311, 0
      %v352 = vsel %vm347, %v312, 0
      %v355 = vsel %vm347, %v313, 0
      %v358 = vsel %vm347, %v314, 0
      %v360 = vand.u32 %v316, 4294901760
      %361 = vmatprep.subr.mxu0 %v360
      %v362 = vand.u32 %v315, 4294901760
      %363 = vmatpush1.msra.mxu0 %v362
      %v364 = vand.u32 %v320, 4294901760
      %365 = vmatprep.subr.mxu0 %v364
      %v366 = vand.u32 %v319, 4294901760
      %367 = vmatpush1.msra.mxu0 %v366
      %368 = vmatprep.subr.mxu0 0.0
      %369 = vmatpush1.msra.mxu0 0.0
      %370 = vmatprep.subr.mxu0 0.0
      %371 = vmatpush1.msra.mxu0 0.0
      %372 = vmatprep.subr.mxu0 0.0
      %373 = vmatpush1.msra.mxu0 0.0
      %374 = vmatprep.subr.mxu0 0.0
      %375 = vmatpush1.msra.mxu0 0.0
      %376 = vmatprep.subr.mxu0 0.0
      %377 = vmatpush1.msra.mxu0 0.0
      %378 = vmatprep.subr.mxu0 0.0
      %379 = vmatpush1.msra.mxu0 0.0
      %380 = vmatprep.subr.mxu0 0.0
      %381 = vmatpush1.msra.mxu0 0.0
      %382 = vmatprep.subr.mxu0 0.0
      %383 = vmatpush1.msra.mxu0 0.0
      %384 = vmatprep.subr.mxu0 0.0
      %385 = vmatpush1.msra.mxu0 0.0
      %386 = vmatprep.subr.mxu0 0.0
      %387 = vmatpush1.msra.mxu0 0.0
      %388 = vmatprep.subr.mxu0 0.0
      %389 = vmatpush1.msra.mxu0 0.0
      %390 = vmatprep.subr.mxu0 0.0
      %391 = vmatpush1.msra.mxu0 0.0
      %392 = vmatprep.subr.mxu0 0.0
      %393 = vmatpush1.msra.mxu0 0.0
      %394 = vmatprep.subr.mxu0 0.0
      %395 = vmatpush1.msra.mxu0 0.0
      %396 = vmatprep.subr.mxu0 0.0
      %397 = vmatpush1.msra.mxu0 0.0
      %398 = vmatprep.subr.mxu0 0.0
      %399 = vmatpush1.msra.mxu0 0.0
      %400 = vmatprep.subr.mxu0 0.0
      %401 = vmatpush1.msra.mxu0 0.0
      %402 = vmatprep.subr.mxu0 0.0
      %403 = vmatpush1.msra.mxu0 0.0
      %404 = vmatprep.subr.mxu0 0.0
      %405 = vmatpush1.msra.mxu0 0.0
      %406 = vmatprep.subr.mxu0 0.0
      %407 = vmatpush1.msra.mxu0 0.0
      %408 = vmatprep.subr.mxu0 0.0
      %409 = vmatpush1.msra.mxu0 0.0
      %410 = vmatprep.subr.mxu0 0.0
      %411 = vmatpush1.msra.mxu0 0.0
      %412 = vmatprep.subr.mxu0 0.0
      %413 = vmatpush1.msra.mxu0 0.0
      %414 = vmatprep.subr.mxu0 0.0
      %415 = vmatpush1.msra.mxu0 0.0
      %416 = vmatprep.subr.mxu0 0.0
      %417 = vmatpush1.msra.mxu0 0.0
      %418 = vmatprep.subr.mxu0 0.0
      %419 = vmatpush1.msra.mxu0 0.0
      %420 = vmatprep.subr.mxu0 0.0
      %421 = vmatpush1.msra.mxu0 0.0
      %422 = vmatprep.subr.mxu0 0.0
      %423 = vmatpush1.msra.mxu0 0.0
      %424 = vmatprep.subr.mxu0 0.0
      %425 = vmatpush1.msra.mxu0 0.0
      %426 = vmatprep.subr.mxu0 0.0
      %427 = vmatpush1.msra.mxu0 0.0
      %428 = vmatprep.mubr.f32.mxu0 0.0
      %v429 = vand.u32 %v349, 4294901760
      %v430 = vsub.f32 %v349, %v429
      %v431 = vand.u32 %v430, 4294901760
      %v432 = vsub.f32 %v430, %v431
      %v433 = vand.u32 %v432, 4294901760
      %434 = vmatmul.mubr.f32.gmra.mrb[0].mxu0 %v433
      %v435 = vpop.f32.mrb[0].mxu0
      %v436 = vadd.f32 %v330, %v435
      %v437 = vpop.f32.mrb[0].mxu0
      %v438 = vadd.f32 %v330, %v437
      %439 = vmatprep.mubr.f32.mxu0 0.0
      %v440 = vand.u32 %v352, 4294901760
      %v441 = vsub.f32 %v352, %v440
      %v442 = vand.u32 %v441, 4294901760
      %v443 = vsub.f32 %v441, %v442
      %v444 = vand.u32 %v443, 4294901760
      %445 = vmatmul.mubr.f32.gmra.mrb[0].mxu0 %v444
      %v446 = vpop.f32.mrb[0].mxu0
      %v447 = vadd.f32 %v335, %v446
      %v448 = vpop.f32.mrb[0].mxu0
      %v449 = vadd.f32 %v335, %v448
      %450 = vmatprep.mubr.f32.mxu0 0.0
      %v451 = vand.u32 %v355, 4294901760
      %v452 = vsub.f32 %v355, %v451
      %v453 = vand.u32 %v452, 4294901760
      %v454 = vsub.f32 %v452, %v453
      %v455 = vand.u32 %v454, 4294901760
      %456 = vmatmul.mubr.f32.gmra.mrb[0].mxu0 %v455
      %v457 = vpop.f32.mrb[0].mxu0
      %v458 = vadd.f32 %v340, %v457
      %v459 = vpop.f32.mrb[0].mxu0
      %v460 = vadd.f32 %v340, %v459
      %461 = vmatprep.mubr.f32.mxu0 0.0
      %v462 = vand.u32 %v358, 4294901760
      %v463 = vsub.f32 %v358, %v462
      %v464 = vand.u32 %v463, 4294901760
      %v465 = vsub.f32 %v463, %v464
      %v466 = vand.u32 %v465, 4294901760
      %467 = vmatmul.mubr.f32.gmra.mrb[0].mxu0 %v466
      %v468 = vpop.f32.mrb[0].mxu0
      %v469 = vadd.f32 %v345, %v468
      %v470 = vpop.f32.mrb[0].mxu0
      %v471 = vadd.f32 %v345, %v470
      %472 = vdwg.mxu0
      %v473 = vand.u32 %v316, 4294901760
      %v474 = vsub.f32 %v316, %v473
      %v475 = vand.u32 %v474, 4294901760
      %v476 = vsub.f32 %v474, %v475
      %v477 = vand.u32 %v476, 4294901760
      %478 = vmatprep.subr.mxu0 %v477
      %v479 = vand.u32 %v315, 4294901760
      %v480 = vsub.f32 %v315, %v479
      %v481 = vand.u32 %v480, 4294901760
      %v482 = vsub.f32 %v480, %v481
      %v483 = vand.u32 %v482, 4294901760
      %484 = vmatpush1.msra.mxu0 %v483
      %v485 = vand.u32 %v320, 4294901760
      %v486 = vsub.f32 %v320, %v485
      %v487 = vand.u32 %v486, 4294901760
      %v488 = vsub.f32 %v486, %v487
      %v489 = vand.u32 %v488, 4294901760
      %490 = vmatprep.subr.mxu0 %v489
      %v491 = vand.u32 %v319, 4294901760
      %v492 = vsub.f32 %v319, %v491
      %v493 = vand.u32 %v492, 4294901760
      %v494 = vsub.f32 %v492, %v493
      %v495 = vand.u32 %v494, 4294901760
      %496 = vmatpush1.msra.mxu0 %v495
      %497 = vmatprep.subr.mxu0 0.0
      %498 = vmatpush1.msra.mxu0 0.0
      %499 = vmatprep.subr.mxu0 0.0
      %500 = vmatpush1.msra.mxu0 0.0
      %501 = vmatprep.subr.mxu0 0.0
      %502 = vmatpush1.msra.mxu0 0.0
      %503 = vmatprep.subr.mxu0 0.0
      %504 = vmatpush1.msra.mxu0 0.0
      %505 = vmatprep.subr.mxu0 0.0
      %506 = vmatpush1.msra.mxu0 0.0
      %507 = vmatprep.subr.mxu0 0.0
      %508 = vmatpush1.msra.mxu0 0.0
      %509 = vmatprep.subr.mxu0 0.0
      %510 = vmatpush1.msra.mxu0 0.0
      %511 = vmatprep.subr.mxu0 0.0
      %512 = vmatpush1.msra.mxu0 0.0
      %513 = vmatprep.subr.mxu0 0.0
      %514 = vmatpush1.msra.mxu0 0.0
      %515 = vmatprep.subr.mxu0 0.0
      %516 = vmatpush1.msra.mxu0 0.0
      %517 = vmatprep.subr.mxu0 0.0
      %518 = vmatpush1.msra.mxu0 0.0
      %519 = vmatprep.subr.mxu0 0.0
      %520 = vmatpush1.msra.mxu0 0.0
      %521 = vmatprep.subr.mxu0 0.0
      %522 = vmatpush1.msra.mxu0 0.0
      %523 = vmatprep.subr.mxu0 0.0
      %524 = vmatpush1.msra.mxu0 0.0
      %525 = vmatprep.subr.mxu0 0.0
      %526 = vmatpush1.msra.mxu0 0.0
      %527 = vmatprep.subr.mxu0 0.0
      %528 = vmatpush1.msra.mxu0 0.0
      %529 = vmatprep.subr.mxu0 0.0
      %530 = vmatpush1.msra.mxu0 0.0
      %531 = vmatprep.subr.mxu0 0.0
      %532 = vmatpush1.msra.mxu0 0.0
      %533 = vmatprep.subr.mxu0 0.0
      %534 = vmatpush1.msra.mxu0 0.0
      %535 = vmatprep.subr.mxu0 0.0
      %536 = vmatpush1.msra.mxu0 0.0
      %537 = vmatprep.subr.mxu0 0.0
      %538 = vmatpush1.msra.mxu0 0.0
      %539 = vmatprep.subr.mxu0 0.0
      %540 = vmatpush1.msra.mxu0 0.0
      %541 = vmatprep.subr.mxu0 0.0
      %542 = vmatpush1.msra.mxu0 0.0
      %543 = vmatprep.subr.mxu0 0.0
      %544 = vmatpush1.msra.mxu0 0.0
      %545 = vmatprep.subr.mxu0 0.0
      %546 = vmatpush1.msra.mxu0 0.0
      %547 = vmatprep.subr.mxu0 0.0
      %548 = vmatpush1.msra.mxu0 0.0
      %549 = vmatprep.subr.mxu0 0.0
      %550 = vmatpush1.msra.mxu0 0.0
      %551 = vmatprep.subr.mxu0 0.0
      %552 = vmatpush1.msra.mxu0 0.0
      %553 = vmatprep.subr.mxu0 0.0
      %554 = vmatpush1.msra.mxu0 0.0
      %555 = vmatprep.subr.mxu0 0.0
      %556 = vmatpush1.msra.mxu0 0.0
      %557 = vmatprep.mubr.f32.mxu0 0.0
      %v558 = vand.u32 %v349, 4294901760
      %559 = vmatmul.mubr.f32.gmra.mrb[0].mxu0 %v558
      %v560 = vpop.f32.mrb[0].mxu0
      %v561 = vadd.f32 %v436, %v560
      %v562 = vpop.f32.mrb[0].mxu0
      %v563 = vadd.f32 %v438, %v562
      %564 = vmatprep.mubr.f32.mxu0 0.0
      %v565 = vand.u32 %v352, 4294901760
      %566 = vmatmul.mubr.f32.gmra.mrb[0].mxu0 %v565
      %v567 = vpop.f32.mrb[0].mxu0
      %v568 = vadd.f32 %v447, %v567
      %v569 = vpop.f32.mrb[0].mxu0
      %v570 = vadd.f32 %v449, %v569
      %571 = vmatprep.mubr.f32.mxu0 0.0
      %v572 = vand.u32 %v355, 4294901760
      %573 = vmatmul.mubr.f32.gmra.mrb[0].mxu0 %v572
      %v574 = vpop.f32.mrb[0].mxu0
      %v575 = vadd.f32 %v458, %v574
      %v576 = vpop.f32.mrb[0].mxu0
      %v577 = vadd.f32 %v460, %v576
      %578 = vmatprep.mubr.f32.mxu0 0.0
      %v579 = vand.u32 %v358, 4294901760
      %580 = vmatmul.mubr.f32.gmra.mrb[0].mxu0 %v579
      %v581 = vpop.f32.mrb[0].mxu0
      %v582 = vadd.f32 %v469, %v581
      %v583 = vpop.f32.mrb[0].mxu0
      %v584 = vadd.f32 %v471, %v583
      %585 = vdwg.mxu0
      %v586 = vand.u32 %v316, 4294901760
      %v587 = vsub.f32 %v316, %v586
      %588 = vmatprep.subr.mxu0 %v587
      %v589 = vand.u32 %v315, 4294901760
      %v590 = vsub.f32 %v315, %v589
      %591 = vmatpush1.msra.mxu0 %v590
      %v592 = vand.u32 %v320, 4294901760
      %v593 = vsub.f32 %v320, %v592
      %594 = vmatprep.subr.mxu0 %v593
      %v595 = vand.u32 %v319, 4294901760
      %v596 = vsub.f32 %v319, %v595
      %597 = vmatpush1.msra.mxu0 %v596
      %598 = vmatprep.subr.mxu0 0.0
      %599 = vmatpush1.msra.mxu0 0.0
      %600 = vmatprep.subr.mxu0 0.0
      %601 = vmatpush1.msra.mxu0 0.0
      %602 = vmatprep.subr.mxu0 0.0
      %603 = vmatpush1.msra.mxu0 0.0
      %604 = vmatprep.subr.mxu0 0.0
      %605 = vmatpush1.msra.mxu0 0.0
      %606 = vmatprep.subr.mxu0 0.0
      %607 = vmatpush1.msra.mxu0 0.0
      %608 = vmatprep.subr.mxu0 0.0
      %609 = vmatpush1.msra.mxu0 0.0
      %610 = vmatprep.subr.mxu0 0.0
      %611 = vmatpush1.msra.mxu0 0.0
      %612 = vmatprep.subr.mxu0 0.0
      %613 = vmatpush1.msra.mxu0 0.0
      %614 = vmatprep.subr.mxu0 0.0
      %615 = vmatpush1.msra.mxu0 0.0
      %616 = vmatprep.subr.mxu0 0.0
      %617 = vmatpush1.msra.mxu0 0.0
      %618 = vmatprep.subr.mxu0 0.0
      %619 = vmatpush1.msra.mxu0 0.0
      %620 = vmatprep.subr.mxu0 0.0
      %621 = vmatpush1.msra.mxu0 0.0
      %622 = vmatprep.subr.mxu0 0.0
      %623 = vmatpush1.msra.mxu0 0.0
      %624 = vmatprep.subr.mxu0 0.0
      %625 = vmatpush1.msra.mxu0 0.0
      %626 = vmatprep.subr.mxu0 0.0
      %627 = vmatpush1.msra.mxu0 0.0
      %628 = vmatprep.subr.mxu0 0.0
      %629 = vmatpush1.msra.mxu0 0.0
      %630 = vmatprep.subr.mxu0 0.0
      %631 = vmatpush1.msra.mxu0 0.0
      %632 = vmatprep.subr.mxu0 0.0
      %633 = vmatpush1.msra.mxu0 0.0
      %634 = vmatprep.subr.mxu0 0.0
      %635 = vmatpush1.msra.mxu0 0.0
      %636 = vmatprep.subr.mxu0 0.0
      %637 = vmatpush1.msra.mxu0 0.0
      %638 = vmatprep.subr.mxu0 0.0
      %639 = vmatpush1.msra.mxu0 0.0
      %640 = vmatprep.subr.mxu0 0.0
      %641 = vmatpush1.msra.mxu0 0.0
      %642 = vmatprep.subr.mxu0 0.0
      %643 = vmatpush1.msra.mxu0 0.0
      %644 = vmatprep.subr.mxu0 0.0
      %645 = vmatpush1.msra.mxu0 0.0
      %646 = vmatprep.subr.mxu0 0.0
      %647 = vmatpush1.msra.mxu0 0.0
      %648 = vmatprep.subr.mxu0 0.0
      %649 = vmatpush1.msra.mxu0 0.0
      %650 = vmatprep.subr.mxu0 0.0
      %651 = vmatpush1.msra.mxu0 0.0
      %652 = vmatprep.subr.mxu0 0.0
      %653 = vmatpush1.msra.mxu0 0.0
      %654 = vmatprep.subr.mxu0 0.0
      %655 = vmatpush1.msra.mxu0 0.0
      %656 = vmatprep.subr.mxu0 0.0
      %657 = vmatpush1.msra.mxu0 0.0
      %658 = vmatprep.mubr.f32.mxu0 0.0
      %v659 = vand.u32 %v349, 4294901760
      %v660 = vsub.f32 %v349, %v659
      %661 = vmatmul.mubr.f32.gmra.mrb[0].mxu0 %v660
      %v662 = vpop.f32.mrb[0].mxu0
      %v663 = vadd.f32 %v561, %v662
      %v664 = vpop.f32.mrb[0].mxu0
      %v665 = vadd.f32 %v563, %v664
      %666 = vmatprep.mubr.f32.mxu0 0.0
      %v667 = vand.u32 %v352, 4294901760
      %v668 = vsub.f32 %v352, %v667
      %669 = vmatmul.mubr.f32.gmra.mrb[0].mxu0 %v668
      %v670 = vpop.f32.mrb[0].mxu0
      %v671 = vadd.f32 %v568, %v670
      %v672 = vpop.f32.mrb[0].mxu0
      %v673 = vadd.f32 %v570, %v672
      %674 = vmatprep.mubr.f32.mxu0 0.0
      %v675 = vand.u32 %v355, 4294901760
      %v676 = vsub.f32 %v355, %v675
      %677 = vmatmul.mubr.f32.gmra.mrb[0].mxu0 %v676
      %v678 = vpop.f32.mrb[0].mxu0
      %v679 = vadd.f32 %v575, %v678
      %v680 = vpop.f32.mrb[0].mxu0
      %v681 = vadd.f32 %v577, %v680
      %682 = vmatprep.mubr.f32.mxu0 0.0
      %v683 = vand.u32 %v358, 4294901760
      %v684 = vsub.f32 %v358, %v683
      %685 = vmatmul.mubr.f32.gmra.mrb[0].mxu0 %v684
      %v686 = vpop.f32.mrb[0].mxu0
      %v687 = vadd.f32 %v582, %v686
      %v688 = vpop.f32.mrb[0].mxu0
      %v689 = vadd.f32 %v584, %v688
      %690 = vdwg.mxu0
      %v691 = vand.u32 %v316, 4294901760
      %692 = vmatprep.subr.mxu0 %v691
      %v693 = vand.u32 %v315, 4294901760
      %694 = vmatpush1.msra.mxu0 %v693
      %v695 = vand.u32 %v320, 4294901760
      %696 = vmatprep.subr.mxu0 %v695
      %v697 = vand.u32 %v319, 4294901760
      %698 = vmatpush1.msra.mxu0 %v697
      %699 = vmatprep.subr.mxu0 0.0
      %700 = vmatpush1.msra.mxu0 0.0
      %701 = vmatprep.subr.mxu0 0.0
      %702 = vmatpush1.msra.mxu0 0.0
      %703 = vmatprep.subr.mxu0 0.0
      %704 = vmatpush1.msra.mxu0 0.0
      %705 = vmatprep.subr.mxu0 0.0
      %706 = vmatpush1.msra.mxu0 0.0
      %707 = vmatprep.subr.mxu0 0.0
      %708 = vmatpush1.msra.mxu0 0.0
      %709 = vmatprep.subr.mxu0 0.0
      %710 = vmatpush1.msra.mxu0 0.0
      %711 = vmatprep.subr.mxu0 0.0
      %712 = vmatpush1.msra.mxu0 0.0
      %713 = vmatprep.subr.mxu0 0.0
      %714 = vmatpush1.msra.mxu0 0.0
      %715 = vmatprep.subr.mxu0 0.0
      %716 = vmatpush1.msra.mxu0 0.0
      %717 = vmatprep.subr.mxu0 0.0
      %718 = vmatpush1.msra.mxu0 0.0
      %719 = vmatprep.subr.mxu0 0.0
      %720 = vmatpush1.msra.mxu0 0.0
      %721 = vmatprep.subr.mxu0 0.0
      %722 = vmatpush1.msra.mxu0 0.0
      %723 = vmatprep.subr.mxu0 0.0
      %724 = vmatpush1.msra.mxu0 0.0
      %725 = vmatprep.subr.mxu0 0.0
      %726 = vmatpush1.msra.mxu0 0.0
      %727 = vmatprep.subr.mxu0 0.0
      %728 = vmatpush1.msra.mxu0 0.0
      %729 = vmatprep.subr.mxu0 0.0
      %730 = vmatpush1.msra.mxu0 0.0
      %731 = vmatprep.subr.mxu0 0.0
      %732 = vmatpush1.msra.mxu0 0.0
      %733 = vmatprep.subr.mxu0 0.0
      %734 = vmatpush1.msra.mxu0 0.0
      %735 = vmatprep.subr.mxu0 0.0
      %736 = vmatpush1.msra.mxu0 0.0
      %737 = vmatprep.subr.mxu0 0.0
      %738 = vmatpush1.msra.mxu0 0.0
      %739 = vmatprep.subr.mxu0 0.0
      %740 = vmatpush1.msra.mxu0 0.0
      %741 = vmatprep.subr.mxu0 0.0
      %742 = vmatpush1.msra.mxu0 0.0
      %743 = vmatprep.subr.mxu0 0.0
      %744 = vmatpush1.msra.mxu0 0.0
      %745 = vmatprep.subr.mxu0 0.0
      %746 = vmatpush1.msra.mxu0 0.0
      %747 = vmatprep.subr.mxu0 0.0
      %748 = vmatpush1.msra.mxu0 0.0
      %749 = vmatprep.subr.mxu0 0.0
      %750 = vmatpush1.msra.mxu0 0.0
      %751 = vmatprep.subr.mxu0 0.0
      %752 = vmatpush1.msra.mxu0 0.0
      %753 = vmatprep.subr.mxu0 0.0
      %754 = vmatpush1.msra.mxu0 0.0
      %755 = vmatprep.subr.mxu0 0.0
      %756 = vmatpush1.msra.mxu0 0.0
      %757 = vmatprep.subr.mxu0 0.0
      %758 = vmatpush1.msra.mxu0 0.0
      %759 = vmatprep.mubr.f32.mxu0 0.0
      %v760 = vand.u32 %v349, 4294901760
      %v761 = vsub.f32 %v349, %v760
      %v762 = vand.u32 %v761, 4294901760
      %763 = vmatmul.mubr.f32.gmra.mrb[0].mxu0 %v762
      %v764 = vpop.f32.mrb[0].mxu0
      %v765 = vadd.f32 %v663, %v764
      %v766 = vpop.f32.mrb[0].mxu0
      %v767 = vadd.f32 %v665, %v766
      %768 = vmatprep.mubr.f32.mxu0 0.0
      %v769 = vand.u32 %v352, 4294901760
      %v770 = vsub.f32 %v352, %v769
      %v771 = vand.u32 %v770, 4294901760
      %772 = vmatmul.mubr.f32.gmra.mrb[0].mxu0 %v771
      %v773 = vpop.f32.mrb[0].mxu0
      %v774 = vadd.f32 %v671, %v773
      %v775 = vpop.f32.mrb[0].mxu0
      %v776 = vadd.f32 %v673, %v775
      %777 = vmatprep.mubr.f32.mxu0 0.0
      %v778 = vand.u32 %v355, 4294901760
      %v779 = vsub.f32 %v355, %v778
      %v780 = vand.u32 %v779, 4294901760
      %781 = vmatmul.mubr.f32.gmra.mrb[0].mxu0 %v780
      %v782 = vpop.f32.mrb[0].mxu0
      %v783 = vadd.f32 %v679, %v782
      %v784 = vpop.f32.mrb[0].mxu0
      %v785 = vadd.f32 %v681, %v784
      %786 = vmatprep.mubr.f32.mxu0 0.0
      %v787 = vand.u32 %v358, 4294901760
      %v788 = vsub.f32 %v358, %v787
      %v789 = vand.u32 %v788, 4294901760
      %790 = vmatmul.mubr.f32.gmra.mrb[0].mxu0 %v789
      %v791 = vpop.f32.mrb[0].mxu0
      %v792 = vadd.f32 %v687, %v791
      %v793 = vpop.f32.mrb[0].mxu0
      %v794 = vadd.f32 %v689, %v793
      %795 = vdwg.mxu0
      %v796 = vand.u32 %v316, 4294901760
      %v797 = vsub.f32 %v316, %v796
      %v798 = vand.u32 %v797, 4294901760
      %799 = vmatprep.subr.mxu0 %v798
      %v800 = vand.u32 %v315, 4294901760
      %v801 = vsub.f32 %v315, %v800
      %v802 = vand.u32 %v801, 4294901760
      %803 = vmatpush1.msra.mxu0 %v802
      %v804 = vand.u32 %v320, 4294901760
      %v805 = vsub.f32 %v320, %v804
      %v806 = vand.u32 %v805, 4294901760
      %807 = vmatprep.subr.mxu0 %v806
      %v808 = vand.u32 %v319, 4294901760
      %v809 = vsub.f32 %v319, %v808
      %v810 = vand.u32 %v809, 4294901760
      %811 = vmatpush1.msra.mxu0 %v810
      %812 = vmatprep.subr.mxu0 0.0
      %813 = vmatpush1.msra.mxu0 0.0
      %814 = vmatprep.subr.mxu0 0.0
      %815 = vmatpush1.msra.mxu0 0.0
      %816 = vmatprep.subr.mxu0 0.0
      %817 = vmatpush1.msra.mxu0 0.0
      %818 = vmatprep.subr.mxu0 0.0
      %819 = vmatpush1.msra.mxu0 0.0
      %820 = vmatprep.subr.mxu0 0.0
      %821 = vmatpush1.msra.mxu0 0.0
      %822 = vmatprep.subr.mxu0 0.0
      %823 = vmatpush1.msra.mxu0 0.0
      %824 = vmatprep.subr.mxu0 0.0
      %825 = vmatpush1.msra.mxu0 0.0
      %826 = vmatprep.subr.mxu0 0.0
      %827 = vmatpush1.msra.mxu0 0.0
      %828 = vmatprep.subr.mxu0 0.0
      %829 = vmatpush1.msra.mxu0 0.0
      %830 = vmatprep.subr.mxu0 0.0
      %831 = vmatpush1.msra.mxu0 0.0
      %832 = vmatprep.subr.mxu0 0.0
      %833 = vmatpush1.msra.mxu0 0.0
      %834 = vmatprep.subr.mxu0 0.0
      %835 = vmatpush1.msra.mxu0 0.0
      %836 = vmatprep.subr.mxu0 0.0
      %837 = vmatpush1.msra.mxu0 0.0
      %838 = vmatprep.subr.mxu0 0.0
      %839 = vmatpush1.msra.mxu0 0.0
      %840 = vmatprep.subr.mxu0 0.0
      %841 = vmatpush1.msra.mxu0 0.0
      %842 = vmatprep.subr.mxu0 0.0
      %843 = vmatpush1.msra.mxu0 0.0
      %844 = vmatprep.subr.mxu0 0.0
      %845 = vmatpush1.msra.mxu0 0.0
      %846 = vmatprep.subr.mxu0 0.0
      %847 = vmatpush1.msra.mxu0 0.0
      %848 = vmatprep.subr.mxu0 0.0
      %849 = vmatpush1.msra.mxu0 0.0
      %850 = vmatprep.subr.mxu0 0.0
      %851 = vmatpush1.msra.mxu0 0.0
      %852 = vmatprep.subr.mxu0 0.0
      %853 = vmatpush1.msra.mxu0 0.0
      %854 = vmatprep.subr.mxu0 0.0
      %855 = vmatpush1.msra.mxu0 0.0
      %856 = vmatprep.subr.mxu0 0.0
      %857 = vmatpush1.msra.mxu0 0.0
      %858 = vmatprep.subr.mxu0 0.0
      %859 = vmatpush1.msra.mxu0 0.0
      %860 = vmatprep.subr.mxu0 0.0
      %861 = vmatpush1.msra.mxu0 0.0
      %862 = vmatprep.subr.mxu0 0.0
      %863 = vmatpush1.msra.mxu0 0.0
      %864 = vmatprep.subr.mxu0 0.0
      %865 = vmatpush1.msra.mxu0 0.0
      %866 = vmatprep.subr.mxu0 0.0
      %867 = vmatpush1.msra.mxu0 0.0
      %868 = vmatprep.subr.mxu0 0.0
      %869 = vmatpush1.msra.mxu0 0.0
      %870 = vmatprep.subr.mxu0 0.0
      %871 = vmatpush1.msra.mxu0 0.0
      %872 = vmatprep.mubr.f32.mxu0 0.0
      %v873 = vand.u32 %v349, 4294901760
      %874 = vmatmul.mubr.f32.gmra.mrb[0].mxu0 %v873
      %v875 = vpop.f32.mrb[0].mxu0
      %v876 = vadd.f32 %v765, %v875
      %v877 = vpop.f32.mrb[0].mxu0
      %v878 = vadd.f32 %v767, %v877
      %879 = vmatprep.mubr.f32.mxu0 0.0
      %v880 = vand.u32 %v352, 4294901760
      %881 = vmatmul.mubr.f32.gmra.mrb[0].mxu0 %v880
      %v882 = vpop.f32.mrb[0].mxu0
      %v883 = vadd.f32 %v774, %v882
      %v884 = vpop.f32.mrb[0].mxu0
      %v885 = vadd.f32 %v776, %v884
      %886 = vmatprep.mubr.f32.mxu0 0.0
      %v887 = vand.u32 %v355, 4294901760
      %888 = vmatmul.mubr.f32.gmra.mrb[0].mxu0 %v887
      %v889 = vpop.f32.mrb[0].mxu0
      %v890 = vadd.f32 %v783, %v889
      %v891 = vpop.f32.mrb[0].mxu0
      %v892 = vadd.f32 %v785, %v891
      %893 = vmatprep.mubr.f32.mxu0 0.0
      %v894 = vand.u32 %v358, 4294901760
      %895 = vmatmul.mubr.f32.gmra.mrb[0].mxu0 %v894
      %v896 = vpop.f32.mrb[0].mxu0
      %v897 = vadd.f32 %v792, %v896
      %v898 = vpop.f32.mrb[0].mxu0
      %v899 = vadd.f32 %v794, %v898
      %900 = vdwg.mxu0
      %v901 = vand.u32 %v316, 4294901760
      %902 = vmatprep.subr.mxu0 %v901
      %v903 = vand.u32 %v315, 4294901760
      %904 = vmatpush1.msra.mxu0 %v903
      %v905 = vand.u32 %v320, 4294901760
      %906 = vmatprep.subr.mxu0 %v905
      %v907 = vand.u32 %v319, 4294901760
      %908 = vmatpush1.msra.mxu0 %v907
      %909 = vmatprep.subr.mxu0 0.0
      %910 = vmatpush1.msra.mxu0 0.0
      %911 = vmatprep.subr.mxu0 0.0
      %912 = vmatpush1.msra.mxu0 0.0
      %913 = vmatprep.subr.mxu0 0.0
      %914 = vmatpush1.msra.mxu0 0.0
      %915 = vmatprep.subr.mxu0 0.0
      %916 = vmatpush1.msra.mxu0 0.0
      %917 = vmatprep.subr.mxu0 0.0
      %918 = vmatpush1.msra.mxu0 0.0
      %919 = vmatprep.subr.mxu0 0.0
      %920 = vmatpush1.msra.mxu0 0.0
      %921 = vmatprep.subr.mxu0 0.0
      %922 = vmatpush1.msra.mxu0 0.0
      %923 = vmatprep.subr.mxu0 0.0
      %924 = vmatpush1.msra.mxu0 0.0
      %925 = vmatprep.subr.mxu0 0.0
      %926 = vmatpush1.msra.mxu0 0.0
      %927 = vmatprep.subr.mxu0 0.0
      %928 = vmatpush1.msra.mxu0 0.0
      %929 = vmatprep.subr.mxu0 0.0
      %930 = vmatpush1.msra.mxu0 0.0
      %931 = vmatprep.subr.mxu0 0.0
      %932 = vmatpush1.msra.mxu0 0.0
      %933 = vmatprep.subr.mxu0 0.0
      %934 = vmatpush1.msra.mxu0 0.0
      %935 = vmatprep.subr.mxu0 0.0
      %936 = vmatpush1.msra.mxu0 0.0
      %937 = vmatprep.subr.mxu0 0.0
      %938 = vmatpush1.msra.mxu0 0.0
      %939 = vmatprep.subr.mxu0 0.0
      %940 = vmatpush1.msra.mxu0 0.0
      %941 = vmatprep.subr.mxu0 0.0
      %942 = vmatpush1.msra.mxu0 0.0
      %943 = vmatprep.subr.mxu0 0.0
      %944 = vmatpush1.msra.mxu0 0.0
      %945 = vmatprep.subr.mxu0 0.0
      %946 = vmatpush1.msra.mxu0 0.0
      %947 = vmatprep.subr.mxu0 0.0
      %948 = vmatpush1.msra.mxu0 0.0
      %949 = vmatprep.subr.mxu0 0.0
      %950 = vmatpush1.msra.mxu0 0.0
      %951 = vmatprep.subr.mxu0 0.0
      %952 = vmatpush1.msra.mxu0 0.0
      %953 = vmatprep.subr.mxu0 0.0
      %954 = vmatpush1.msra.mxu0 0.0
      %955 = vmatprep.subr.mxu0 0.0
      %956 = vmatpush1.msra.mxu0 0.0
      %957 = vmatprep.subr.mxu0 0.0
      %958 = vmatpush1.msra.mxu0 0.0
      %959 = vmatprep.subr.mxu0 0.0
      %960 = vmatpush1.msra.mxu0 0.0
      %961 = vmatprep.subr.mxu0 0.0
      %962 = vmatpush1.msra.mxu0 0.0
      %963 = vmatprep.subr.mxu0 0.0
      %964 = vmatpush1.msra.mxu0 0.0
      %965 = vmatprep.subr.mxu0 0.0
      %966 = vmatpush1.msra.mxu0 0.0
      %967 = vmatprep.subr.mxu0 0.0
      %968 = vmatpush1.msra.mxu0 0.0
      %969 = vmatprep.mubr.f32.mxu0 0.0
      %v970 = vand.u32 %v349, 4294901760
      %971 = vmatmul.mubr.f32.gmra.mrb[0].mxu0 %v970
      %v972 = vpop.f32.mrb[0].mxu0
      %v973 = vadd.f32 %v876, %v972
      %v974 = vpop.f32.mrb[0].mxu0
      %v975 = vadd.f32 %v878, %v974
      %976 = vmatprep.mubr.f32.mxu0 0.0
      %v977 = vand.u32 %v352, 4294901760
      %978 = vmatmul.mubr.f32.gmra.mrb[0].mxu0 %v977
      %v979 = vpop.f32.mrb[0].mxu0
      %v980 = vadd.f32 %v883, %v979
      %v981 = vpop.f32.mrb[0].mxu0
      %v982 = vadd.f32 %v885, %v981
      %983 = vmatprep.mubr.f32.mxu0 0.0
      %v984 = vand.u32 %v355, 4294901760
      %985 = vmatmul.mubr.f32.gmra.mrb[0].mxu0 %v984
      %v986 = vpop.f32.mrb[0].mxu0
      %v987 = vadd.f32 %v890, %v986
      %v988 = vpop.f32.mrb[0].mxu0
      %v989 = vadd.f32 %v892, %v988
      %990 = vmatprep.mubr.f32.mxu0 0.0
      %v991 = vand.u32 %v358, 4294901760
      %992 = vmatmul.mubr.f32.gmra.mrb[0].mxu0 %v991
      %v993 = vpop.f32.mrb[0].mxu0
      %v994 = vadd.f32 %v897, %v993
      %v995 = vpop.f32.mrb[0].mxu0
      %v996 = vadd.f32 %v899, %v995
      %997 = vdwg.mxu0
      %v998 = vand.u32 %v318, 4294901760
      %999 = vmatprep.subr.mxu0 %v998
      %v1000 = vand.u32 %v317, 4294901760
      %1001 = vmatpush1.msra.mxu0 %v1000
      %v1002 = vand.u32 %v322, 4294901760
      %1003 = vmatprep.subr.mxu0 %v1002
      %v1004 = vand.u32 %v321, 4294901760
      %1005 = vmatpush1.msra.mxu0 %v1004
      %1006 = vmatprep.subr.mxu0 0.0
      %1007 = vmatpush1.msra.mxu0 0.0
      %1008 = vmatprep.subr.mxu0 0.0
      %1009 = vmatpush1.msra.mxu0 0.0
      %1010 = vmatprep.subr.mxu0 0.0
      %1011 = vmatpush1.msra.mxu0 0.0
      %1012 = vmatprep.subr.mxu0 0.0
      %1013 = vmatpush1.msra.mxu0 0.0
      %1014 = vmatprep.subr.mxu0 0.0
      %1015 = vmatpush1.msra.mxu0 0.0
      %1016 = vmatprep.subr.mxu0 0.0
      %1017 = vmatpush1.msra.mxu0 0.0
      %1018 = vmatprep.subr.mxu0 0.0
      %1019 = vmatpush1.msra.mxu0 0.0
      %1020 = vmatprep.subr.mxu0 0.0
      %1021 = vmatpush1.msra.mxu0 0.0
      %1022 = vmatprep.subr.mxu0 0.0
      %1023 = vmatpush1.msra.mxu0 0.0
      %1024 = vmatprep.subr.mxu0 0.0
      %1025 = vmatpush1.msra.mxu0 0.0
      %1026 = vmatprep.subr.mxu0 0.0
      %1027 = vmatpush1.msra.mxu0 0.0
      %1028 = vmatprep.subr.mxu0 0.0
      %1029 = vmatpush1.msra.mxu0 0.0
      %1030 = vmatprep.subr.mxu0 0.0
      %1031 = vmatpush1.msra.mxu0 0.0
      %1032 = vmatprep.subr.mxu0 0.0
      %1033 = vmatpush1.msra.mxu0 0.0
      %1034 = vmatprep.subr.mxu0 0.0
      %1035 = vmatpush1.msra.mxu0 0.0
      %1036 = vmatprep.subr.mxu0 0.0
      %1037 = vmatpush1.msra.mxu0 0.0
      %1038 = vmatprep.subr.mxu0 0.0
      %1039 = vmatpush1.msra.mxu0 0.0
      %1040 = vmatprep.subr.mxu0 0.0
      %1041 = vmatpush1.msra.mxu0 0.0
      %1042 = vmatprep.subr.mxu0 0.0
      %1043 = vmatpush1.msra.mxu0 0.0
      %1044 = vmatprep.subr.mxu0 0.0
      %1045 = vmatpush1.msra.mxu0 0.0
      %1046 = vmatprep.subr.mxu0 0.0
      %1047 = vmatpush1.msra.mxu0 0.0
      %1048 = vmatprep.subr.mxu0 0.0
      %1049 = vmatpush1.msra.mxu0 0.0
      %1050 = vmatprep.subr.mxu0 0.0
      %1051 = vmatpush1.msra.mxu0 0.0
      %1052 = vmatprep.subr.mxu0 0.0
      %1053 = vmatpush1.msra.mxu0 0.0
      %1054 = vmatprep.subr.mxu0 0.0
      %1055 = vmatpush1.msra.mxu0 0.0
      %1056 = vmatprep.subr.mxu0 0.0
      %1057 = vmatpush1.msra.mxu0 0.0
      %1058 = vmatprep.subr.mxu0 0.0
      %1059 = vmatpush1.msra.mxu0 0.0
      %1060 = vmatprep.subr.mxu0 0.0
      %1061 = vmatpush1.msra.mxu0 0.0
      %1062 = vmatprep.subr.mxu0 0.0
      %1063 = vmatpush1.msra.mxu0 0.0
      %1064 = vmatprep.subr.mxu0 0.0
      %1065 = vmatpush1.msra.mxu0 0.0
      %1066 = vmatprep.mubr.f32.mxu0 0.0
      %v1067 = vand.u32 %v349, 4294901760
      %v1068 = vsub.f32 %v349, %v1067
      %v1069 = vand.u32 %v1068, 4294901760
      %v1070 = vsub.f32 %v1068, %v1069
      %v1071 = vand.u32 %v1070, 4294901760
      %1072 = vmatmul.mubr.f32.gmra.mrb[0].mxu0 %v1071
      %v1073 = vpop.f32.mrb[0].mxu0
      %v1074 = vadd.f32 %v330, %v1073
      %v1075 = vpop.f32.mrb[0].mxu0
      %v1076 = vadd.f32 %v330, %v1075
      %1077 = vmatprep.mubr.f32.mxu0 0.0
      %v1078 = vand.u32 %v352, 4294901760
      %v1079 = vsub.f32 %v352, %v1078
      %v1080 = vand.u32 %v1079, 4294901760
      %v1081 = vsub.f32 %v1079, %v1080
      %v1082 = vand.u32 %v1081, 4294901760
      %1083 = vmatmul.mubr.f32.gmra.mrb[0].mxu0 %v1082
      %v1084 = vpop.f32.mrb[0].mxu0
      %v1085 = vadd.f32 %v335, %v1084
      %v1086 = vpop.f32.mrb[0].mxu0
      %v1087 = vadd.f32 %v335, %v1086
      %1088 = vmatprep.mubr.f32.mxu0 0.0
      %v1089 = vand.u32 %v355, 4294901760
      %v1090 = vsub.f32 %v355, %v1089
      %v1091 = vand.u32 %v1090, 4294901760
      %v1092 = vsub.f32 %v1090, %v1091
      %v1093 = vand.u32 %v1092, 4294901760
      %1094 = vmatmul.mubr.f32.gmra.mrb[0].mxu0 %v1093
      %v1095 = vpop.f32.mrb[0].mxu0
      %v1096 = vadd.f32 %v340, %v1095
      %v1097 = vpop.f32.mrb[0].mxu0
      %v1098 = vadd.f32 %v340, %v1097
      %1099 = vmatprep.mubr.f32.mxu0 0.0
      %v1100 = vand.u32 %v358, 4294901760
      %v1101 = vsub.f32 %v358, %v1100
      %v1102 = vand.u32 %v1101, 4294901760
      %v1103 = vsub.f32 %v1101, %v1102
      %v1104 = vand.u32 %v1103, 4294901760
      %1105 = vmatmul.mubr.f32.gmra.mrb[0].mxu0 %v1104
      %v1106 = vpop.f32.mrb[0].mxu0
      %v1107 = vadd.f32 %v345, %v1106
      %v1108 = vpop.f32.mrb[0].mxu0
      %v1109 = vadd.f32 %v345, %v1108
      %1110 = vdwg.mxu0
      %v1111 = vand.u32 %v318, 4294901760
      %v1112 = vsub.f32 %v318, %v1111
      %v1113 = vand.u32 %v1112, 4294901760
      %v1114 = vsub.f32 %v1112, %v1113
      %v1115 = vand.u32 %v1114, 4294901760
      %1116 = vmatprep.subr.mxu0 %v1115
      %v1117 = vand.u32 %v317, 4294901760
      %v1118 = vsub.f32 %v317, %v1117
      %v1119 = vand.u32 %v1118, 4294901760
      %v1120 = vsub.f32 %v1118, %v1119
      %v1121 = vand.u32 %v1120, 4294901760
      %1122 = vmatpush1.msra.mxu0 %v1121
      %v1123 = vand.u32 %v322, 4294901760
      %v1124 = vsub.f32 %v322, %v1123
      %v1125 = vand.u32 %v1124, 4294901760
      %v1126 = vsub.f32 %v1124, %v1125
      %v1127 = vand.u32 %v1126, 4294901760
      %1128 = vmatprep.subr.mxu0 %v1127
      %v1129 = vand.u32 %v321, 4294901760
      %v1130 = vsub.f32 %v321, %v1129
      %v1131 = vand.u32 %v1130, 4294901760
      %v1132 = vsub.f32 %v1130, %v1131
      %v1133 = vand.u32 %v1132, 4294901760
      %1134 = vmatpush1.msra.mxu0 %v1133
      %1135 = vmatprep.subr.mxu0 0.0
      %1136 = vmatpush1.msra.mxu0 0.0
      %1137 = vmatprep.subr.mxu0 0.0
      %1138 = vmatpush1.msra.mxu0 0.0
      %1139 = vmatprep.subr.mxu0 0.0
      %1140 = vmatpush1.msra.mxu0 0.0
      %1141 = vmatprep.subr.mxu0 0.0
      %1142 = vmatpush1.msra.mxu0 0.0
      %1143 = vmatprep.subr.mxu0 0.0
      %1144 = vmatpush1.msra.mxu0 0.0
      %1145 = vmatprep.subr.mxu0 0.0
      %1146 = vmatpush1.msra.mxu0 0.0
      %1147 = vmatprep.subr.mxu0 0.0
      %1148 = vmatpush1.msra.mxu0 0.0
      %1149 = vmatprep.subr.mxu0 0.0
      %1150 = vmatpush1.msra.mxu0 0.0
      %1151 = vmatprep.subr.mxu0 0.0
      %1152 = vmatpush1.msra.mxu0 0.0
      %1153 = vmatprep.subr.mxu0 0.0
      %1154 = vmatpush1.msra.mxu0 0.0
      %1155 = vmatprep.subr.mxu0 0.0
      %1156 = vmatpush1.msra.mxu0 0.0
      %1157 = vmatprep.subr.mxu0 0.0
      %1158 = vmatpush1.msra.mxu0 0.0
      %1159 = vmatprep.subr.mxu0 0.0
      %1160 = vmatpush1.msra.mxu0 0.0
      %1161 = vmatprep.subr.mxu0 0.0
      %1162 = vmatpush1.msra.mxu0 0.0
      %1163 = vmatprep.subr.mxu0 0.0
      %1164 = vmatpush1.msra.mxu0 0.0
      %1165 = vmatprep.subr.mxu0 0.0
      %1166 = vmatpush1.msra.mxu0 0.0
      %1167 = vmatprep.subr.mxu0 0.0
      %1168 = vmatpush1.msra.mxu0 0.0
      %1169 = vmatprep.subr.mxu0 0.0
      %1170 = vmatpush1.msra.mxu0 0.0
      %1171 = vmatprep.subr.mxu0 0.0
      %1172 = vmatpush1.msra.mxu0 0.0
      %1173 = vmatprep.subr.mxu0 0.0
      %1174 = vmatpush1.msra.mxu0 0.0
      %1175 = vmatprep.subr.mxu0 0.0
      %1176 = vmatpush1.msra.mxu0 0.0
      %1177 = vmatprep.subr.mxu0 0.0
      %1178 = vmatpush1.msra.mxu0 0.0
      %1179 = vmatprep.subr.mxu0 0.0
      %1180 = vmatpush1.msra.mxu0 0.0
      %1181 = vmatprep.subr.mxu0 0.0
      %1182 = vmatpush1.msra.mxu0 0.0
      %1183 = vmatprep.subr.mxu0 0.0
      %1184 = vmatpush1.msra.mxu0 0.0
      %1185 = vmatprep.subr.mxu0 0.0
      %1186 = vmatpush1.msra.mxu0 0.0
      %1187 = vmatprep.subr.mxu0 0.0
      %1188 = vmatpush1.msra.mxu0 0.0
      %1189 = vmatprep.subr.mxu0 0.0
      %1190 = vmatpush1.msra.mxu0 0.0
      %1191 = vmatprep.subr.mxu0 0.0
      %1192 = vmatpush1.msra.mxu0 0.0
      %1193 = vmatprep.subr.mxu0 0.0
      %1194 = vmatpush1.msra.mxu0 0.0
      %1195 = vmatprep.mubr.f32.mxu0 0.0
      %v1196 = vand.u32 %v349, 4294901760
      %1197 = vmatmul.mubr.f32.gmra.mrb[0].mxu0 %v1196
      %v1198 = vpop.f32.mrb[0].mxu0
      %v1199 = vadd.f32 %v1074, %v1198
      %v1200 = vpop.f32.mrb[0].mxu0
      %v1201 = vadd.f32 %v1076, %v1200
      %1202 = vmatprep.mubr.f32.mxu0 0.0
      %v1203 = vand.u32 %v352, 4294901760
      %1204 = vmatmul.mubr.f32.gmra.mrb[0].mxu0 %v1203
      %v1205 = vpop.f32.mrb[0].mxu0
      %v1206 = vadd.f32 %v1085, %v1205
      %v1207 = vpop.f32.mrb[0].mxu0
      %v1208 = vadd.f32 %v1087, %v1207
      %1209 = vmatprep.mubr.f32.mxu0 0.0
      %v1210 = vand.u32 %v355, 4294901760
      %1211 = vmatmul.mubr.f32.gmra.mrb[0].mxu0 %v1210
      %v1212 = vpop.f32.mrb[0].mxu0
      %v1213 = vadd.f32 %v1096, %v1212
      %v1214 = vpop.f32.mrb[0].mxu0
      %v1215 = vadd.f32 %v1098, %v1214
      %1216 = vmatprep.mubr.f32.mxu0 0.0
      %v1217 = vand.u32 %v358, 4294901760
      %1218 = vmatmul.mubr.f32.gmra.mrb[0].mxu0 %v1217
      %v1219 = vpop.f32.mrb[0].mxu0
      %v1220 = vadd.f32 %v1107, %v1219
      %v1221 = vpop.f32.mrb[0].mxu0
      %v1222 = vadd.f32 %v1109, %v1221
      %1223 = vdwg.mxu0
      %v1224 = vand.u32 %v318, 4294901760
      %v1225 = vsub.f32 %v318, %v1224
      %1226 = vmatprep.subr.mxu0 %v1225
      %v1227 = vand.u32 %v317, 4294901760
      %v1228 = vsub.f32 %v317, %v1227
      %1229 = vmatpush1.msra.mxu0 %v1228
      %v1230 = vand.u32 %v322, 4294901760
      %v1231 = vsub.f32 %v322, %v1230
      %1232 = vmatprep.subr.mxu0 %v1231
      %v1233 = vand.u32 %v321, 4294901760
      %v1234 = vsub.f32 %v321, %v1233
      %1235 = vmatpush1.msra.mxu0 %v1234
      %1236 = vmatprep.subr.mxu0 0.0
      %1237 = vmatpush1.msra.mxu0 0.0
      %1238 = vmatprep.subr.mxu0 0.0
      %1239 = vmatpush1.msra.mxu0 0.0
      %1240 = vmatprep.subr.mxu0 0.0
      %1241 = vmatpush1.msra.mxu0 0.0
      %1242 = vmatprep.subr.mxu0 0.0
      %1243 = vmatpush1.msra.mxu0 0.0
      %1244 = vmatprep.subr.mxu0 0.0
      %1245 = vmatpush1.msra.mxu0 0.0
      %1246 = vmatprep.subr.mxu0 0.0
      %1247 = vmatpush1.msra.mxu0 0.0
      %1248 = vmatprep.subr.mxu0 0.0
      %1249 = vmatpush1.msra.mxu0 0.0
      %1250 = vmatprep.subr.mxu0 0.0
      %1251 = vmatpush1.msra.mxu0 0.0
      %1252 = vmatprep.subr.mxu0 0.0
      %1253 = vmatpush1.msra.mxu0 0.0
      %1254 = vmatprep.subr.mxu0 0.0
      %1255 = vmatpush1.msra.mxu0 0.0
      %1256 = vmatprep.subr.mxu0 0.0
      %1257 = vmatpush1.msra.mxu0 0.0
      %1258 = vmatprep.subr.mxu0 0.0
      %1259 = vmatpush1.msra.mxu0 0.0
      %1260 = vmatprep.subr.mxu0 0.0
      %1261 = vmatpush1.msra.mxu0 0.0
      %1262 = vmatprep.subr.mxu0 0.0
      %1263 = vmatpush1.msra.mxu0 0.0
      %1264 = vmatprep.subr.mxu0 0.0
      %1265 = vmatpush1.msra.mxu0 0.0
      %1266 = vmatprep.subr.mxu0 0.0
      %1267 = vmatpush1.msra.mxu0 0.0
      %1268 = vmatprep.subr.mxu0 0.0
      %1269 = vmatpush1.msra.mxu0 0.0
      %1270 = vmatprep.subr.mxu0 0.0
      %1271 = vmatpush1.msra.mxu0 0.0
      %1272 = vmatprep.subr.mxu0 0.0
      %1273 = vmatpush1.msra.mxu0 0.0
      %1274 = vmatprep.subr.mxu0 0.0
      %1275 = vmatpush1.msra.mxu0 0.0
      %1276 = vmatprep.subr.mxu0 0.0
      %1277 = vmatpush1.msra.mxu0 0.0
      %1278 = vmatprep.subr.mxu0 0.0
      %1279 = vmatpush1.msra.mxu0 0.0
      %1280 = vmatprep.subr.mxu0 0.0
      %1281 = vmatpush1.msra.mxu0 0.0
      %1282 = vmatprep.subr.mxu0 0.0
      %1283 = vmatpush1.msra.mxu0 0.0
      %1284 = vmatprep.subr.mxu0 0.0
      %1285 = vmatpush1.msra.mxu0 0.0
      %1286 = vmatprep.subr.mxu0 0.0
      %1287 = vmatpush1.msra.mxu0 0.0
      %1288 = vmatprep.subr.mxu0 0.0
      %1289 = vmatpush1.msra.mxu0 0.0
      %1290 = vmatprep.subr.mxu0 0.0
      %1291 = vmatpush1.msra.mxu0 0.0
      %1292 = vmatprep.subr.mxu0 0.0
      %1293 = vmatpush1.msra.mxu0 0.0
      %1294 = vmatprep.subr.mxu0 0.0
      %1295 = vmatpush1.msra.mxu0 0.0
      %1296 = vmatprep.mubr.f32.mxu0 0.0
      %v1297 = vand.u32 %v349, 4294901760
      %v1298 = vsub.f32 %v349, %v1297
      %1299 = vmatmul.mubr.f32.gmra.mrb[0].mxu0 %v1298
      %v1300 = vpop.f32.mrb[0].mxu0
      %v1301 = vadd.f32 %v1199, %v1300
      %v1302 = vpop.f32.mrb[0].mxu0
      %v1303 = vadd.f32 %v1201, %v1302
      %1304 = vmatprep.mubr.f32.mxu0 0.0
      %v1305 = vand.u32 %v352, 4294901760
      %v1306 = vsub.f32 %v352, %v1305
      %1307 = vmatmul.mubr.f32.gmra.mrb[0].mxu0 %v1306
      %v1308 = vpop.f32.mrb[0].mxu0
      %v1309 = vadd.f32 %v1206, %v1308
      %v1310 = vpop.f32.mrb[0].mxu0
      %v1311 = vadd.f32 %v1208, %v1310
      %1312 = vmatprep.mubr.f32.mxu0 0.0
      %v1313 = vand.u32 %v355, 4294901760
      %v1314 = vsub.f32 %v355, %v1313
      %1315 = vmatmul.mubr.f32.gmra.mrb[0].mxu0 %v1314
      %v1316 = vpop.f32.mrb[0].mxu0
      %v1317 = vadd.f32 %v1213, %v1316
      %v1318 = vpop.f32.mrb[0].mxu0
      %v1319 = vadd.f32 %v1215, %v1318
      %1320 = vmatprep.mubr.f32.mxu0 0.0
      %v1321 = vand.u32 %v358, 4294901760
      %v1322 = vsub.f32 %v358, %v1321
      %1323 = vmatmul.mubr.f32.gmra.mrb[0].mxu0 %v1322
      %v1324 = vpop.f32.mrb[0].mxu0
      %v1325 = vadd.f32 %v1220, %v1324
      %v1326 = vpop.f32.mrb[0].mxu0
      %v1327 = vadd.f32 %v1222, %v1326
      %1328 = vdwg.mxu0
      %v1329 = vand.u32 %v318, 4294901760
      %1330 = vmatprep.subr.mxu0 %v1329
      %v1331 = vand.u32 %v317, 4294901760
      %1332 = vmatpush1.msra.mxu0 %v1331
      %v1333 = vand.u32 %v322, 4294901760
      %1334 = vmatprep.subr.mxu0 %v1333
      %v1335 = vand.u32 %v321, 4294901760
      %1336 = vmatpush1.msra.mxu0 %v1335
      %1337 = vmatprep.subr.mxu0 0.0
      %1338 = vmatpush1.msra.mxu0 0.0
      %1339 = vmatprep.subr.mxu0 0.0
      %1340 = vmatpush1.msra.mxu0 0.0
      %1341 = vmatprep.subr.mxu0 0.0
      %1342 = vmatpush1.msra.mxu0 0.0
      %1343 = vmatprep.subr.mxu0 0.0
      %1344 = vmatpush1.msra.mxu0 0.0
      %1345 = vmatprep.subr.mxu0 0.0
      %1346 = vmatpush1.msra.mxu0 0.0
      %1347 = vmatprep.subr.mxu0 0.0
      %1348 = vmatpush1.msra.mxu0 0.0
      %1349 = vmatprep.subr.mxu0 0.0
      %1350 = vmatpush1.msra.mxu0 0.0
      %1351 = vmatprep.subr.mxu0 0.0
      %1352 = vmatpush1.msra.mxu0 0.0
      %1353 = vmatprep.subr.mxu0 0.0
      %1354 = vmatpush1.msra.mxu0 0.0
      %1355 = vmatprep.subr.mxu0 0.0
      %1356 = vmatpush1.msra.mxu0 0.0
      %1357 = vmatprep.subr.mxu0 0.0
      %1358 = vmatpush1.msra.mxu0 0.0
      %1359 = vmatprep.subr.mxu0 0.0
      %1360 = vmatpush1.msra.mxu0 0.0
      %1361 = vmatprep.subr.mxu0 0.0
      %1362 = vmatpush1.msra.mxu0 0.0
      %1363 = vmatprep.subr.mxu0 0.0
      %1364 = vmatpush1.msra.mxu0 0.0
      %1365 = vmatprep.subr.mxu0 0.0
      %1366 = vmatpush1.msra.mxu0 0.0
      %1367 = vmatprep.subr.mxu0 0.0
      %1368 = vmatpush1.msra.mxu0 0.0
      %1369 = vmatprep.subr.mxu0 0.0
      %1370 = vmatpush1.msra.mxu0 0.0
      %1371 = vmatprep.subr.mxu0 0.0
      %1372 = vmatpush1.msra.mxu0 0.0
      %1373 = vmatprep.subr.mxu0 0.0
      %1374 = vmatpush1.msra.mxu0 0.0
      %1375 = vmatprep.subr.mxu0 0.0
      %1376 = vmatpush1.msra.mxu0 0.0
      %1377 = vmatprep.subr.mxu0 0.0
      %1378 = vmatpush1.msra.mxu0 0.0
      %1379 = vmatprep.subr.mxu0 0.0
      %1380 = vmatpush1.msra.mxu0 0.0
      %1381 = vmatprep.subr.mxu0 0.0
      %1382 = vmatpush1.msra.mxu0 0.0
      %1383 = vmatprep.subr.mxu0 0.0
      %1384 = vmatpush1.msra.mxu0 0.0
      %1385 = vmatprep.subr.mxu0 0.0
      %1386 = vmatpush1.msra.mxu0 0.0
      %1387 = vmatprep.subr.mxu0 0.0
      %1388 = vmatpush1.msra.mxu0 0.0
      %1389 = vmatprep.subr.mxu0 0.0
      %1390 = vmatpush1.msra.mxu0 0.0
      %1391 = vmatprep.subr.mxu0 0.0
      %1392 = vmatpush1.msra.mxu0 0.0
      %1393 = vmatprep.subr.mxu0 0.0
      %1394 = vmatpush1.msra.mxu0 0.0
      %1395 = vmatprep.subr.mxu0 0.0
      %1396 = vmatpush1.msra.mxu0 0.0
      %1397 = vmatprep.mubr.f32.mxu0 0.0
      %v1398 = vand.u32 %v349, 4294901760
      %v1399 = vsub.f32 %v349, %v1398
      %v1400 = vand.u32 %v1399, 4294901760
      %1401 = vmatmul.mubr.f32.gmra.mrb[0].mxu0 %v1400
      %v1402 = vpop.f32.mrb[0].mxu0
      %v1403 = vadd.f32 %v1301, %v1402
      %v1404 = vpop.f32.mrb[0].mxu0
      %v1405 = vadd.f32 %v1303, %v1404
      %1406 = vmatprep.mubr.f32.mxu0 0.0
      %v1407 = vand.u32 %v352, 4294901760
      %v1408 = vsub.f32 %v352, %v1407
      %v1409 = vand.u32 %v1408, 4294901760
      %1410 = vmatmul.mubr.f32.gmra.mrb[0].mxu0 %v1409
      %v1411 = vpop.f32.mrb[0].mxu0
      %v1412 = vadd.f32 %v1309, %v1411
      %v1413 = vpop.f32.mrb[0].mxu0
      %v1414 = vadd.f32 %v1311, %v1413
      %1415 = vmatprep.mubr.f32.mxu0 0.0
      %v1416 = vand.u32 %v355, 4294901760
      %v1417 = vsub.f32 %v355, %v1416
      %v1418 = vand.u32 %v1417, 4294901760
      %1419 = vmatmul.mubr.f32.gmra.mrb[0].mxu0 %v1418
      %v1420 = vpop.f32.mrb[0].mxu0
      %v1421 = vadd.f32 %v1317, %v1420
      %v1422 = vpop.f32.mrb[0].mxu0
      %v1423 = vadd.f32 %v1319, %v1422
      %1424 = vmatprep.mubr.f32.mxu0 0.0
      %v1425 = vand.u32 %v358, 4294901760
      %v1426 = vsub.f32 %v358, %v1425
      %v1427 = vand.u32 %v1426, 4294901760
      %1428 = vmatmul.mubr.f32.gmra.mrb[0].mxu0 %v1427
      %v1429 = vpop.f32.mrb[0].mxu0
      %v1430 = vadd.f32 %v1325, %v1429
      %v1431 = vpop.f32.mrb[0].mxu0
      %v1432 = vadd.f32 %v1327, %v1431
      %1433 = vdwg.mxu0
      %v1434 = vand.u32 %v318, 4294901760
      %v1435 = vsub.f32 %v318, %v1434
      %v1436 = vand.u32 %v1435, 4294901760
      %1437 = vmatprep.subr.mxu0 %v1436
      %v1438 = vand.u32 %v317, 4294901760
      %v1439 = vsub.f32 %v317, %v1438
      %v1440 = vand.u32 %v1439, 4294901760
      %1441 = vmatpush1.msra.mxu0 %v1440
      %v1442 = vand.u32 %v322, 4294901760
      %v1443 = vsub.f32 %v322, %v1442
      %v1444 = vand.u32 %v1443, 4294901760
      %1445 = vmatprep.subr.mxu0 %v1444
      %v1446 = vand.u32 %v321, 4294901760
      %v1447 = vsub.f32 %v321, %v1446
      %v1448 = vand.u32 %v1447, 4294901760
      %1449 = vmatpush1.msra.mxu0 %v1448
      %1450 = vmatprep.subr.mxu0 0.0
      %1451 = vmatpush1.msra.mxu0 0.0
      %1452 = vmatprep.subr.mxu0 0.0
      %1453 = vmatpush1.msra.mxu0 0.0
      %1454 = vmatprep.subr.mxu0 0.0
      %1455 = vmatpush1.msra.mxu0 0.0
      %1456 = vmatprep.subr.mxu0 0.0
      %1457 = vmatpush1.msra.mxu0 0.0
      %1458 = vmatprep.subr.mxu0 0.0
      %1459 = vmatpush1.msra.mxu0 0.0
      %1460 = vmatprep.subr.mxu0 0.0
      %1461 = vmatpush1.msra.mxu0 0.0
      %1462 = vmatprep.subr.mxu0 0.0
      %1463 = vmatpush1.msra.mxu0 0.0
      %1464 = vmatprep.subr.mxu0 0.0
      %1465 = vmatpush1.msra.mxu0 0.0
      %1466 = vmatprep.subr.mxu0 0.0
      %1467 = vmatpush1.msra.mxu0 0.0
      %1468 = vmatprep.subr.mxu0 0.0
      %1469 = vmatpush1.msra.mxu0 0.0
      %1470 = vmatprep.subr.mxu0 0.0
      %1471 = vmatpush1.msra.mxu0 0.0
      %1472 = vmatprep.subr.mxu0 0.0
      %1473 = vmatpush1.msra.mxu0 0.0
      %1474 = vmatprep.subr.mxu0 0.0
      %1475 = vmatpush1.msra.mxu0 0.0
      %1476 = vmatprep.subr.mxu0 0.0
      %1477 = vmatpush1.msra.mxu0 0.0
      %1478 = vmatprep.subr.mxu0 0.0
      %1479 = vmatpush1.msra.mxu0 0.0
      %1480 = vmatprep.subr.mxu0 0.0
      %1481 = vmatpush1.msra.mxu0 0.0
      %1482 = vmatprep.subr.mxu0 0.0
      %1483 = vmatpush1.msra.mxu0 0.0
      %1484 = vmatprep.subr.mxu0 0.0
      %1485 = vmatpush1.msra.mxu0 0.0
      %1486 = vmatprep.subr.mxu0 0.0
      %1487 = vmatpush1.msra.mxu0 0.0
      %1488 = vmatprep.subr.mxu0 0.0
      %1489 = vmatpush1.msra.mxu0 0.0
      %1490 = vmatprep.subr.mxu0 0.0
      %1491 = vmatpush1.msra.mxu0 0.0
      %1492 = vmatprep.subr.mxu0 0.0
      %1493 = vmatpush1.msra.mxu0 0.0
      %1494 = vmatprep.subr.mxu0 0.0
      %1495 = vmatpush1.msra.mxu0 0.0
      %1496 = vmatprep.subr.mxu0 0.0
      %1497 = vmatpush1.msra.mxu0 0.0
      %1498 = vmatprep.subr.mxu0 0.0
      %1499 = vmatpush1.msra.mxu0 0.0
      %1500 = vmatprep.subr.mxu0 0.0
      %1501 = vmatpush1.msra.mxu0 0.0
      %1502 = vmatprep.subr.mxu0 0.0
      %1503 = vmatpush1.msra.mxu0 0.0
      %1504 = vmatprep.subr.mxu0 0.0
      %1505 = vmatpush1.msra.mxu0 0.0
      %1506 = vmatprep.subr.mxu0 0.0
      %1507 = vmatpush1.msra.mxu0 0.0
      %1508 = vmatprep.subr.mxu0 0.0
      %1509 = vmatpush1.msra.mxu0 0.0
      %1510 = vmatprep.mubr.f32.mxu0 0.0
      %v1511 = vand.u32 %v349, 4294901760
      %1512 = vmatmul.mubr.f32.gmra.mrb[0].mxu0 %v1511
      %v1513 = vpop.f32.mrb[0].mxu0
      %v1514 = vadd.f32 %v1403, %v1513
      %v1515 = vpop.f32.mrb[0].mxu0
      %v1516 = vadd.f32 %v1405, %v1515
      %1517 = vmatprep.mubr.f32.mxu0 0.0
      %v1518 = vand.u32 %v352, 4294901760
      %1519 = vmatmul.mubr.f32.gmra.mrb[0].mxu0 %v1518
      %v1520 = vpop.f32.mrb[0].mxu0
      %v1521 = vadd.f32 %v1412, %v1520
      %v1522 = vpop.f32.mrb[0].mxu0
      %v1523 = vadd.f32 %v1414, %v1522
      %1524 = vmatprep.mubr.f32.mxu0 0.0
      %v1525 = vand.u32 %v355, 4294901760
      %1526 = vmatmul.mubr.f32.gmra.mrb[0].mxu0 %v1525
      %v1527 = vpop.f32.mrb[0].mxu0
      %v1528 = vadd.f32 %v1421, %v1527
      %v1529 = vpop.f32.mrb[0].mxu0
      %v1530 = vadd.f32 %v1423, %v1529
      %1531 = vmatprep.mubr.f32.mxu0 0.0
      %v1532 = vand.u32 %v358, 4294901760
      %1533 = vmatmul.mubr.f32.gmra.mrb[0].mxu0 %v1532
      %v1534 = vpop.f32.mrb[0].mxu0
      %v1535 = vadd.f32 %v1430, %v1534
      %v1536 = vpop.f32.mrb[0].mxu0
      %v1537 = vadd.f32 %v1432, %v1536
      %1538 = vdwg.mxu0
      %v1539 = vand.u32 %v318, 4294901760
      %1540 = vmatprep.subr.mxu0 %v1539
      %v1541 = vand.u32 %v317, 4294901760
      %1542 = vmatpush1.msra.mxu0 %v1541
      %v1543 = vand.u32 %v322, 4294901760
      %1544 = vmatprep.subr.mxu0 %v1543
      %v1545 = vand.u32 %v321, 4294901760
      %1546 = vmatpush1.msra.mxu0 %v1545
      %1547 = vmatprep.subr.mxu0 0.0
      %1548 = vmatpush1.msra.mxu0 0.0
      %1549 = vmatprep.subr.mxu0 0.0
      %1550 = vmatpush1.msra.mxu0 0.0
      %1551 = vmatprep.subr.mxu0 0.0
      %1552 = vmatpush1.msra.mxu0 0.0
      %1553 = vmatprep.subr.mxu0 0.0
      %1554 = vmatpush1.msra.mxu0 0.0
      %1555 = vmatprep.subr.mxu0 0.0
      %1556 = vmatpush1.msra.mxu0 0.0
      %1557 = vmatprep.subr.mxu0 0.0
      %1558 = vmatpush1.msra.mxu0 0.0
      %1559 = vmatprep.subr.mxu0 0.0
      %1560 = vmatpush1.msra.mxu0 0.0
      %1561 = vmatprep.subr.mxu0 0.0
      %1562 = vmatpush1.msra.mxu0 0.0
      %1563 = vmatprep.subr.mxu0 0.0
      %1564 = vmatpush1.msra.mxu0 0.0
      %1565 = vmatprep.subr.mxu0 0.0
      %1566 = vmatpush1.msra.mxu0 0.0
      %1567 = vmatprep.subr.mxu0 0.0
      %1568 = vmatpush1.msra.mxu0 0.0
      %1569 = vmatprep.subr.mxu0 0.0
      %1570 = vmatpush1.msra.mxu0 0.0
      %1571 = vmatprep.subr.mxu0 0.0
      %1572 = vmatpush1.msra.mxu0 0.0
      %1573 = vmatprep.subr.mxu0 0.0
      %1574 = vmatpush1.msra.mxu0 0.0
      %1575 = vmatprep.subr.mxu0 0.0
      %1576 = vmatpush1.msra.mxu0 0.0
      %1577 = vmatprep.subr.mxu0 0.0
      %1578 = vmatpush1.msra.mxu0 0.0
      %1579 = vmatprep.subr.mxu0 0.0
      %1580 = vmatpush1.msra.mxu0 0.0
      %1581 = vmatprep.subr.mxu0 0.0
      %1582 = vmatpush1.msra.mxu0 0.0
      %1583 = vmatprep.subr.mxu0 0.0
      %1584 = vmatpush1.msra.mxu0 0.0
      %1585 = vmatprep.subr.mxu0 0.0
      %1586 = vmatpush1.msra.mxu0 0.0
      %1587 = vmatprep.subr.mxu0 0.0
      %1588 = vmatpush1.msra.mxu0 0.0
      %1589 = vmatprep.subr.mxu0 0.0
      %1590 = vmatpush1.msra.mxu0 0.0
      %1591 = vmatprep.subr.mxu0 0.0
      %1592 = vmatpush1.msra.mxu0 0.0
      %1593 = vmatprep.subr.mxu0 0.0
      %1594 = vmatpush1.msra.mxu0 0.0
      %1595 = vmatprep.subr.mxu0 0.0
      %1596 = vmatpush1.msra.mxu0 0.0
      %1597 = vmatprep.subr.mxu0 0.0
      %1598 = vmatpush1.msra.mxu0 0.0
      %1599 = vmatprep.subr.mxu0 0.0
      %1600 = vmatpush1.msra.mxu0 0.0
      %1601 = vmatprep.subr.mxu0 0.0
      %1602 = vmatpush1.msra.mxu0 0.0
      %1603 = vmatprep.subr.mxu0 0.0
      %1604 = vmatpush1.msra.mxu0 0.0
      %1605 = vmatprep.subr.mxu0 0.0
      %1606 = vmatpush1.msra.mxu0 0.0
      %1607 = vmatprep.mubr.f32.mxu0 0.0
      %v1608 = vand.u32 %v349, 4294901760
      %1609 = vmatmul.mubr.f32.gmra.mrb[0].mxu0 %v1608
      %v1610 = vpop.f32.mrb[0].mxu0
      %v1611 = vadd.f32 %v1514, %v1610
      %v1612 = vpop.f32.mrb[0].mxu0
      %v1613 = vadd.f32 %v1516, %v1612
      %1614 = vmatprep.mubr.f32.mxu0 0.0
      %v1615 = vand.u32 %v352, 4294901760
      %1616 = vmatmul.mubr.f32.gmra.mrb[0].mxu0 %v1615
      %v1617 = vpop.f32.mrb[0].mxu0
      %v1618 = vadd.f32 %v1521, %v1617
      %v1619 = vpop.f32.mrb[0].mxu0
      %v1620 = vadd.f32 %v1523, %v1619
      %1621 = vmatprep.mubr.f32.mxu0 0.0
      %v1622 = vand.u32 %v355, 4294901760
      %1623 = vmatmul.mubr.f32.gmra.mrb[0].mxu0 %v1622
      %v1624 = vpop.f32.mrb[0].mxu0
      %v1625 = vadd.f32 %v1528, %v1624
      %v1626 = vpop.f32.mrb[0].mxu0
      %v1627 = vadd.f32 %v1530, %v1626
      %1628 = vmatprep.mubr.f32.mxu0 0.0
      %v1629 = vand.u32 %v358, 4294901760
      %1630 = vmatmul.mubr.f32.gmra.mrb[0].mxu0 %v1629
      %v1631 = vpop.f32.mrb[0].mxu0
      %v1632 = vadd.f32 %v1535, %v1631
      %v1633 = vpop.f32.mrb[0].mxu0
      %v1634 = vadd.f32 %v1537, %v1633
      %1635 = vdwg.mxu0
      %v1640 = vcombine.low %v973, %v975
      %v1641 = vcombine.low %v1611, %v1613
      %v1643 = vunpack.c.l.s4 1983009808
      %v1644 = vunpack.c.0.s8 %v1643
      %v1645 = vlaneseq
      %v1646 = vshrl.u32 %v1645, 7
      %v1647 = vsub.s32 %v1644, %v1646
      %v1648 = vrot.slane %v1640, %v1647
      %v1650 = vunpack.c.l.s4 1983009808
      %v1651 = vunpack.c.0.s8 %v1650
      %v1652 = vlaneseq
      %v1653 = vshrl.u32 %v1652, 7
      %v1654 = vsub.s32 %v1651, %v1653
      %v1655 = vrot.slane %v1641, %v1654
      %v1656 = vcombine.low %v1648, %v1655
      %1658 = vst [vmem:[%s289] sm:$0xff] %v1656
      %v1663 = vcombine.low %v980, %v982
      %v1664 = vcombine.low %v1618, %v1620
      %v1666 = vunpack.c.l.s4 1983009808
      %v1667 = vunpack.c.0.s8 %v1666
      %v1668 = vlaneseq
      %v1669 = vshrl.u32 %v1668, 7
      %v1670 = vsub.s32 %v1667, %v1669
      %v1671 = vrot.slane %v1663, %v1670
      %v1673 = vunpack.c.l.s4 1983009808
      %v1674 = vunpack.c.0.s8 %v1673
      %v1675 = vlaneseq
      %v1676 = vshrl.u32 %v1675, 7
      %v1677 = vsub.s32 %v1674, %v1676
      %v1678 = vrot.slane %v1664, %v1677
      %v1679 = vcombine.low %v1671, %v1678
      %1681 = vst [vmem:[%s299] sm:$0xff] %v1679
      %1682 = vst [vmem:[%s309] sm:$0xff] %v987
      %1683 = vst [vmem:[%s309 + $0x8] sm:$0xff] %v989
      %1684 = vst [vmem:[%s309 + $0x10] sm:$0xff] %v1625
      %1685 = vst [vmem:[%s309 + $0x18] sm:$0xff] %v1627
      %1686 = vst [vmem:[%s309 + $0x20] sm:$0xff] %v994
      %1687 = vst [vmem:[%s309 + $0x28] sm:$0xff] %v996
      %1688 = vst [vmem:[%s309 + $0x30] sm:$0xff] %v1632
      %1689 = vst [vmem:[%s309 + $0x38] sm:$0xff] %v1634
      %s1690 = smul.u32 4, %s22
      %p1691 = scmp.lt.s32.totalorder %s21, 1
      %s1692 = scalar_select %p1691, %s21, 1
      %p1693 = scmp.lt.s32.totalorder %s1690, 3
      %s1694 = scalar_select %p1693, %s1690, 3
      %s1695 = smul.addr %s1692, 4
      %s1696 = sadd.s32 %s1694, %s1695
      %s1697 = smul.addr %s1696, 2
      %s1698 = scalar_lea.vmem %s3, %s1697
      %s1699 = smul.u32 4, %s22
      %p1700 = scmp.lt.s32.totalorder %s21, 1
      %s1701 = scalar_select %p1700, %s21, 1
      %p1702 = scmp.lt.s32.totalorder %s1699, 3
      %s1703 = scalar_select %p1702, %s1699, 3
      %s1704 = smul.addr %s1701, 4
      %s1705 = sadd.s32 %s1703, %s1704
      %s1706 = smul.addr %s1705, 2
      %s1707 = scalar_lea.vmem %s4, %s1706
      %s1708 = smul.u32 4, %s22
      %p1709 = scmp.lt.s32.totalorder %s21, 1
      %s1710 = scalar_select %p1709, %s21, 1
      %p1711 = scmp.lt.s32.totalorder %s1708, 3
      %s1712 = scalar_select %p1711, %s1708, 3
      %s1713 = smul.addr %s1710, 8
      %s1714 = sadd.s32 %s1712, %s1713
      %s1715 = smul.addr %s1714, 8
      %s1716 = scalar_lea.vmem %s5, %s1715
      // Predicated region
      $region33: #{sia_forward.5} parent=31 // pred_check
        %p1717 = pneg %p119
      $region34: #{sia_forward.5} parent=31 // pred_check_branch
        %1719 = sbr.rel (%p1717) target = $region36
      $region35: #{sia_forward.5} parent=31 // pred_region
        %s1720 = smul.u32 4, %s22
      $region36: #{sia_forward.5} parent=31 // pred_fallthru
        _
      // Predicated region
      $region37: #{sia_forward.5} parent=31 // pred_check
        %p1721 = pneg %p147
      $region38: #{sia_forward.5} parent=31 // pred_check_branch
        %1723 = sbr.rel (%p1721) target = $region40
      $region39: #{sia_forward.5} parent=31 // pred_region
        %s1724 = smul.u32 4, %s22
      $region40: #{sia_forward.5} parent=31 // pred_fallthru
        _
      // Predicated region
      $region41: #{sia_forward.5} parent=31 // pred_check
        %p1725 = pneg %p175
      $region42: #{sia_forward.5} parent=31 // pred_check_branch
        %1727 = sbr.rel (%p1725) target = $region44
      $region43: #{sia_forward.5} parent=31 // pred_region
        %s1728 = smul.u32 4, %s22
      $region44: #{sia_forward.5} parent=31 // pred_fallthru
        _
    $region32: #{sia_forward.5} parent=5 // pred_fallthru
      _
    %p1729 = scmp.le.s32.totalorder 2, %s12
    // Predicated region
    $region45: #{sia_forward.5} parent=5 // pred_check
      %p1730 = pneg %p1729
    $region46: #{sia_forward.5} parent=5 // pred_check_branch
      %1732 = sbr.rel (%p1730) target = $region48
    $region47: #{sia_forward.5} parent=5 // pred_region
      %s1733 = ssub.s32 %s12, 2
      // Predicated region
      $region49: #{sia_forward.5} parent=47 // pred_check
        %p1734 = pneg %p125
      $region50: #{sia_forward.5} parent=47 // pred_check_branch
        %1736 = sbr.rel (%p1734) target = $region52
      $region51: #{sia_forward.5} parent=47 // pred_region
        %s1737 = smul.u32 4, %s24
        %p1738 = scmp.lt.s32.totalorder %s23, 1
        %s1739 = scalar_select %p1738, %s23, 1
        %p1740 = scmp.lt.s32.totalorder %s1737, 3
        %s1741 = scalar_select %p1740, %s1737, 3
        %s1742 = smul.addr %s1739, 4
        %s1743 = sadd.s32 %s1741, %s1742
        %s1744 = smul.addr %s1743, 2
        %s1745 = scalar_lea.vmem %s3, %s1744
      $region52: #{sia_forward.5} parent=47 // pred_fallthru
        _
      // Predicated region
      $region53: #{sia_forward.5} parent=47 // pred_check
        %p1746 = pneg %p153
      $region54: #{sia_forward.5} parent=47 // pred_check_branch
        %1748 = sbr.rel (%p1746) target = $region56
      $region55: #{sia_forward.5} parent=47 // pred_region
        %s1749 = smul.u32 4, %s24
        %p1750 = scmp.lt.s32.totalorder %s23, 1
        %s1751 = scalar_select %p1750, %s23, 1
        %p1752 = scmp.lt.s32.totalorder %s1749, 3
        %s1753 = scalar_select %p1752, %s1749, 3
        %s1754 = smul.addr %s1751, 4
        %s1755 = sadd.s32 %s1753, %s1754
        %s1756 = smul.addr %s1755, 2
        %s1757 = scalar_lea.vmem %s4, %s1756
      $region56: #{sia_forward.5} parent=47 // pred_fallthru
        _
      // Predicated region
      $region57: #{sia_forward.5} parent=47 // pred_check
        %p1758 = pneg %p181
      $region58: #{sia_forward.5} parent=47 // pred_check_branch
        %1760 = sbr.rel (%p1758) target = $region60
      $region59: #{sia_forward.5} parent=47 // pred_region
        %s1761 = smul.u32 4, %s24
        %p1762 = scmp.lt.s32.totalorder %s23, 1
        %s1763 = scalar_select %p1762, %s23, 1
        %p1764 = scmp.lt.s32.totalorder %s1761, 3
        %s1765 = scalar_select %p1764, %s1761, 3
        %s1766 = smul.addr %s1763, 8
        %s1767 = sadd.s32 %s1765, %s1766
        %s1768 = smul.addr %s1767, 8
        %s1769 = scalar_lea.vmem %s5, %s1768
      $region60: #{sia_forward.5} parent=47 // pred_fallthru
        _
    $region48: #{sia_forward.5} parent=5 // pred_fallthru
      _
  $region6: #{sia_forward.5} parent=0 // loop_footer
    %s16 = sadd.s32 1, %s12
  $region7: #{sia_forward.5} parent=0 // loop_footer_branch
    %11 = sbr.rel target = $region3
  $region8: #{sia_forward.5} parent=0 // loop_exit
    _

// kernel: sia_forward.8
$region0: #{sia_forward.8}
  #allocation0 [shape = 'u32[]', space=smem, size = 0x4, offset = 0x4, fixed_abs, tag = 'smem constant byte address 0x4 - core index']
  #allocation1 [shape = 'u32[144,128]{1,0:T(1,128)}', space=vmem, size = 0x12000, scoped, tag = 'internal scratch']
  %s0 = inlined_call_operand.vmem [shape: f32[1,8,2,128], index: 0, kind: input, shape index: {}]
  %s1 = inlined_call_operand.vmem [shape: f32[8,1,2,128], index: 1, kind: input, shape index: {}]
  %s2 = inlined_call_operand.vmem [shape: f32[8,1,16,128], index: 2, kind: input, shape index: {}]
  %s3 = inlined_call_operand.vmem [shape: f32[8,16,128], index: 3, kind: output, shape index: {0}]
  %s4 = inlined_call_operand.vmem [shape: f32[8,1,128], index: 4, kind: output, shape index: {1}]
  %s5 = inlined_call_operand.vmem [shape: f32[8,1,128], index: 5, kind: output, shape index: {2}]
  %6 = xla_tuple %s3, %s4, %s5
  %s7 = sld [smem:[#allocation0]]
  $region38: #{sia_forward.8} parent=0
    _
  %s9 = ssub.s32 1, %s7
  %s10 = scalar_select 0, %s9, %s7
  // Predicated region
  $region2: #{sia_forward.8} parent=0 // pred_check
    _
  $region3: #{sia_forward.8} parent=0 // pred_check_branch
    %12 = sbr.rel (0) target = $region5
  $region4: #{sia_forward.8} parent=0 // pred_region
    _
  $region5: #{sia_forward.8} parent=0 // pred_fallthru
    _
  // Predicated region
  $region6: #{sia_forward.8} parent=0 // pred_check
    _
  $region7: #{sia_forward.8} parent=0 // pred_check_branch
    %14 = sbr.rel (0) target = $region9
  $region8: #{sia_forward.8} parent=0 // pred_region
    _
  $region9: #{sia_forward.8} parent=0 // pred_fallthru
    _
  // Predicated region
  $region10: #{sia_forward.8} parent=0 // pred_check
    _
  $region11: #{sia_forward.8} parent=0 // pred_check_branch
    %16 = sbr.rel (0) target = $region13
  $region12: #{sia_forward.8} parent=0 // pred_region
    _
  $region13: #{sia_forward.8} parent=0 // pred_fallthru
    _
  %v17 = vld [vmem:[%s0] sm:$0x3]
  %v18 = vld [vmem:[%s0 + $0x2] sm:$0x3]
  %v19 = vld [vmem:[%s0 + $0x4] sm:$0x3]
  %v20 = vld [vmem:[%s0 + $0x6] sm:$0x3]
  %v21 = vld [vmem:[%s0 + $0x8] sm:$0x3]
  %v22 = vld [vmem:[%s0 + $0xa] sm:$0x3]
  %v23 = vld [vmem:[%s0 + $0xc] sm:$0x3]
  %v24 = vld [vmem:[%s0 + $0xe] sm:$0x3]
  %v25 = vld [vmem:[%s1] sm:$0x3]
  %v26 = vld [vmem:[%s1 + $0x2] sm:$0x3]
  %v27 = vld [vmem:[%s1 + $0x4] sm:$0x3]
  %v28 = vld [vmem:[%s1 + $0x6] sm:$0x3]
  %v29 = vld [vmem:[%s1 + $0x8] sm:$0x3]
  %v30 = vld [vmem:[%s1 + $0xa] sm:$0x3]
  %v31 = vld [vmem:[%s1 + $0xc] sm:$0x3]
  %v32 = vld [vmem:[%s1 + $0xe] sm:$0x3]
  %v33 = vld [vmem:[%s2] sm:$0xff]
  %v34 = vld [vmem:[%s2 + $0x8] sm:$0xff]
  %v35 = vld [vmem:[%s2 + $0x10] sm:$0xff]
  %v36 = vld [vmem:[%s2 + $0x18] sm:$0xff]
  %v37 = vld [vmem:[%s2 + $0x20] sm:$0xff]
  %v38 = vld [vmem:[%s2 + $0x28] sm:$0xff]
  %v39 = vld [vmem:[%s2 + $0x30] sm:$0xff]
  %v40 = vld [vmem:[%s2 + $0x38] sm:$0xff]
  %v41 = vld [vmem:[%s2 + $0x40] sm:$0xff]
  %v42 = vld [vmem:[%s2 + $0x48] sm:$0xff]
  %v43 = vld [vmem:[%s2 + $0x50] sm:$0xff]
  %v44 = vld [vmem:[%s2 + $0x58] sm:$0xff]
  %v45 = vld [vmem:[%s2 + $0x60] sm:$0xff]
  %v46 = vld [vmem:[%s2 + $0x68] sm:$0xff]
  %v47 = vld [vmem:[%s2 + $0x70] sm:$0xff]
  %v48 = vld [vmem:[%s2 + $0x78] sm:$0xff]
  %v49 = vmul.f32 %v25, %v17
  %v50 = vmul.f32 %v25, %v18
  %v51 = vmul.f32 %v25, %v19
  %v52 = vmul.f32 %v25, %v20
  %v53 = vmul.f32 %v25, %v21
  %v54 = vmul.f32 %v25, %v22
  %v55 = vmul.f32 %v25, %v23
  %v56 = vmul.f32 %v25, %v24
  %v57 = vmul.f32 %v26, %v17
  %v58 = vmul.f32 %v26, %v18
  %v59 = vmul.f32 %v26, %v19
  %v60 = vmul.f32 %v26, %v20
  %v61 = vmul.f32 %v26, %v21
  %v62 = vmul.f32 %v26, %v22
  %v63 = vmul.f32 %v26, %v23
  %v64 = vmul.f32 %v26, %v24
  %v65 = vmul.f32 %v27, %v17
  %v66 = vmul.f32 %v27, %v18
  %v67 = vmul.f32 %v27, %v19
  %v68 = vmul.f32 %v27, %v20
  %v69 = vmul.f32 %v27, %v21
  %v70 = vmul.f32 %v27, %v22
  %v71 = vmul.f32 %v27, %v23
  %v72 = vmul.f32 %v27, %v24
  %v73 = vmul.f32 %v28, %v17
  %v74 = vmul.f32 %v28, %v18
  %v75 = vmul.f32 %v28, %v19
  %v76 = vmul.f32 %v28, %v20
  %v77 = vmul.f32 %v28, %v21
  %v78 = vmul.f32 %v28, %v22
  %v79 = vmul.f32 %v28, %v23
  %v80 = vmul.f32 %v28, %v24
  %v81 = vmul.f32 %v29, %v17
  %v82 = vmul.f32 %v29, %v18
  %v83 = vmul.f32 %v29, %v19
  %v84 = vmul.f32 %v29, %v20
  %v85 = vmul.f32 %v29, %v21
  %v86 = vmul.f32 %v29, %v22
  %v87 = vmul.f32 %v29, %v23
  %v88 = vmul.f32 %v29, %v24
  %v89 = vmul.f32 %v30, %v17
  %v90 = vmul.f32 %v30, %v18
  %v91 = vmul.f32 %v30, %v19
  %v92 = vmul.f32 %v30, %v20
  %v93 = vmul.f32 %v30, %v21
  %v94 = vmul.f32 %v30, %v22
  %v95 = vmul.f32 %v30, %v23
  %v96 = vmul.f32 %v30, %v24
  %v97 = vmul.f32 %v31, %v17
  %v98 = vmul.f32 %v31, %v18
  %v99 = vmul.f32 %v31, %v19
  %v100 = vmul.f32 %v31, %v20
  %v101 = vmul.f32 %v31, %v21
  %v102 = vmul.f32 %v31, %v22
  %v103 = vmul.f32 %v31, %v23
  %v104 = vmul.f32 %v31, %v24
  %v105 = vmul.f32 %v32, %v17
  %v106 = vmul.f32 %v32, %v18
  %v107 = vmul.f32 %v32, %v19
  %v108 = vmul.f32 %v32, %v20
  %v109 = vmul.f32 %v32, %v21
  %v110 = vmul.f32 %v32, %v22
  %v111 = vmul.f32 %v32, %v23
  %v112 = vmul.f32 %v32, %v24
  %vm113 = vcmask 1041408
  %v114 = vsel %vm113, %v49, 0.0
  %v115 = vrot.slane %v114, 4
  %v116 = vadd.f32 %v114, %v115
  %v117 = vrot.slane %v116, 2
  %v118 = vadd.f32 %v116, %v117
  %v119 = vrot.slane %v118, 1
  %v120 = vadd.f32 %v118, %v119
  %v121 = vsel %vm113, %v50, 0.0
  %v122 = vrot.slane %v121, 4
  %v123 = vadd.f32 %v121, %v122
  %v124 = vrot.slane %v123, 2
  %v125 = vadd.f32 %v123, %v124
  %v126 = vrot.slane %v125, 1
  %v127 = vadd.f32 %v125, %v126
  %v128 = vsel %vm113, %v51, 0.0
  %v129 = vrot.slane %v128, 4
  %v130 = vadd.f32 %v128, %v129
  %v131 = vrot.slane %v130, 2
  %v132 = vadd.f32 %v130, %v131
  %v133 = vrot.slane %v132, 1
  %v134 = vadd.f32 %v132, %v133
  %v135 = vsel %vm113, %v52, 0.0
  %v136 = vrot.slane %v135, 4
  %v137 = vadd.f32 %v135, %v136
  %v138 = vrot.slane %v137, 2
  %v139 = vadd.f32 %v137, %v138
  %v140 = vrot.slane %v139, 1
  %v141 = vadd.f32 %v139, %v140
  %v142 = vsel %vm113, %v53, 0.0
  %v143 = vrot.slane %v142, 4
  %v144 = vadd.f32 %v142, %v143
  %v145 = vrot.slane %v144, 2
  %v146 = vadd.f32 %v144, %v145
  %v147 = vrot.slane %v146, 1
  %v148 = vadd.f32 %v146, %v147
  %v149 = vsel %vm113, %v54, 0.0
  %v150 = vrot.slane %v149, 4
  %v151 = vadd.f32 %v149, %v150
  %v152 = vrot.slane %v151, 2
  %v153 = vadd.f32 %v151, %v152
  %v154 = vrot.slane %v153, 1
  %v155 = vadd.f32 %v153, %v154
  %v156 = vsel %vm113, %v55, 0.0
  %v157 = vrot.slane %v156, 4
  %v158 = vadd.f32 %v156, %v157
  %v159 = vrot.slane %v158, 2
  %v160 = vadd.f32 %v158, %v159
  %v161 = vrot.slane %v160, 1
  %v162 = vadd.f32 %v160, %v161
  %v163 = vsel %vm113, %v56, 0.0
  %v164 = vrot.slane %v163, 4
  %v165 = vadd.f32 %v163, %v164
  %v166 = vrot.slane %v165, 2
  %v167 = vadd.f32 %v165, %v166
  %v168 = vrot.slane %v167, 1
  %v169 = vadd.f32 %v167, %v168
  %v170 = vsel %vm113, %v57, 0.0
  %v171 = vrot.slane %v170, 4
  %v172 = vadd.f32 %v170, %v171
  %v173 = vrot.slane %v172, 2
  %v174 = vadd.f32 %v172, %v173
  %v175 = vrot.slane %v174, 1
  %v176 = vadd.f32 %v174, %v175
  %v177 = vsel %vm113, %v58, 0.0
  %v178 = vrot.slane %v177, 4
  %v179 = vadd.f32 %v177, %v178
  %v180 = vrot.slane %v179, 2
  %v181 = vadd.f32 %v179, %v180
  %v182 = vrot.slane %v181, 1
  %v183 = vadd.f32 %v181, %v182
  %v184 = vsel %vm113, %v59, 0.0
  %v185 = vrot.slane %v184, 4
  %v186 = vadd.f32 %v184, %v185
  %v187 = vrot.slane %v186, 2
  %v188 = vadd.f32 %v186, %v187
  %v189 = vrot.slane %v188, 1
  %v190 = vadd.f32 %v188, %v189
  %v191 = vsel %vm113, %v60, 0.0
  %v192 = vrot.slane %v191, 4
  %v193 = vadd.f32 %v191, %v192
  %v194 = vrot.slane %v193, 2
  %v195 = vadd.f32 %v193, %v194
  %v196 = vrot.slane %v195, 1
  %v197 = vadd.f32 %v195, %v196
  %v198 = vsel %vm113, %v61, 0.0
  %v199 = vrot.slane %v198, 4
  %v200 = vadd.f32 %v198, %v199
  %v201 = vrot.slane %v200, 2
  %v202 = vadd.f32 %v200, %v201
  %v203 = vrot.slane %v202, 1
  %v204 = vadd.f32 %v202, %v203
  %v205 = vsel %vm113, %v62, 0.0
  %v206 = vrot.slane %v205, 4
  %v207 = vadd.f32 %v205, %v206
  %v208 = vrot.slane %v207, 2
  %v209 = vadd.f32 %v207, %v208
  %v210 = vrot.slane %v209, 1
  %v211 = vadd.f32 %v209, %v210
  %v212 = vsel %vm113, %v63, 0.0
  %v213 = vrot.slane %v212, 4
  %v214 = vadd.f32 %v212, %v213
  %v215 = vrot.slane %v214, 2
  %v216 = vadd.f32 %v214, %v215
  %v217 = vrot.slane %v216, 1
  %v218 = vadd.f32 %v216, %v217
  %v219 = vsel %vm113, %v64, 0.0
  %v220 = vrot.slane %v219, 4
  %v221 = vadd.f32 %v219, %v220
  %v222 = vrot.slane %v221, 2
  %v223 = vadd.f32 %v221, %v222
  %v224 = vrot.slane %v223, 1
  %v225 = vadd.f32 %v223, %v224
  %v226 = vsel %vm113, %v65, 0.0
  %v227 = vrot.slane %v226, 4
  %v228 = vadd.f32 %v226, %v227
  %v229 = vrot.slane %v228, 2
  %v230 = vadd.f32 %v228, %v229
  %v231 = vrot.slane %v230, 1
  %v232 = vadd.f32 %v230, %v231
  %v233 = vsel %vm113, %v66, 0.0
  %v234 = vrot.slane %v233, 4
  %v235 = vadd.f32 %v233, %v234
  %v236 = vrot.slane %v235, 2
  %v237 = vadd.f32 %v235, %v236
  %v238 = vrot.slane %v237, 1
  %v239 = vadd.f32 %v237, %v238
  %v240 = vsel %vm113, %v67, 0.0
  %v241 = vrot.slane %v240, 4
  %v242 = vadd.f32 %v240, %v241
  %v243 = vrot.slane %v242, 2
  %v244 = vadd.f32 %v242, %v243
  %v245 = vrot.slane %v244, 1
  %v246 = vadd.f32 %v244, %v245
  %v247 = vsel %vm113, %v68, 0.0
  %v248 = vrot.slane %v247, 4
  %v249 = vadd.f32 %v247, %v248
  %v250 = vrot.slane %v249, 2
  %v251 = vadd.f32 %v249, %v250
  %v252 = vrot.slane %v251, 1
  %v253 = vadd.f32 %v251, %v252
  %v254 = vsel %vm113, %v69, 0.0
  %v255 = vrot.slane %v254, 4
  %v256 = vadd.f32 %v254, %v255
  %v257 = vrot.slane %v256, 2
  %v258 = vadd.f32 %v256, %v257
  %v259 = vrot.slane %v258, 1
  %v260 = vadd.f32 %v258, %v259
  %v261 = vsel %vm113, %v70, 0.0
  %v262 = vrot.slane %v261, 4
  %v263 = vadd.f32 %v261, %v262
  %v264 = vrot.slane %v263, 2
  %v265 = vadd.f32 %v263, %v264
  %v266 = vrot.slane %v265, 1
  %v267 = vadd.f32 %v265, %v266
  %v268 = vsel %vm113, %v71, 0.0
  %v269 = vrot.slane %v268, 4
  %v270 = vadd.f32 %v268, %v269
  %v271 = vrot.slane %v270, 2
  %v272 = vadd.f32 %v270, %v271
  %v273 = vrot.slane %v272, 1
  %v274 = vadd.f32 %v272, %v273
  %v275 = vsel %vm113, %v72, 0.0
  %v276 = vrot.slane %v275, 4
  %v277 = vadd.f32 %v275, %v276
  %v278 = vrot.slane %v277, 2
  %v279 = vadd.f32 %v277, %v278
  %v280 = vrot.slane %v279, 1
  %v281 = vadd.f32 %v279, %v280
  %v282 = vsel %vm113, %v73, 0.0
  %v283 = vrot.slane %v282, 4
  %v284 = vadd.f32 %v282, %v283
  %v285 = vrot.slane %v284, 2
  %v286 = vadd.f32 %v284, %v285
  %v287 = vrot.slane %v286, 1
  %v288 = vadd.f32 %v286, %v287
  %v289 = vsel %vm113, %v74, 0.0
  %v290 = vrot.slane %v289, 4
  %v291 = vadd.f32 %v289, %v290
  %v292 = vrot.slane %v291, 2
  %v293 = vadd.f32 %v291, %v292
  %v294 = vrot.slane %v293, 1
  %v295 = vadd.f32 %v293, %v294
  %v296 = vsel %vm113, %v75, 0.0
  %v297 = vrot.slane %v296, 4
  %v298 = vadd.f32 %v296, %v297
  %v299 = vrot.slane %v298, 2
  %v300 = vadd.f32 %v298, %v299
  %v301 = vrot.slane %v300, 1
  %v302 = vadd.f32 %v300, %v301
  %v303 = vsel %vm113, %v76, 0.0
  %v304 = vrot.slane %v303, 4
  %v305 = vadd.f32 %v303, %v304
  %v306 = vrot.slane %v305, 2
  %v307 = vadd.f32 %v305, %v306
  %v308 = vrot.slane %v307, 1
  %v309 = vadd.f32 %v307, %v308
  %v310 = vsel %vm113, %v77, 0.0
  %v311 = vrot.slane %v310, 4
  %v312 = vadd.f32 %v310, %v311
  %v313 = vrot.slane %v312, 2
  %v314 = vadd.f32 %v312, %v313
  %v315 = vrot.slane %v314, 1
  %v316 = vadd.f32 %v314, %v315
  %v317 = vsel %vm113, %v78, 0.0
  %v318 = vrot.slane %v317, 4
  %v319 = vadd.f32 %v317, %v318
  %v320 = vrot.slane %v319, 2
  %v321 = vadd.f32 %v319, %v320
  %v322 = vrot.slane %v321, 1
  %v323 = vadd.f32 %v321, %v322
  %v324 = vsel %vm113, %v79, 0.0
  %v325 = vrot.slane %v324, 4
  %v326 = vadd.f32 %v324, %v325
  %v327 = vrot.slane %v326, 2
  %v328 = vadd.f32 %v326, %v327
  %v329 = vrot.slane %v328, 1
  %v330 = vadd.f32 %v328, %v329
  %v331 = vsel %vm113, %v80, 0.0
  %v332 = vrot.slane %v331, 4
  %v333 = vadd.f32 %v331, %v332
  %v334 = vrot.slane %v333, 2
  %v335 = vadd.f32 %v333, %v334
  %v336 = vrot.slane %v335, 1
  %v337 = vadd.f32 %v335, %v336
  %v338 = vsel %vm113, %v81, 0.0
  %v339 = vrot.slane %v338, 4
  %v340 = vadd.f32 %v338, %v339
  %v341 = vrot.slane %v340, 2
  %v342 = vadd.f32 %v340, %v341
  %v343 = vrot.slane %v342, 1
  %v344 = vadd.f32 %v342, %v343
  %v345 = vsel %vm113, %v82, 0.0
  %v346 = vrot.slane %v345, 4
  %v347 = vadd.f32 %v345, %v346
  %v348 = vrot.slane %v347, 2
  %v349 = vadd.f32 %v347, %v348
  %v350 = vrot.slane %v349, 1
  %v351 = vadd.f32 %v349, %v350
  %v352 = vsel %vm113, %v83, 0.0
  %v353 = vrot.slane %v352, 4
  %v354 = vadd.f32 %v352, %v353
  %v355 = vrot.slane %v354, 2
  %v356 = vadd.f32 %v354, %v355
  %v357 = vrot.slane %v356, 1
  %v358 = vadd.f32 %v356, %v357
  %v359 = vsel %vm113, %v84, 0.0
  %v360 = vrot.slane %v359, 4
  %v361 = vadd.f32 %v359, %v360
  %v362 = vrot.slane %v361, 2
  %v363 = vadd.f32 %v361, %v362
  %v364 = vrot.slane %v363, 1
  %v365 = vadd.f32 %v363, %v364
  %v366 = vsel %vm113, %v85, 0.0
  %v367 = vrot.slane %v366, 4
  %v368 = vadd.f32 %v366, %v367
  %v369 = vrot.slane %v368, 2
  %v370 = vadd.f32 %v368, %v369
  %v371 = vrot.slane %v370, 1
  %v372 = vadd.f32 %v370, %v371
  %v373 = vsel %vm113, %v86, 0.0
  %v374 = vrot.slane %v373, 4
  %v375 = vadd.f32 %v373, %v374
  %v376 = vrot.slane %v375, 2
  %v377 = vadd.f32 %v375, %v376
  %v378 = vrot.slane %v377, 1
  %v379 = vadd.f32 %v377, %v378
  %v380 = vsel %vm113, %v87, 0.0
  %v381 = vrot.slane %v380, 4
  %v382 = vadd.f32 %v380, %v381
  %v383 = vrot.slane %v382, 2
  %v384 = vadd.f32 %v382, %v383
  %v385 = vrot.slane %v384, 1
  %v386 = vadd.f32 %v384, %v385
  %v387 = vsel %vm113, %v88, 0.0
  %v388 = vrot.slane %v387, 4
  %v389 = vadd.f32 %v387, %v388
  %v390 = vrot.slane %v389, 2
  %v391 = vadd.f32 %v389, %v390
  %v392 = vrot.slane %v391, 1
  %v393 = vadd.f32 %v391, %v392
  %v394 = vsel %vm113, %v89, 0.0
  %v395 = vrot.slane %v394, 4
  %v396 = vadd.f32 %v394, %v395
  %v397 = vrot.slane %v396, 2
  %v398 = vadd.f32 %v396, %v397
  %v399 = vrot.slane %v398, 1
  %v400 = vadd.f32 %v398, %v399
  %v401 = vsel %vm113, %v90, 0.0
  %v402 = vrot.slane %v401, 4
  %v403 = vadd.f32 %v401, %v402
  %v404 = vrot.slane %v403, 2
  %v405 = vadd.f32 %v403, %v404
  %v406 = vrot.slane %v405, 1
  %v407 = vadd.f32 %v405, %v406
  %v408 = vsel %vm113, %v91, 0.0
  %v409 = vrot.slane %v408, 4
  %v410 = vadd.f32 %v408, %v409
  %v411 = vrot.slane %v410, 2
  %v412 = vadd.f32 %v410, %v411
  %v413 = vrot.slane %v412, 1
  %v414 = vadd.f32 %v412, %v413
  %v415 = vsel %vm113, %v92, 0.0
  %v416 = vrot.slane %v415, 4
  %v417 = vadd.f32 %v415, %v416
  %v418 = vrot.slane %v417, 2
  %v419 = vadd.f32 %v417, %v418
  %v420 = vrot.slane %v419, 1
  %v421 = vadd.f32 %v419, %v420
  %v422 = vsel %vm113, %v93, 0.0
  %v423 = vrot.slane %v422, 4
  %v424 = vadd.f32 %v422, %v423
  %v425 = vrot.slane %v424, 2
  %v426 = vadd.f32 %v424, %v425
  %v427 = vrot.slane %v426, 1
  %v428 = vadd.f32 %v426, %v427
  %v429 = vsel %vm113, %v94, 0.0
  %v430 = vrot.slane %v429, 4
  %v431 = vadd.f32 %v429, %v430
  %v432 = vrot.slane %v431, 2
  %v433 = vadd.f32 %v431, %v432
  %v434 = vrot.slane %v433, 1
  %v435 = vadd.f32 %v433, %v434
  %v436 = vsel %vm113, %v95, 0.0
  %v437 = vrot.slane %v436, 4
  %v438 = vadd.f32 %v436, %v437
  %v439 = vrot.slane %v438, 2
  %v440 = vadd.f32 %v438, %v439
  %v441 = vrot.slane %v440, 1
  %v442 = vadd.f32 %v440, %v441
  %v443 = vsel %vm113, %v96, 0.0
  %v444 = vrot.slane %v443, 4
  %v445 = vadd.f32 %v443, %v444
  %v446 = vrot.slane %v445, 2
  %v447 = vadd.f32 %v445, %v446
  %v448 = vrot.slane %v447, 1
  %v449 = vadd.f32 %v447, %v448
  %v450 = vsel %vm113, %v97, 0.0
  %v451 = vrot.slane %v450, 4
  %v452 = vadd.f32 %v450, %v451
  %v453 = vrot.slane %v452, 2
  %v454 = vadd.f32 %v452, %v453
  %v455 = vrot.slane %v454, 1
  %v456 = vadd.f32 %v454, %v455
  %v457 = vsel %vm113, %v98, 0.0
  %v458 = vrot.slane %v457, 4
  %v459 = vadd.f32 %v457, %v458
  %v460 = vrot.slane %v459, 2
  %v461 = vadd.f32 %v459, %v460
  %v462 = vrot.slane %v461, 1
  %v463 = vadd.f32 %v461, %v462
  %v464 = vsel %vm113, %v99, 0.0
  %v465 = vrot.slane %v464, 4
  %v466 = vadd.f32 %v464, %v465
  %v467 = vrot.slane %v466, 2
  %v468 = vadd.f32 %v466, %v467
  %v469 = vrot.slane %v468, 1
  %v470 = vadd.f32 %v468, %v469
  %v471 = vsel %vm113, %v100, 0.0
  %v472 = vrot.slane %v471, 4
  %v473 = vadd.f32 %v471, %v472
  %v474 = vrot.slane %v473, 2
  %v475 = vadd.f32 %v473, %v474
  %v476 = vrot.slane %v475, 1
  %v477 = vadd.f32 %v475, %v476
  %v478 = vsel %vm113, %v101, 0.0
  %v479 = vrot.slane %v478, 4
  %v480 = vadd.f32 %v478, %v479
  %v481 = vrot.slane %v480, 2
  %v482 = vadd.f32 %v480, %v481
  %v483 = vrot.slane %v482, 1
  %v484 = vadd.f32 %v482, %v483
  %v485 = vsel %vm113, %v102, 0.0
  %v486 = vrot.slane %v485, 4
  %v487 = vadd.f32 %v485, %v486
  %v488 = vrot.slane %v487, 2
  %v489 = vadd.f32 %v487, %v488
  %v490 = vrot.slane %v489, 1
  %v491 = vadd.f32 %v489, %v490
  %v492 = vsel %vm113, %v103, 0.0
  %v493 = vrot.slane %v492, 4
  %v494 = vadd.f32 %v492, %v493
  %v495 = vrot.slane %v494, 2
  %v496 = vadd.f32 %v494, %v495
  %v497 = vrot.slane %v496, 1
  %v498 = vadd.f32 %v496, %v497
  %v499 = vsel %vm113, %v104, 0.0
  %v500 = vrot.slane %v499, 4
  %v501 = vadd.f32 %v499, %v500
  %v502 = vrot.slane %v501, 2
  %v503 = vadd.f32 %v501, %v502
  %v504 = vrot.slane %v503, 1
  %v505 = vadd.f32 %v503, %v504
  %v506 = vsel %vm113, %v105, 0.0
  %v507 = vrot.slane %v506, 4
  %v508 = vadd.f32 %v506, %v507
  %v509 = vrot.slane %v508, 2
  %v510 = vadd.f32 %v508, %v509
  %v511 = vrot.slane %v510, 1
  %v512 = vadd.f32 %v510, %v511
  %v513 = vsel %vm113, %v106, 0.0
  %v514 = vrot.slane %v513, 4
  %v515 = vadd.f32 %v513, %v514
  %v516 = vrot.slane %v515, 2
  %v517 = vadd.f32 %v515, %v516
  %v518 = vrot.slane %v517, 1
  %v519 = vadd.f32 %v517, %v518
  %v520 = vsel %vm113, %v107, 0.0
  %v521 = vrot.slane %v520, 4
  %v522 = vadd.f32 %v520, %v521
  %v523 = vrot.slane %v522, 2
  %v524 = vadd.f32 %v522, %v523
  %v525 = vrot.slane %v524, 1
  %v526 = vadd.f32 %v524, %v525
  %v527 = vsel %vm113, %v108, 0.0
  %v528 = vrot.slane %v527, 4
  %v529 = vadd.f32 %v527, %v528
  %v530 = vrot.slane %v529, 2
  %v531 = vadd.f32 %v529, %v530
  %v532 = vrot.slane %v531, 1
  %v533 = vadd.f32 %v531, %v532
  %v534 = vsel %vm113, %v109, 0.0
  %v535 = vrot.slane %v534, 4
  %v536 = vadd.f32 %v534, %v535
  %v537 = vrot.slane %v536, 2
  %v538 = vadd.f32 %v536, %v537
  %v539 = vrot.slane %v538, 1
  %v540 = vadd.f32 %v538, %v539
  %v541 = vsel %vm113, %v110, 0.0
  %v542 = vrot.slane %v541, 4
  %v543 = vadd.f32 %v541, %v542
  %v544 = vrot.slane %v543, 2
  %v545 = vadd.f32 %v543, %v544
  %v546 = vrot.slane %v545, 1
  %v547 = vadd.f32 %v545, %v546
  %v548 = vsel %vm113, %v111, 0.0
  %v549 = vrot.slane %v548, 4
  %v550 = vadd.f32 %v548, %v549
  %v551 = vrot.slane %v550, 2
  %v552 = vadd.f32 %v550, %v551
  %v553 = vrot.slane %v552, 1
  %v554 = vadd.f32 %v552, %v553
  %v555 = vsel %vm113, %v112, 0.0
  %v556 = vrot.slane %v555, 4
  %v557 = vadd.f32 %v555, %v556
  %v558 = vrot.slane %v557, 2
  %v559 = vadd.f32 %v557, %v558
  %v560 = vrot.slane %v559, 1
  %v561 = vadd.f32 %v559, %v560
  %v562 = vadd.f32 %v120, -1e+30
  %v563 = vadd.f32 %v127, 0.0
  %v564 = vadd.f32 %v134, 0.0
  %v565 = vadd.f32 %v141, 0.0
  %v566 = vadd.f32 %v148, 0.0
  %v567 = vadd.f32 %v155, 0.0
  %v568 = vadd.f32 %v162, 0.0
  %v569 = vadd.f32 %v169, 0.0
  %v570 = vadd.f32 %v176, 0.0
  %v571 = vadd.f32 %v183, -1e+30
  %v572 = vadd.f32 %v190, 0.0
  %v573 = vadd.f32 %v197, 0.0
  %v574 = vadd.f32 %v204, 0.0
  %v575 = vadd.f32 %v211, 0.0
  %v576 = vadd.f32 %v218, 0.0
  %v577 = vadd.f32 %v225, 0.0
  %v578 = vadd.f32 %v232, 0.0
  %v579 = vadd.f32 %v239, 0.0
  %v580 = vadd.f32 %v246, -1e+30
  %v581 = vadd.f32 %v253, 0.0
  %v582 = vadd.f32 %v260, 0.0
  %v583 = vadd.f32 %v267, 0.0
  %v584 = vadd.f32 %v274, 0.0
  %v585 = vadd.f32 %v281, 0.0
  %v586 = vadd.f32 %v288, 0.0
  %v587 = vadd.f32 %v295, 0.0
  %v588 = vadd.f32 %v302, 0.0
  %v589 = vadd.f32 %v309, -1e+30
  %v590 = vadd.f32 %v316, 0.0
  %v591 = vadd.f32 %v323, 0.0
  %v592 = vadd.f32 %v330, 0.0
  %v593 = vadd.f32 %v337, 0.0
  %v594 = vadd.f32 %v344, 0.0
  %v595 = vadd.f32 %v351, 0.0
  %v596 = vadd.f32 %v358, 0.0
  %v597 = vadd.f32 %v365, 0.0
  %v598 = vadd.f32 %v372, -1e+30
  %v599 = vadd.f32 %v379, 0.0
  %v600 = vadd.f32 %v386, 0.0
  %v601 = vadd.f32 %v393, 0.0
  %v602 = vadd.f32 %v400, 0.0
  %v603 = vadd.f32 %v407, 0.0
  %v604 = vadd.f32 %v414, 0.0
  %v605 = vadd.f32 %v421, 0.0
  %v606 = vadd.f32 %v428, 0.0
  %v607 = vadd.f32 %v435, -1e+30
  %v608 = vadd.f32 %v442, 0.0
  %v609 = vadd.f32 %v449, 0.0
  %v610 = vadd.f32 %v456, 0.0
  %v611 = vadd.f32 %v463, 0.0
  %v612 = vadd.f32 %v470, 0.0
  %v613 = vadd.f32 %v477, 0.0
  %v614 = vadd.f32 %v484, 0.0
  %v615 = vadd.f32 %v491, 0.0
  %v616 = vadd.f32 %v498, -1e+30
  %v617 = vadd.f32 %v505, 0.0
  %v618 = vadd.f32 %v512, 0.0
  %v619 = vadd.f32 %v519, 0.0
  %v620 = vadd.f32 %v526, 0.0
  %v621 = vadd.f32 %v533, 0.0
  %v622 = vadd.f32 %v540, 0.0
  %v623 = vadd.f32 %v547, 0.0
  %v624 = vadd.f32 %v554, 0.0
  %v625 = vadd.f32 %v561, -1e+30
  %v626 = vmax.f32 %v562, %v570
  %v627 = vmax.f32 %v626, %v578
  %v628 = vmax.f32 %v627, %v586
  %v629 = vmax.f32 %v628, %v594
  %v630 = vmax.f32 %v629, %v602
  %v631 = vmax.f32 %v630, %v610
  %v632 = vmax.f32 %v631, %v618
  %v633 = vmax.f32 %v563, %v571
  %v634 = vmax.f32 %v633, %v579
  %v635 = vmax.f32 %v634, %v587
  %v636 = vmax.f32 %v635, %v595
  %v637 = vmax.f32 %v636, %v603
  %v638 = vmax.f32 %v637, %v611
  %v639 = vmax.f32 %v638, %v619
  %v640 = vmax.f32 %v564, %v572
  %v641 = vmax.f32 %v640, %v580
  %v642 = vmax.f32 %v641, %v588
  %v643 = vmax.f32 %v642, %v596
  %v644 = vmax.f32 %v643, %v604
  %v645 = vmax.f32 %v644, %v612
  %v646 = vmax.f32 %v645, %v620
  %v647 = vmax.f32 %v565, %v573
  %v648 = vmax.f32 %v647, %v581
  %v649 = vmax.f32 %v648, %v589
  %v650 = vmax.f32 %v649, %v597
  %v651 = vmax.f32 %v650, %v605
  %v652 = vmax.f32 %v651, %v613
  %v653 = vmax.f32 %v652, %v621
  %v654 = vmax.f32 %v566, %v574
  %v655 = vmax.f32 %v654, %v582
  %v656 = vmax.f32 %v655, %v590
  %v657 = vmax.f32 %v656, %v598
  %v658 = vmax.f32 %v657, %v606
  %v659 = vmax.f32 %v658, %v614
  %v660 = vmax.f32 %v659, %v622
  %v661 = vmax.f32 %v567, %v575
  %v662 = vmax.f32 %v661, %v583
  %v663 = vmax.f32 %v662, %v591
  %v664 = vmax.f32 %v663, %v599
  %v665 = vmax.f32 %v664, %v607
  %v666 = vmax.f32 %v665, %v615
  %v667 = vmax.f32 %v666, %v623
  %v668 = vmax.f32 %v568, %v576
  %v669 = vmax.f32 %v668, %v584
  %v670 = vmax.f32 %v669, %v592
  %v671 = vmax.f32 %v670, %v600
  %v672 = vmax.f32 %v671, %v608
  %v673 = vmax.f32 %v672, %v616
  %v674 = vmax.f32 %v673, %v624
  %v675 = vmax.f32 %v569, %v577
  %v676 = vmax.f32 %v675, %v585
  %v677 = vmax.f32 %v676, %v593
  %v678 = vmax.f32 %v677, %v601
  %v679 = vmax.f32 %v678, %v609
  %v680 = vmax.f32 %v679, %v617
  %v681 = vmax.f32 %v680, %v625
  %v682 = vsub.f32 %v562, %v632
  %v683 = vsub.f32 %v563, %v639
  %v684 = vsub.f32 %v564, %v646
  %v685 = vsub.f32 %v565, %v653
  %v686 = vsub.f32 %v566, %v660
  %v687 = vsub.f32 %v567, %v667
  %v688 = vsub.f32 %v568, %v674
  %v689 = vsub.f32 %v569, %v681
  %v690 = vsub.f32 %v570, %v632
  %v691 = vsub.f32 %v571, %v639
  %v692 = vsub.f32 %v572, %v646
  %v693 = vsub.f32 %v573, %v653
  %v694 = vsub.f32 %v574, %v660
  %v695 = vsub.f32 %v575, %v667
  %v696 = vsub.f32 %v576, %v674
  %v697 = vsub.f32 %v577, %v681
  %v698 = vsub.f32 %v578, %v632
  %v699 = vsub.f32 %v579, %v639
  %v700 = vsub.f32 %v580, %v646
  %v701 = vsub.f32 %v581, %v653
  %v702 = vsub.f32 %v582, %v660
  %v703 = vsub.f32 %v583, %v667
  %v704 = vsub.f32 %v584, %v674
  %v705 = vsub.f32 %v585, %v681
  %v706 = vsub.f32 %v586, %v632
  %v707 = vsub.f32 %v587, %v639
  %v708 = vsub.f32 %v588, %v646
  %v709 = vsub.f32 %v589, %v653
  %v710 = vsub.f32 %v590, %v660
  %v711 = vsub.f32 %v591, %v667
  %v712 = vsub.f32 %v592, %v674
  %v713 = vsub.f32 %v593, %v681
  %v714 = vsub.f32 %v594, %v632
  %v715 = vsub.f32 %v595, %v639
  %v716 = vsub.f32 %v596, %v646
  %v717 = vsub.f32 %v597, %v653
  %v718 = vsub.f32 %v598, %v660
  %v719 = vsub.f32 %v599, %v667
  %v720 = vsub.f32 %v600, %v674
  %v721 = vsub.f32 %v601, %v681
  %v722 = vsub.f32 %v602, %v632
  %v723 = vsub.f32 %v603, %v639
  %v724 = vsub.f32 %v604, %v646
  %v725 = vsub.f32 %v605, %v653
  %v726 = vsub.f32 %v606, %v660
  %v727 = vsub.f32 %v607, %v667
  %v728 = vsub.f32 %v608, %v674
  %v729 = vsub.f32 %v609, %v681
  %v730 = vsub.f32 %v610, %v632
  %v731 = vsub.f32 %v611, %v639
  %v732 = vsub.f32 %v612, %v646
  %v733 = vsub.f32 %v613, %v653
  %v734 = vsub.f32 %v614, %v660
  %v735 = vsub.f32 %v615, %v667
  %v736 = vsub.f32 %v616, %v674
  %v737 = vsub.f32 %v617, %v681
  %v738 = vsub.f32 %v618, %v632
  %v739 = vsub.f32 %v619, %v639
  %v740 = vsub.f32 %v620, %v646
  %v741 = vsub.f32 %v621, %v653
  %v742 = vsub.f32 %v622, %v660
  %v743 = vsub.f32 %v623, %v667
  %v744 = vsub.f32 %v624, %v674
  %v745 = vsub.f32 %v625, %v681
  %v746 = vmul.f32 %v682, 1.442695
  %v747 = vpow.pop %v746
  %v748 = vmul.f32 %v683, 1.442695
  %v749 = vpow.pop %v748
  %v750 = vmul.f32 %v684, 1.442695
  %v751 = vpow.pop %v750
  %v752 = vmul.f32 %v685, 1.442695
  %v753 = vpow.pop %v752
  %v754 = vmul.f32 %v686, 1.442695
  %v755 = vpow.pop %v754
  %v756 = vmul.f32 %v687, 1.442695
  %v757 = vpow.pop %v756
  %v758 = vmul.f32 %v688, 1.442695
  %v759 = vpow.pop %v758
  %v760 = vmul.f32 %v689, 1.442695
  %v761 = vpow.pop %v760
  %v762 = vmul.f32 %v690, 1.442695
  %v763 = vpow.pop %v762
  %v764 = vmul.f32 %v691, 1.442695
  %v765 = vpow.pop %v764
  %v766 = vmul.f32 %v692, 1.442695
  %v767 = vpow.pop %v766
  %v768 = vmul.f32 %v693, 1.442695
  %v769 = vpow.pop %v768
  %v770 = vmul.f32 %v694, 1.442695
  %v771 = vpow.pop %v770
  %v772 = vmul.f32 %v695, 1.442695
  %v773 = vpow.pop %v772
  %v774 = vmul.f32 %v696, 1.442695
  %v775 = vpow.pop %v774
  %v776 = vmul.f32 %v697, 1.442695
  %v777 = vpow.pop %v776
  %v778 = vmul.f32 %v698, 1.442695
  %v779 = vpow.pop %v778
  %v780 = vmul.f32 %v699, 1.442695
  %v781 = vpow.pop %v780
  %v782 = vmul.f32 %v700, 1.442695
  %v783 = vpow.pop %v782
  %v784 = vmul.f32 %v701, 1.442695
  %v785 = vpow.pop %v784
  %v786 = vmul.f32 %v702, 1.442695
  %v787 = vpow.pop %v786
  %v788 = vmul.f32 %v703, 1.442695
  %v789 = vpow.pop %v788
  %v790 = vmul.f32 %v704, 1.442695
  %v791 = vpow.pop %v790
  %v792 = vmul.f32 %v705, 1.442695
  %v793 = vpow.pop %v792
  %v794 = vmul.f32 %v706, 1.442695
  %v795 = vpow.pop %v794
  %v796 = vmul.f32 %v707, 1.442695
  %v797 = vpow.pop %v796
  %v798 = vmul.f32 %v708, 1.442695
  %v799 = vpow.pop %v798
  %v800 = vmul.f32 %v709, 1.442695
  %v801 = vpow.pop %v800
  %v802 = vmul.f32 %v710, 1.442695
  %v803 = vpow.pop %v802
  %v804 = vmul.f32 %v711, 1.442695
  %v805 = vpow.pop %v804
  %v806 = vmul.f32 %v712, 1.442695
  %v807 = vpow.pop %v806
  %v808 = vmul.f32 %v713, 1.442695
  %v809 = vpow.pop %v808
  %v810 = vmul.f32 %v714, 1.442695
  %v811 = vpow.pop %v810
  %v812 = vmul.f32 %v715, 1.442695
  %v813 = vpow.pop %v812
  %v814 = vmul.f32 %v716, 1.442695
  %v815 = vpow.pop %v814
  %v816 = vmul.f32 %v717, 1.442695
  %v817 = vpow.pop %v816
  %v818 = vmul.f32 %v718, 1.442695
  %v819 = vpow.pop %v818
  %v820 = vmul.f32 %v719, 1.442695
  %v821 = vpow.pop %v820
  %v822 = vmul.f32 %v720, 1.442695
  %v823 = vpow.pop %v822
  %v824 = vmul.f32 %v721, 1.442695
  %v825 = vpow.pop %v824
  %v826 = vmul.f32 %v722, 1.442695
  %v827 = vpow.pop %v826
  %v828 = vmul.f32 %v723, 1.442695
  %v829 = vpow.pop %v828
  %v830 = vmul.f32 %v724, 1.442695
  %v831 = vpow.pop %v830
  %v832 = vmul.f32 %v725, 1.442695
  %v833 = vpow.pop %v832
  %v834 = vmul.f32 %v726, 1.442695
  %v835 = vpow.pop %v834
  %v836 = vmul.f32 %v727, 1.442695
  %v837 = vpow.pop %v836
  %v838 = vmul.f32 %v728, 1.442695
  %v839 = vpow.pop %v838
  %v840 = vmul.f32 %v729, 1.442695
  %v841 = vpow.pop %v840
  %v842 = vmul.f32 %v730, 1.442695
  %v843 = vpow.pop %v842
  %v844 = vmul.f32 %v731, 1.442695
  %v845 = vpow.pop %v844
  %v846 = vmul.f32 %v732, 1.442695
  %v847 = vpow.pop %v846
  %v848 = vmul.f32 %v733, 1.442695
  %v849 = vpow.pop %v848
  %v850 = vmul.f32 %v734, 1.442695
  %v851 = vpow.pop %v850
  %v852 = vmul.f32 %v735, 1.442695
  %v853 = vpow.pop %v852
  %v854 = vmul.f32 %v736, 1.442695
  %v855 = vpow.pop %v854
  %v856 = vmul.f32 %v737, 1.442695
  %v857 = vpow.pop %v856
  %v858 = vmul.f32 %v738, 1.442695
  %v859 = vpow.pop %v858
  %v860 = vmul.f32 %v739, 1.442695
  %v861 = vpow.pop %v860
  %v862 = vmul.f32 %v740, 1.442695
  %v863 = vpow.pop %v862
  %v864 = vmul.f32 %v741, 1.442695
  %v865 = vpow.pop %v864
  %v866 = vmul.f32 %v742, 1.442695
  %v867 = vpow.pop %v866
  %v868 = vmul.f32 %v743, 1.442695
  %v869 = vpow.pop %v868
  %v870 = vmul.f32 %v744, 1.442695
  %v871 = vpow.pop %v870
  %v872 = vmul.f32 %v745, 1.442695
  %v873 = vpow.pop %v872
  %v874 = vadd.f32 %v747, %v763
  %v875 = vadd.f32 %v874, %v779
  %v876 = vadd.f32 %v875, %v795
  %v877 = vadd.f32 %v876, %v811
  %v878 = vadd.f32 %v877, %v827
  %v879 = vadd.f32 %v878, %v843
  %v880 = vadd.f32 %v879, %v859
  %v881 = vadd.f32 %v749, %v765
  %v882 = vadd.f32 %v881, %v781
  %v883 = vadd.f32 %v882, %v797
  %v884 = vadd.f32 %v883, %v813
  %v885 = vadd.f32 %v884, %v829
  %v886 = vadd.f32 %v885, %v845
  %v887 = vadd.f32 %v886, %v861
  %v888 = vadd.f32 %v751, %v767
  %v889 = vadd.f32 %v888, %v783
  %v890 = vadd.f32 %v889, %v799
  %v891 = vadd.f32 %v890, %v815
  %v892 = vadd.f32 %v891, %v831
  %v893 = vadd.f32 %v892, %v847
  %v894 = vadd.f32 %v893, %v863
  %v895 = vadd.f32 %v753, %v769
  %v896 = vadd.f32 %v895, %v785
  %v897 = vadd.f32 %v896, %v801
  %v898 = vadd.f32 %v897, %v817
  %v899 = vadd.f32 %v898, %v833
  %v900 = vadd.f32 %v899, %v849
  %v901 = vadd.f32 %v900, %v865
  %v902 = vadd.f32 %v755, %v771
  %v903 = vadd.f32 %v902, %v787
  %v904 = vadd.f32 %v903, %v803
  %v905 = vadd.f32 %v904, %v819
  %v906 = vadd.f32 %v905, %v835
  %v907 = vadd.f32 %v906, %v851
  %v908 = vadd.f32 %v907, %v867
  %v909 = vadd.f32 %v757, %v773
  %v910 = vadd.f32 %v909, %v789
  %v911 = vadd.f32 %v910, %v805
  %v912 = vadd.f32 %v911, %v821
  %v913 = vadd.f32 %v912, %v837
  %v914 = vadd.f32 %v913, %v853
  %v915 = vadd.f32 %v914, %v869
  %v916 = vadd.f32 %v759, %v775
  %v917 = vadd.f32 %v916, %v791
  %v918 = vadd.f32 %v917, %v807
  %v919 = vadd.f32 %v918, %v823
  %v920 = vadd.f32 %v919, %v839
  %v921 = vadd.f32 %v920, %v855
  %v922 = vadd.f32 %v921, %v871
  %v923 = vadd.f32 %v761, %v777
  %v924 = vadd.f32 %v923, %v793
  %v925 = vadd.f32 %v924, %v809
  %v926 = vadd.f32 %v925, %v825
  %v927 = vadd.f32 %v926, %v841
  %v928 = vadd.f32 %v927, %v857
  %v929 = vadd.f32 %v928, %v873
  %v930 = vmul.f32 %v747, %v33
  %v931 = vmul.f32 %v747, %v34
  %v932 = vmul.f32 %v749, %v33
  %v933 = vmul.f32 %v749, %v34
  %v934 = vmul.f32 %v751, %v33
  %v935 = vmul.f32 %v751, %v34
  %v936 = vmul.f32 %v753, %v33
  %v937 = vmul.f32 %v753, %v34
  %v938 = vmul.f32 %v755, %v33
  %v939 = vmul.f32 %v755, %v34
  %v940 = vmul.f32 %v757, %v33
  %v941 = vmul.f32 %v757, %v34
  %v942 = vmul.f32 %v759, %v33
  %v943 = vmul.f32 %v759, %v34
  %v944 = vmul.f32 %v761, %v33
  %v945 = vmul.f32 %v761, %v34
  %v946 = vmul.f32 %v763, %v35
  %v947 = vmul.f32 %v763, %v36
  %v948 = vmul.f32 %v765, %v35
  %v949 = vmul.f32 %v765, %v36
  %v950 = vmul.f32 %v767, %v35
  %v951 = vmul.f32 %v767, %v36
  %v952 = vmul.f32 %v769, %v35
  %v953 = vmul.f32 %v769, %v36
  %v954 = vmul.f32 %v771, %v35
  %v955 = vmul.f32 %v771, %v36
  %v956 = vmul.f32 %v773, %v35
  %v957 = vmul.f32 %v773, %v36
  %v958 = vmul.f32 %v775, %v35
  %v959 = vmul.f32 %v775, %v36
  %v960 = vmul.f32 %v777, %v35
  %v961 = vmul.f32 %v777, %v36
  %v962 = vadd.f32 %v930, %v946
  %v963 = vadd.f32 %v931, %v947
  %v964 = vadd.f32 %v932, %v948
  %v965 = vadd.f32 %v933, %v949
  %v966 = vadd.f32 %v934, %v950
  %v967 = vadd.f32 %v935, %v951
  %v968 = vadd.f32 %v936, %v952
  %v969 = vadd.f32 %v937, %v953
  %v970 = vadd.f32 %v938, %v954
  %v971 = vadd.f32 %v939, %v955
  %v972 = vadd.f32 %v940, %v956
  %v973 = vadd.f32 %v941, %v957
  %v974 = vadd.f32 %v942, %v958
  %v975 = vadd.f32 %v943, %v959
  %v976 = vadd.f32 %v944, %v960
  %v977 = vadd.f32 %v945, %v961
  %v978 = vmul.f32 %v779, %v37
  %v979 = vmul.f32 %v779, %v38
  %v980 = vmul.f32 %v781, %v37
  %v981 = vmul.f32 %v781, %v38
  %v982 = vmul.f32 %v783, %v37
  %v983 = vmul.f32 %v783, %v38
  %v984 = vmul.f32 %v785, %v37
  %v985 = vmul.f32 %v785, %v38
  %v986 = vmul.f32 %v787, %v37
  %v987 = vmul.f32 %v787, %v38
  %v988 = vmul.f32 %v789, %v37
  %v989 = vmul.f32 %v789, %v38
  %v990 = vmul.f32 %v791, %v37
  %v991 = vmul.f32 %v791, %v38
  %v992 = vmul.f32 %v793, %v37
  %v993 = vmul.f32 %v793, %v38
  %v994 = vadd.f32 %v962, %v978
  %v995 = vadd.f32 %v963, %v979
  %v996 = vadd.f32 %v964, %v980
  %v997 = vadd.f32 %v965, %v981
  %v998 = vadd.f32 %v966, %v982
  %v999 = vadd.f32 %v967, %v983
  %v1000 = vadd.f32 %v968, %v984
  %v1001 = vadd.f32 %v969, %v985
  %v1002 = vadd.f32 %v970, %v986
  %v1003 = vadd.f32 %v971, %v987
  %v1004 = vadd.f32 %v972, %v988
  %v1005 = vadd.f32 %v973, %v989
  %v1006 = vadd.f32 %v974, %v990
  %v1007 = vadd.f32 %v975, %v991
  %v1008 = vadd.f32 %v976, %v992
  %v1009 = vadd.f32 %v977, %v993
  %v1010 = vmul.f32 %v795, %v39
  %v1011 = vmul.f32 %v795, %v40
  %v1012 = vmul.f32 %v797, %v39
  %v1013 = vmul.f32 %v797, %v40
  %v1014 = vmul.f32 %v799, %v39
  %v1015 = vmul.f32 %v799, %v40
  %v1016 = vmul.f32 %v801, %v39
  %v1017 = vmul.f32 %v801, %v40
  %v1018 = vmul.f32 %v803, %v39
  %v1019 = vmul.f32 %v803, %v40
  %v1020 = vmul.f32 %v805, %v39
  %v1021 = vmul.f32 %v805, %v40
  %v1022 = vmul.f32 %v807, %v39
  %v1023 = vmul.f32 %v807, %v40
  %v1024 = vmul.f32 %v809, %v39
  %v1025 = vmul.f32 %v809, %v40
  %v1026 = vadd.f32 %v994, %v1010
  %v1027 = vadd.f32 %v995, %v1011
  %v1028 = vadd.f32 %v996, %v1012
  %v1029 = vadd.f32 %v997, %v1013
  %v1030 = vadd.f32 %v998, %v1014
  %v1031 = vadd.f32 %v999, %v1015
  %v1032 = vadd.f32 %v1000, %v1016
  %v1033 = vadd.f32 %v1001, %v1017
  %v1034 = vadd.f32 %v1002, %v1018
  %v1035 = vadd.f32 %v1003, %v1019
  %v1036 = vadd.f32 %v1004, %v1020
  %v1037 = vadd.f32 %v1005, %v1021
  %v1038 = vadd.f32 %v1006, %v1022
  %v1039 = vadd.f32 %v1007, %v1023
  %v1040 = vadd.f32 %v1008, %v1024
  %v1041 = vadd.f32 %v1009, %v1025
  %v1042 = vmul.f32 %v811, %v41
  %v1043 = vmul.f32 %v811, %v42
  %v1044 = vmul.f32 %v813, %v41
  %v1045 = vmul.f32 %v813, %v42
  %v1046 = vmul.f32 %v815, %v41
  %v1047 = vmul.f32 %v815, %v42
  %v1048 = vmul.f32 %v817, %v41
  %v1049 = vmul.f32 %v817, %v42
  %v1050 = vmul.f32 %v819, %v41
  %v1051 = vmul.f32 %v819, %v42
  %v1052 = vmul.f32 %v821, %v41
  %v1053 = vmul.f32 %v821, %v42
  %v1054 = vmul.f32 %v823, %v41
  %v1055 = vmul.f32 %v823, %v42
  %v1056 = vmul.f32 %v825, %v41
  %v1057 = vmul.f32 %v825, %v42
  %v1058 = vadd.f32 %v1026, %v1042
  %v1059 = vadd.f32 %v1027, %v1043
  %v1060 = vadd.f32 %v1028, %v1044
  %v1061 = vadd.f32 %v1029, %v1045
  %v1062 = vadd.f32 %v1030, %v1046
  %v1063 = vadd.f32 %v1031, %v1047
  %v1064 = vadd.f32 %v1032, %v1048
  %v1065 = vadd.f32 %v1033, %v1049
  %v1066 = vadd.f32 %v1034, %v1050
  %v1067 = vadd.f32 %v1035, %v1051
  %v1068 = vadd.f32 %v1036, %v1052
  %v1069 = vadd.f32 %v1037, %v1053
  %v1070 = vadd.f32 %v1038, %v1054
  %v1071 = vadd.f32 %v1039, %v1055
  %v1072 = vadd.f32 %v1040, %v1056
  %v1073 = vadd.f32 %v1041, %v1057
  %v1074 = vmul.f32 %v827, %v43
  %v1075 = vmul.f32 %v827, %v44
  %v1076 = vmul.f32 %v829, %v43
  %v1077 = vmul.f32 %v829, %v44
  %v1078 = vmul.f32 %v831, %v43
  %v1079 = vmul.f32 %v831, %v44
  %v1080 = vmul.f32 %v833, %v43
  %v1081 = vmul.f32 %v833, %v44
  %v1082 = vmul.f32 %v835, %v43
  %v1083 = vmul.f32 %v835, %v44
  %v1084 = vmul.f32 %v837, %v43
  %v1085 = vmul.f32 %v837, %v44
  %v1086 = vmul.f32 %v839, %v43
  %v1087 = vmul.f32 %v839, %v44
  %v1088 = vmul.f32 %v841, %v43
  %v1089 = vmul.f32 %v841, %v44
  %v1090 = vadd.f32 %v1058, %v1074
  %v1091 = vadd.f32 %v1059, %v1075
  %v1092 = vadd.f32 %v1060, %v1076
  %v1093 = vadd.f32 %v1061, %v1077
  %v1094 = vadd.f32 %v1062, %v1078
  %v1095 = vadd.f32 %v1063, %v1079
  %v1096 = vadd.f32 %v1064, %v1080
  %v1097 = vadd.f32 %v1065, %v1081
  %v1098 = vadd.f32 %v1066, %v1082
  %v1099 = vadd.f32 %v1067, %v1083
  %v1100 = vadd.f32 %v1068, %v1084
  %v1101 = vadd.f32 %v1069, %v1085
  %v1102 = vadd.f32 %v1070, %v1086
  %v1103 = vadd.f32 %v1071, %v1087
  %v1104 = vadd.f32 %v1072, %v1088
  %v1105 = vadd.f32 %v1073, %v1089
  %v1106 = vmul.f32 %v843, %v45
  %v1107 = vmul.f32 %v843, %v46
  %v1108 = vmul.f32 %v845, %v45
  %v1109 = vmul.f32 %v845, %v46
  %v1110 = vmul.f32 %v847, %v45
  %v1111 = vmul.f32 %v847, %v46
  %v1112 = vmul.f32 %v849, %v45
  %v1113 = vmul.f32 %v849, %v46
  %v1114 = vmul.f32 %v851, %v45
  %v1115 = vmul.f32 %v851, %v46
  %v1116 = vmul.f32 %v853, %v45
  %v1117 = vmul.f32 %v853, %v46
  %v1118 = vmul.f32 %v855, %v45
  %v1119 = vmul.f32 %v855, %v46
  %v1120 = vmul.f32 %v857, %v45
  %v1121 = vmul.f32 %v857, %v46
  %v1122 = vadd.f32 %v1090, %v1106
  %v1123 = vadd.f32 %v1091, %v1107
  %v1124 = vadd.f32 %v1092, %v1108
  %v1125 = vadd.f32 %v1093, %v1109
  %v1126 = vadd.f32 %v1094, %v1110
  %v1127 = vadd.f32 %v1095, %v1111
  %v1128 = vadd.f32 %v1096, %v1112
  %v1129 = vadd.f32 %v1097, %v1113
  %v1130 = vadd.f32 %v1098, %v1114
  %v1131 = vadd.f32 %v1099, %v1115
  %v1132 = vadd.f32 %v1100, %v1116
  %v1133 = vadd.f32 %v1101, %v1117
  %v1134 = vadd.f32 %v1102, %v1118
  %v1135 = vadd.f32 %v1103, %v1119
  %v1136 = vadd.f32 %v1104, %v1120
  %v1137 = vadd.f32 %v1105, %v1121
  %v1138 = vmul.f32 %v859, %v47
  %v1139 = vmul.f32 %v859, %v48
  %v1140 = vmul.f32 %v861, %v47
  %v1141 = vmul.f32 %v861, %v48
  %v1142 = vmul.f32 %v863, %v47
  %v1143 = vmul.f32 %v863, %v48
  %v1144 = vmul.f32 %v865, %v47
  %v1145 = vmul.f32 %v865, %v48
  %v1146 = vmul.f32 %v867, %v47
  %v1147 = vmul.f32 %v867, %v48
  %v1148 = vmul.f32 %v869, %v47
  %v1149 = vmul.f32 %v869, %v48
  %v1150 = vmul.f32 %v871, %v47
  %v1151 = vmul.f32 %v871, %v48
  %v1152 = vmul.f32 %v873, %v47
  %v1153 = vmul.f32 %v873, %v48
  %v1154 = vadd.f32 %v1122, %v1138
  %v1155 = vadd.f32 %v1123, %v1139
  %v1156 = vadd.f32 %v1124, %v1140
  %v1157 = vadd.f32 %v1125, %v1141
  %v1158 = vadd.f32 %v1126, %v1142
  %v1159 = vadd.f32 %v1127, %v1143
  %v1160 = vadd.f32 %v1128, %v1144
  %v1161 = vadd.f32 %v1129, %v1145
  %v1162 = vadd.f32 %v1130, %v1146
  %v1163 = vadd.f32 %v1131, %v1147
  %v1164 = vadd.f32 %v1132, %v1148
  %v1165 = vadd.f32 %v1133, %v1149
  %v1166 = vadd.f32 %v1134, %v1150
  %v1167 = vadd.f32 %v1135, %v1151
  %v1168 = vadd.f32 %v1136, %v1152
  %v1169 = vadd.f32 %v1137, %v1153
  %1170 = vst [vmem:[%s3] sm:$0xff] %v1154
  %1171 = vst [vmem:[%s3 + $0x8] sm:$0xff] %v1155
  %1172 = vst [vmem:[%s3 + $0x10] sm:$0xff] %v1156
  %1173 = vst [vmem:[%s3 + $0x18] sm:$0xff] %v1157
  %1174 = vst [vmem:[%s3 + $0x20] sm:$0xff] %v1158
  %1175 = vst [vmem:[%s3 + $0x28] sm:$0xff] %v1159
  %1176 = vst [vmem:[%s3 + $0x30] sm:$0xff] %v1160
  %1177 = vst [vmem:[%s3 + $0x38] sm:$0xff] %v1161
  %1178 = vst [vmem:[%s3 + $0x40] sm:$0xff] %v1162
  %1179 = vst [vmem:[%s3 + $0x48] sm:$0xff] %v1163
  %1180 = vst [vmem:[%s3 + $0x50] sm:$0xff] %v1164
  %1181 = vst [vmem:[%s3 + $0x58] sm:$0xff] %v1165
  %1182 = vst [vmem:[%s3 + $0x60] sm:$0xff] %v1166
  %1183 = vst [vmem:[%s3 + $0x68] sm:$0xff] %v1167
  %1184 = vst [vmem:[%s3 + $0x70] sm:$0xff] %v1168
  %1185 = vst [vmem:[%s3 + $0x78] sm:$0xff] %v1169
  %1186 = vst [vmem:[%s4] sm:$0x1] %v632
  %1187 = vst [vmem:[%s4 + $0x1] sm:$0x1] %v639
  %1188 = vst [vmem:[%s4 + $0x2] sm:$0x1] %v646
  %1189 = vst [vmem:[%s4 + $0x3] sm:$0x1] %v653
  %1190 = vst [vmem:[%s4 + $0x4] sm:$0x1] %v660
  %1191 = vst [vmem:[%s4 + $0x5] sm:$0x1] %v667
  %1192 = vst [vmem:[%s4 + $0x6] sm:$0x1] %v674
  %1193 = vst [vmem:[%s4 + $0x7] sm:$0x1] %v681
  %1194 = vst [vmem:[%s5] sm:$0x1] %v880
  %1195 = vst [vmem:[%s5 + $0x1] sm:$0x1] %v887
  %1196 = vst [vmem:[%s5 + $0x2] sm:$0x1] %v894
  %1197 = vst [vmem:[%s5 + $0x3] sm:$0x1] %v901
  %1198 = vst [vmem:[%s5 + $0x4] sm:$0x1] %v908
  %1199 = vst [vmem:[%s5 + $0x5] sm:$0x1] %v915
  %1200 = vst [vmem:[%s5 + $0x6] sm:$0x1] %v922
  %1201 = vst [vmem:[%s5 + $0x7] sm:$0x1] %v929
  // Predicated region
  $region14: #{sia_forward.8} parent=0 // pred_check
    _
  $region15: #{sia_forward.8} parent=0 // pred_check_branch
    %1203 = sbr.rel (0) target = $region17
  $region16: #{sia_forward.8} parent=0 // pred_region
    _
  $region17: #{sia_forward.8} parent=0 // pred_fallthru
    _
  // Predicated region
  $region18: #{sia_forward.8} parent=0 // pred_check
    _
  $region19: #{sia_forward.8} parent=0 // pred_check_branch
    %1205 = sbr.rel (0) target = $region21
  $region20: #{sia_forward.8} parent=0 // pred_region
    _
  $region21: #{sia_forward.8} parent=0 // pred_fallthru
    _
  // Predicated region
  $region22: #{sia_forward.8} parent=0 // pred_check
    _
  $region23: #{sia_forward.8} parent=0 // pred_check_branch
    %1207 = sbr.rel (0) target = $region25
  $region24: #{sia_forward.8} parent=0 // pred_region
    _
  $region25: #{sia_forward.8} parent=0 // pred_fallthru
    _
  // Predicated region
  $region26: #{sia_forward.8} parent=0 // pred_check
    _
  $region27: #{sia_forward.8} parent=0 // pred_check_branch
    %1209 = sbr.rel (0) target = $region29
  $region28: #{sia_forward.8} parent=0 // pred_region
    _
  $region29: #{sia_forward.8} parent=0 // pred_fallthru
    _
  // Predicated region
  $region30: #{sia_forward.8} parent=0 // pred_check
    _
  $region31: #{sia_forward.8} parent=0 // pred_check_branch
    %1211 = sbr.rel (0) target = $region33
  $region32: #{sia_forward.8} parent=0 // pred_region
    _
  $region33: #{sia_forward.8} parent=0 // pred_fallthru
    _
  // Predicated region
  $region34: #{sia_forward.8} parent=0 // pred_check
    _
  $region35: #{sia_forward.8} parent=0 // pred_check_branch
    %1213 = sbr.rel (0) target = $region37
  $region36: #{sia_forward.8} parent=0 // pred_region
    _
  $region37: #{sia_forward.8} parent=0 // pred_fallthru
    _

// kernel: sia_forward.7
$region0: #{sia_forward.7}
  #allocation0 [shape = 'u32[]', space=smem, size = 0x4, offset = 0x4, fixed_abs, tag = 'smem constant byte address 0x4 - core index']
  #allocation1 [shape = 'u32[144,128]{1,0:T(1,128)}', space=vmem, size = 0x12000, scoped, tag = 'internal scratch']
  %s0 = inlined_call_operand.vmem [shape: f32[1,8,2,128], index: 0, kind: input, shape index: {}]
  %s1 = inlined_call_operand.vmem [shape: f32[8,1,2,128], index: 1, kind: input, shape index: {}]
  %s2 = inlined_call_operand.vmem [shape: f32[8,1,16,128], index: 2, kind: input, shape index: {}]
  %s3 = inlined_call_operand.vmem [shape: f32[8,16,128], index: 3, kind: output, shape index: {0}]
  %s4 = inlined_call_operand.vmem [shape: f32[8,1,128], index: 4, kind: output, shape index: {1}]
  %s5 = inlined_call_operand.vmem [shape: f32[8,1,128], index: 5, kind: output, shape index: {2}]
  %6 = xla_tuple %s3, %s4, %s5
  %s7 = sld [smem:[#allocation0]]
  $region38: #{sia_forward.7} parent=0
    _
  %s9 = ssub.s32 1, %s7
  %s10 = scalar_select 0, %s9, %s7
  // Predicated region
  $region2: #{sia_forward.7} parent=0 // pred_check
    _
  $region3: #{sia_forward.7} parent=0 // pred_check_branch
    %12 = sbr.rel (0) target = $region5
  $region4: #{sia_forward.7} parent=0 // pred_region
    _
  $region5: #{sia_forward.7} parent=0 // pred_fallthru
    _
  // Predicated region
  $region6: #{sia_forward.7} parent=0 // pred_check
    _
  $region7: #{sia_forward.7} parent=0 // pred_check_branch
    %14 = sbr.rel (0) target = $region9
  $region8: #{sia_forward.7} parent=0 // pred_region
    _
  $region9: #{sia_forward.7} parent=0 // pred_fallthru
    _
  // Predicated region
  $region10: #{sia_forward.7} parent=0 // pred_check
    _
  $region11: #{sia_forward.7} parent=0 // pred_check_branch
    %16 = sbr.rel (0) target = $region13
  $region12: #{sia_forward.7} parent=0 // pred_region
    _
  $region13: #{sia_forward.7} parent=0 // pred_fallthru
    _
  %v17 = vld [vmem:[%s0] sm:$0x3]
  %v18 = vld [vmem:[%s0 + $0x2] sm:$0x3]
  %v19 = vld [vmem:[%s0 + $0x4] sm:$0x3]
  %v20 = vld [vmem:[%s0 + $0x6] sm:$0x3]
  %v21 = vld [vmem:[%s0 + $0x8] sm:$0x3]
  %v22 = vld [vmem:[%s0 + $0xa] sm:$0x3]
  %v23 = vld [vmem:[%s0 + $0xc] sm:$0x3]
  %v24 = vld [vmem:[%s0 + $0xe] sm:$0x3]
  %v25 = vld [vmem:[%s1] sm:$0x3]
  %v26 = vld [vmem:[%s1 + $0x2] sm:$0x3]
  %v27 = vld [vmem:[%s1 + $0x4] sm:$0x3]
  %v28 = vld [vmem:[%s1 + $0x6] sm:$0x3]
  %v29 = vld [vmem:[%s1 + $0x8] sm:$0x3]
  %v30 = vld [vmem:[%s1 + $0xa] sm:$0x3]
  %v31 = vld [vmem:[%s1 + $0xc] sm:$0x3]
  %v32 = vld [vmem:[%s1 + $0xe] sm:$0x3]
  %v33 = vld [vmem:[%s2] sm:$0xff]
  %v34 = vld [vmem:[%s2 + $0x8] sm:$0xff]
  %v35 = vld [vmem:[%s2 + $0x10] sm:$0xff]
  %v36 = vld [vmem:[%s2 + $0x18] sm:$0xff]
  %v37 = vld [vmem:[%s2 + $0x20] sm:$0xff]
  %v38 = vld [vmem:[%s2 + $0x28] sm:$0xff]
  %v39 = vld [vmem:[%s2 + $0x30] sm:$0xff]
  %v40 = vld [vmem:[%s2 + $0x38] sm:$0xff]
  %v41 = vld [vmem:[%s2 + $0x40] sm:$0xff]
  %v42 = vld [vmem:[%s2 + $0x48] sm:$0xff]
  %v43 = vld [vmem:[%s2 + $0x50] sm:$0xff]
  %v44 = vld [vmem:[%s2 + $0x58] sm:$0xff]
  %v45 = vld [vmem:[%s2 + $0x60] sm:$0xff]
  %v46 = vld [vmem:[%s2 + $0x68] sm:$0xff]
  %v47 = vld [vmem:[%s2 + $0x70] sm:$0xff]
  %v48 = vld [vmem:[%s2 + $0x78] sm:$0xff]
  %v49 = vmul.f32 %v25, %v17
  %v50 = vmul.f32 %v25, %v18
  %v51 = vmul.f32 %v25, %v19
  %v52 = vmul.f32 %v25, %v20
  %v53 = vmul.f32 %v25, %v21
  %v54 = vmul.f32 %v25, %v22
  %v55 = vmul.f32 %v25, %v23
  %v56 = vmul.f32 %v25, %v24
  %v57 = vmul.f32 %v26, %v17
  %v58 = vmul.f32 %v26, %v18
  %v59 = vmul.f32 %v26, %v19
  %v60 = vmul.f32 %v26, %v20
  %v61 = vmul.f32 %v26, %v21
  %v62 = vmul.f32 %v26, %v22
  %v63 = vmul.f32 %v26, %v23
  %v64 = vmul.f32 %v26, %v24
  %v65 = vmul.f32 %v27, %v17
  %v66 = vmul.f32 %v27, %v18
  %v67 = vmul.f32 %v27, %v19
  %v68 = vmul.f32 %v27, %v20
  %v69 = vmul.f32 %v27, %v21
  %v70 = vmul.f32 %v27, %v22
  %v71 = vmul.f32 %v27, %v23
  %v72 = vmul.f32 %v27, %v24
  %v73 = vmul.f32 %v28, %v17
  %v74 = vmul.f32 %v28, %v18
  %v75 = vmul.f32 %v28, %v19
  %v76 = vmul.f32 %v28, %v20
  %v77 = vmul.f32 %v28, %v21
  %v78 = vmul.f32 %v28, %v22
  %v79 = vmul.f32 %v28, %v23
  %v80 = vmul.f32 %v28, %v24
  %v81 = vmul.f32 %v29, %v17
  %v82 = vmul.f32 %v29, %v18
  %v83 = vmul.f32 %v29, %v19
  %v84 = vmul.f32 %v29, %v20
  %v85 = vmul.f32 %v29, %v21
  %v86 = vmul.f32 %v29, %v22
  %v87 = vmul.f32 %v29, %v23
  %v88 = vmul.f32 %v29, %v24
  %v89 = vmul.f32 %v30, %v17
  %v90 = vmul.f32 %v30, %v18
  %v91 = vmul.f32 %v30, %v19
  %v92 = vmul.f32 %v30, %v20
  %v93 = vmul.f32 %v30, %v21
  %v94 = vmul.f32 %v30, %v22
  %v95 = vmul.f32 %v30, %v23
  %v96 = vmul.f32 %v30, %v24
  %v97 = vmul.f32 %v31, %v17
  %v98 = vmul.f32 %v31, %v18
  %v99 = vmul.f32 %v31, %v19
  %v100 = vmul.f32 %v31, %v20
  %v101 = vmul.f32 %v31, %v21
  %v102 = vmul.f32 %v31, %v22
  %v103 = vmul.f32 %v31, %v23
  %v104 = vmul.f32 %v31, %v24
  %v105 = vmul.f32 %v32, %v17
  %v106 = vmul.f32 %v32, %v18
  %v107 = vmul.f32 %v32, %v19
  %v108 = vmul.f32 %v32, %v20
  %v109 = vmul.f32 %v32, %v21
  %v110 = vmul.f32 %v32, %v22
  %v111 = vmul.f32 %v32, %v23
  %v112 = vmul.f32 %v32, %v24
  %vm113 = vcmask 1041408
  %v114 = vsel %vm113, %v49, 0.0
  %v115 = vrot.slane %v114, 4
  %v116 = vadd.f32 %v114, %v115
  %v117 = vrot.slane %v116, 2
  %v118 = vadd.f32 %v116, %v117
  %v119 = vrot.slane %v118, 1
  %v120 = vadd.f32 %v118, %v119
  %v121 = vsel %vm113, %v50, 0.0
  %v122 = vrot.slane %v121, 4
  %v123 = vadd.f32 %v121, %v122
  %v124 = vrot.slane %v123, 2
  %v125 = vadd.f32 %v123, %v124
  %v126 = vrot.slane %v125, 1
  %v127 = vadd.f32 %v125, %v126
  %v128 = vsel %vm113, %v51, 0.0
  %v129 = vrot.slane %v128, 4
  %v130 = vadd.f32 %v128, %v129
  %v131 = vrot.slane %v130, 2
  %v132 = vadd.f32 %v130, %v131
  %v133 = vrot.slane %v132, 1
  %v134 = vadd.f32 %v132, %v133
  %v135 = vsel %vm113, %v52, 0.0
  %v136 = vrot.slane %v135, 4
  %v137 = vadd.f32 %v135, %v136
  %v138 = vrot.slane %v137, 2
  %v139 = vadd.f32 %v137, %v138
  %v140 = vrot.slane %v139, 1
  %v141 = vadd.f32 %v139, %v140
  %v142 = vsel %vm113, %v53, 0.0
  %v143 = vrot.slane %v142, 4
  %v144 = vadd.f32 %v142, %v143
  %v145 = vrot.slane %v144, 2
  %v146 = vadd.f32 %v144, %v145
  %v147 = vrot.slane %v146, 1
  %v148 = vadd.f32 %v146, %v147
  %v149 = vsel %vm113, %v54, 0.0
  %v150 = vrot.slane %v149, 4
  %v151 = vadd.f32 %v149, %v150
  %v152 = vrot.slane %v151, 2
  %v153 = vadd.f32 %v151, %v152
  %v154 = vrot.slane %v153, 1
  %v155 = vadd.f32 %v153, %v154
  %v156 = vsel %vm113, %v55, 0.0
  %v157 = vrot.slane %v156, 4
  %v158 = vadd.f32 %v156, %v157
  %v159 = vrot.slane %v158, 2
  %v160 = vadd.f32 %v158, %v159
  %v161 = vrot.slane %v160, 1
  %v162 = vadd.f32 %v160, %v161
  %v163 = vsel %vm113, %v56, 0.0
  %v164 = vrot.slane %v163, 4
  %v165 = vadd.f32 %v163, %v164
  %v166 = vrot.slane %v165, 2
  %v167 = vadd.f32 %v165, %v166
  %v168 = vrot.slane %v167, 1
  %v169 = vadd.f32 %v167, %v168
  %v170 = vsel %vm113, %v57, 0.0
  %v171 = vrot.slane %v170, 4
  %v172 = vadd.f32 %v170, %v171
  %v173 = vrot.slane %v172, 2
  %v174 = vadd.f32 %v172, %v173
  %v175 = vrot.slane %v174, 1
  %v176 = vadd.f32 %v174, %v175
  %v177 = vsel %vm113, %v58, 0.0
  %v178 = vrot.slane %v177, 4
  %v179 = vadd.f32 %v177, %v178
  %v180 = vrot.slane %v179, 2
  %v181 = vadd.f32 %v179, %v180
  %v182 = vrot.slane %v181, 1
  %v183 = vadd.f32 %v181, %v182
  %v184 = vsel %vm113, %v59, 0.0
  %v185 = vrot.slane %v184, 4
  %v186 = vadd.f32 %v184, %v185
  %v187 = vrot.slane %v186, 2
  %v188 = vadd.f32 %v186, %v187
  %v189 = vrot.slane %v188, 1
  %v190 = vadd.f32 %v188, %v189
  %v191 = vsel %vm113, %v60, 0.0
  %v192 = vrot.slane %v191, 4
  %v193 = vadd.f32 %v191, %v192
  %v194 = vrot.slane %v193, 2
  %v195 = vadd.f32 %v193, %v194
  %v196 = vrot.slane %v195, 1
  %v197 = vadd.f32 %v195, %v196
  %v198 = vsel %vm113, %v61, 0.0
  %v199 = vrot.slane %v198, 4
  %v200 = vadd.f32 %v198, %v199
  %v201 = vrot.slane %v200, 2
  %v202 = vadd.f32 %v200, %v201
  %v203 = vrot.slane %v202, 1
  %v204 = vadd.f32 %v202, %v203
  %v205 = vsel %vm113, %v62, 0.0
  %v206 = vrot.slane %v205, 4
  %v207 = vadd.f32 %v205, %v206
  %v208 = vrot.slane %v207, 2
  %v209 = vadd.f32 %v207, %v208
  %v210 = vrot.slane %v209, 1
  %v211 = vadd.f32 %v209, %v210
  %v212 = vsel %vm113, %v63, 0.0
  %v213 = vrot.slane %v212, 4
  %v214 = vadd.f32 %v212, %v213
  %v215 = vrot.slane %v214, 2
  %v216 = vadd.f32 %v214, %v215
  %v217 = vrot.slane %v216, 1
  %v218 = vadd.f32 %v216, %v217
  %v219 = vsel %vm113, %v64, 0.0
  %v220 = vrot.slane %v219, 4
  %v221 = vadd.f32 %v219, %v220
  %v222 = vrot.slane %v221, 2
  %v223 = vadd.f32 %v221, %v222
  %v224 = vrot.slane %v223, 1
  %v225 = vadd.f32 %v223, %v224
  %v226 = vsel %vm113, %v65, 0.0
  %v227 = vrot.slane %v226, 4
  %v228 = vadd.f32 %v226, %v227
  %v229 = vrot.slane %v228, 2
  %v230 = vadd.f32 %v228, %v229
  %v231 = vrot.slane %v230, 1
  %v232 = vadd.f32 %v230, %v231
  %v233 = vsel %vm113, %v66, 0.0
  %v234 = vrot.slane %v233, 4
  %v235 = vadd.f32 %v233, %v234
  %v236 = vrot.slane %v235, 2
  %v237 = vadd.f32 %v235, %v236
  %v238 = vrot.slane %v237, 1
  %v239 = vadd.f32 %v237, %v238
  %v240 = vsel %vm113, %v67, 0.0
  %v241 = vrot.slane %v240, 4
  %v242 = vadd.f32 %v240, %v241
  %v243 = vrot.slane %v242, 2
  %v244 = vadd.f32 %v242, %v243
  %v245 = vrot.slane %v244, 1
  %v246 = vadd.f32 %v244, %v245
  %v247 = vsel %vm113, %v68, 0.0
  %v248 = vrot.slane %v247, 4
  %v249 = vadd.f32 %v247, %v248
  %v250 = vrot.slane %v249, 2
  %v251 = vadd.f32 %v249, %v250
  %v252 = vrot.slane %v251, 1
  %v253 = vadd.f32 %v251, %v252
  %v254 = vsel %vm113, %v69, 0.0
  %v255 = vrot.slane %v254, 4
  %v256 = vadd.f32 %v254, %v255
  %v257 = vrot.slane %v256, 2
  %v258 = vadd.f32 %v256, %v257
  %v259 = vrot.slane %v258, 1
  %v260 = vadd.f32 %v258, %v259
  %v261 = vsel %vm113, %v70, 0.0
  %v262 = vrot.slane %v261, 4
  %v263 = vadd.f32 %v261, %v262
  %v264 = vrot.slane %v263, 2
  %v265 = vadd.f32 %v263, %v264
  %v266 = vrot.slane %v265, 1
  %v267 = vadd.f32 %v265, %v266
  %v268 = vsel %vm113, %v71, 0.0
  %v269 = vrot.slane %v268, 4
  %v270 = vadd.f32 %v268, %v269
  %v271 = vrot.slane %v270, 2
  %v272 = vadd.f32 %v270, %v271
  %v273 = vrot.slane %v272, 1
  %v274 = vadd.f32 %v272, %v273
  %v275 = vsel %vm113, %v72, 0.0
  %v276 = vrot.slane %v275, 4
  %v277 = vadd.f32 %v275, %v276
  %v278 = vrot.slane %v277, 2
  %v279 = vadd.f32 %v277, %v278
  %v280 = vrot.slane %v279, 1
  %v281 = vadd.f32 %v279, %v280
  %v282 = vsel %vm113, %v73, 0.0
  %v283 = vrot.slane %v282, 4
  %v284 = vadd.f32 %v282, %v283
  %v285 = vrot.slane %v284, 2
  %v286 = vadd.f32 %v284, %v285
  %v287 = vrot.slane %v286, 1
  %v288 = vadd.f32 %v286, %v287
  %v289 = vsel %vm113, %v74, 0.0
  %v290 = vrot.slane %v289, 4
  %v291 = vadd.f32 %v289, %v290
  %v292 = vrot.slane %v291, 2
  %v293 = vadd.f32 %v291, %v292
  %v294 = vrot.slane %v293, 1
  %v295 = vadd.f32 %v293, %v294
  %v296 = vsel %vm113, %v75, 0.0
  %v297 = vrot.slane %v296, 4
  %v298 = vadd.f32 %v296, %v297
  %v299 = vrot.slane %v298, 2
  %v300 = vadd.f32 %v298, %v299
  %v301 = vrot.slane %v300, 1
  %v302 = vadd.f32 %v300, %v301
  %v303 = vsel %vm113, %v76, 0.0
  %v304 = vrot.slane %v303, 4
  %v305 = vadd.f32 %v303, %v304
  %v306 = vrot.slane %v305, 2
  %v307 = vadd.f32 %v305, %v306
  %v308 = vrot.slane %v307, 1
  %v309 = vadd.f32 %v307, %v308
  %v310 = vsel %vm113, %v77, 0.0
  %v311 = vrot.slane %v310, 4
  %v312 = vadd.f32 %v310, %v311
  %v313 = vrot.slane %v312, 2
  %v314 = vadd.f32 %v312, %v313
  %v315 = vrot.slane %v314, 1
  %v316 = vadd.f32 %v314, %v315
  %v317 = vsel %vm113, %v78, 0.0
  %v318 = vrot.slane %v317, 4
  %v319 = vadd.f32 %v317, %v318
  %v320 = vrot.slane %v319, 2
  %v321 = vadd.f32 %v319, %v320
  %v322 = vrot.slane %v321, 1
  %v323 = vadd.f32 %v321, %v322
  %v324 = vsel %vm113, %v79, 0.0
  %v325 = vrot.slane %v324, 4
  %v326 = vadd.f32 %v324, %v325
  %v327 = vrot.slane %v326, 2
  %v328 = vadd.f32 %v326, %v327
  %v329 = vrot.slane %v328, 1
  %v330 = vadd.f32 %v328, %v329
  %v331 = vsel %vm113, %v80, 0.0
  %v332 = vrot.slane %v331, 4
  %v333 = vadd.f32 %v331, %v332
  %v334 = vrot.slane %v333, 2
  %v335 = vadd.f32 %v333, %v334
  %v336 = vrot.slane %v335, 1
  %v337 = vadd.f32 %v335, %v336
  %v338 = vsel %vm113, %v81, 0.0
  %v339 = vrot.slane %v338, 4
  %v340 = vadd.f32 %v338, %v339
  %v341 = vrot.slane %v340, 2
  %v342 = vadd.f32 %v340, %v341
  %v343 = vrot.slane %v342, 1
  %v344 = vadd.f32 %v342, %v343
  %v345 = vsel %vm113, %v82, 0.0
  %v346 = vrot.slane %v345, 4
  %v347 = vadd.f32 %v345, %v346
  %v348 = vrot.slane %v347, 2
  %v349 = vadd.f32 %v347, %v348
  %v350 = vrot.slane %v349, 1
  %v351 = vadd.f32 %v349, %v350
  %v352 = vsel %vm113, %v83, 0.0
  %v353 = vrot.slane %v352, 4
  %v354 = vadd.f32 %v352, %v353
  %v355 = vrot.slane %v354, 2
  %v356 = vadd.f32 %v354, %v355
  %v357 = vrot.slane %v356, 1
  %v358 = vadd.f32 %v356, %v357
  %v359 = vsel %vm113, %v84, 0.0
  %v360 = vrot.slane %v359, 4
  %v361 = vadd.f32 %v359, %v360
  %v362 = vrot.slane %v361, 2
  %v363 = vadd.f32 %v361, %v362
  %v364 = vrot.slane %v363, 1
  %v365 = vadd.f32 %v363, %v364
  %v366 = vsel %vm113, %v85, 0.0
  %v367 = vrot.slane %v366, 4
  %v368 = vadd.f32 %v366, %v367
  %v369 = vrot.slane %v368, 2
  %v370 = vadd.f32 %v368, %v369
  %v371 = vrot.slane %v370, 1
  %v372 = vadd.f32 %v370, %v371
  %v373 = vsel %vm113, %v86, 0.0
  %v374 = vrot.slane %v373, 4
  %v375 = vadd.f32 %v373, %v374
  %v376 = vrot.slane %v375, 2
  %v377 = vadd.f32 %v375, %v376
  %v378 = vrot.slane %v377, 1
  %v379 = vadd.f32 %v377, %v378
  %v380 = vsel %vm113, %v87, 0.0
  %v381 = vrot.slane %v380, 4
  %v382 = vadd.f32 %v380, %v381
  %v383 = vrot.slane %v382, 2
  %v384 = vadd.f32 %v382, %v383
  %v385 = vrot.slane %v384, 1
  %v386 = vadd.f32 %v384, %v385
  %v387 = vsel %vm113, %v88, 0.0
  %v388 = vrot.slane %v387, 4
  %v389 = vadd.f32 %v387, %v388
  %v390 = vrot.slane %v389, 2
  %v391 = vadd.f32 %v389, %v390
  %v392 = vrot.slane %v391, 1
  %v393 = vadd.f32 %v391, %v392
  %v394 = vsel %vm113, %v89, 0.0
  %v395 = vrot.slane %v394, 4
  %v396 = vadd.f32 %v394, %v395
  %v397 = vrot.slane %v396, 2
  %v398 = vadd.f32 %v396, %v397
  %v399 = vrot.slane %v398, 1
  %v400 = vadd.f32 %v398, %v399
  %v401 = vsel %vm113, %v90, 0.0
  %v402 = vrot.slane %v401, 4
  %v403 = vadd.f32 %v401, %v402
  %v404 = vrot.slane %v403, 2
  %v405 = vadd.f32 %v403, %v404
  %v406 = vrot.slane %v405, 1
  %v407 = vadd.f32 %v405, %v406
  %v408 = vsel %vm113, %v91, 0.0
  %v409 = vrot.slane %v408, 4
  %v410 = vadd.f32 %v408, %v409
  %v411 = vrot.slane %v410, 2
  %v412 = vadd.f32 %v410, %v411
  %v413 = vrot.slane %v412, 1
  %v414 = vadd.f32 %v412, %v413
  %v415 = vsel %vm113, %v92, 0.0
  %v416 = vrot.slane %v415, 4
  %v417 = vadd.f32 %v415, %v416
  %v418 = vrot.slane %v417, 2
  %v419 = vadd.f32 %v417, %v418
  %v420 = vrot.slane %v419, 1
  %v421 = vadd.f32 %v419, %v420
  %v422 = vsel %vm113, %v93, 0.0
  %v423 = vrot.slane %v422, 4
  %v424 = vadd.f32 %v422, %v423
  %v425 = vrot.slane %v424, 2
  %v426 = vadd.f32 %v424, %v425
  %v427 = vrot.slane %v426, 1
  %v428 = vadd.f32 %v426, %v427
  %v429 = vsel %vm113, %v94, 0.0
  %v430 = vrot.slane %v429, 4
  %v431 = vadd.f32 %v429, %v430
  %v432 = vrot.slane %v431, 2
  %v433 = vadd.f32 %v431, %v432
  %v434 = vrot.slane %v433, 1
  %v435 = vadd.f32 %v433, %v434
  %v436 = vsel %vm113, %v95, 0.0
  %v437 = vrot.slane %v436, 4
  %v438 = vadd.f32 %v436, %v437
  %v439 = vrot.slane %v438, 2
  %v440 = vadd.f32 %v438, %v439
  %v441 = vrot.slane %v440, 1
  %v442 = vadd.f32 %v440, %v441
  %v443 = vsel %vm113, %v96, 0.0
  %v444 = vrot.slane %v443, 4
  %v445 = vadd.f32 %v443, %v444
  %v446 = vrot.slane %v445, 2
  %v447 = vadd.f32 %v445, %v446
  %v448 = vrot.slane %v447, 1
  %v449 = vadd.f32 %v447, %v448
  %v450 = vsel %vm113, %v97, 0.0
  %v451 = vrot.slane %v450, 4
  %v452 = vadd.f32 %v450, %v451
  %v453 = vrot.slane %v452, 2
  %v454 = vadd.f32 %v452, %v453
  %v455 = vrot.slane %v454, 1
  %v456 = vadd.f32 %v454, %v455
  %v457 = vsel %vm113, %v98, 0.0
  %v458 = vrot.slane %v457, 4
  %v459 = vadd.f32 %v457, %v458
  %v460 = vrot.slane %v459, 2
  %v461 = vadd.f32 %v459, %v460
  %v462 = vrot.slane %v461, 1
  %v463 = vadd.f32 %v461, %v462
  %v464 = vsel %vm113, %v99, 0.0
  %v465 = vrot.slane %v464, 4
  %v466 = vadd.f32 %v464, %v465
  %v467 = vrot.slane %v466, 2
  %v468 = vadd.f32 %v466, %v467
  %v469 = vrot.slane %v468, 1
  %v470 = vadd.f32 %v468, %v469
  %v471 = vsel %vm113, %v100, 0.0
  %v472 = vrot.slane %v471, 4
  %v473 = vadd.f32 %v471, %v472
  %v474 = vrot.slane %v473, 2
  %v475 = vadd.f32 %v473, %v474
  %v476 = vrot.slane %v475, 1
  %v477 = vadd.f32 %v475, %v476
  %v478 = vsel %vm113, %v101, 0.0
  %v479 = vrot.slane %v478, 4
  %v480 = vadd.f32 %v478, %v479
  %v481 = vrot.slane %v480, 2
  %v482 = vadd.f32 %v480, %v481
  %v483 = vrot.slane %v482, 1
  %v484 = vadd.f32 %v482, %v483
  %v485 = vsel %vm113, %v102, 0.0
  %v486 = vrot.slane %v485, 4
  %v487 = vadd.f32 %v485, %v486
  %v488 = vrot.slane %v487, 2
  %v489 = vadd.f32 %v487, %v488
  %v490 = vrot.slane %v489, 1
  %v491 = vadd.f32 %v489, %v490
  %v492 = vsel %vm113, %v103, 0.0
  %v493 = vrot.slane %v492, 4
  %v494 = vadd.f32 %v492, %v493
  %v495 = vrot.slane %v494, 2
  %v496 = vadd.f32 %v494, %v495
  %v497 = vrot.slane %v496, 1
  %v498 = vadd.f32 %v496, %v497
  %v499 = vsel %vm113, %v104, 0.0
  %v500 = vrot.slane %v499, 4
  %v501 = vadd.f32 %v499, %v500
  %v502 = vrot.slane %v501, 2
  %v503 = vadd.f32 %v501, %v502
  %v504 = vrot.slane %v503, 1
  %v505 = vadd.f32 %v503, %v504
  %v506 = vsel %vm113, %v105, 0.0
  %v507 = vrot.slane %v506, 4
  %v508 = vadd.f32 %v506, %v507
  %v509 = vrot.slane %v508, 2
  %v510 = vadd.f32 %v508, %v509
  %v511 = vrot.slane %v510, 1
  %v512 = vadd.f32 %v510, %v511
  %v513 = vsel %vm113, %v106, 0.0
  %v514 = vrot.slane %v513, 4
  %v515 = vadd.f32 %v513, %v514
  %v516 = vrot.slane %v515, 2
  %v517 = vadd.f32 %v515, %v516
  %v518 = vrot.slane %v517, 1
  %v519 = vadd.f32 %v517, %v518
  %v520 = vsel %vm113, %v107, 0.0
  %v521 = vrot.slane %v520, 4
  %v522 = vadd.f32 %v520, %v521
  %v523 = vrot.slane %v522, 2
  %v524 = vadd.f32 %v522, %v523
  %v525 = vrot.slane %v524, 1
  %v526 = vadd.f32 %v524, %v525
  %v527 = vsel %vm113, %v108, 0.0
  %v528 = vrot.slane %v527, 4
  %v529 = vadd.f32 %v527, %v528
  %v530 = vrot.slane %v529, 2
  %v531 = vadd.f32 %v529, %v530
  %v532 = vrot.slane %v531, 1
  %v533 = vadd.f32 %v531, %v532
  %v534 = vsel %vm113, %v109, 0.0
  %v535 = vrot.slane %v534, 4
  %v536 = vadd.f32 %v534, %v535
  %v537 = vrot.slane %v536, 2
  %v538 = vadd.f32 %v536, %v537
  %v539 = vrot.slane %v538, 1
  %v540 = vadd.f32 %v538, %v539
  %v541 = vsel %vm113, %v110, 0.0
  %v542 = vrot.slane %v541, 4
  %v543 = vadd.f32 %v541, %v542
  %v544 = vrot.slane %v543, 2
  %v545 = vadd.f32 %v543, %v544
  %v546 = vrot.slane %v545, 1
  %v547 = vadd.f32 %v545, %v546
  %v548 = vsel %vm113, %v111, 0.0
  %v549 = vrot.slane %v548, 4
  %v550 = vadd.f32 %v548, %v549
  %v551 = vrot.slane %v550, 2
  %v552 = vadd.f32 %v550, %v551
  %v553 = vrot.slane %v552, 1
  %v554 = vadd.f32 %v552, %v553
  %v555 = vsel %vm113, %v112, 0.0
  %v556 = vrot.slane %v555, 4
  %v557 = vadd.f32 %v555, %v556
  %v558 = vrot.slane %v557, 2
  %v559 = vadd.f32 %v557, %v558
  %v560 = vrot.slane %v559, 1
  %v561 = vadd.f32 %v559, %v560
  %v562 = vmax.f32 %v120, %v176
  %v563 = vmax.f32 %v562, %v232
  %v564 = vmax.f32 %v563, %v288
  %v565 = vmax.f32 %v564, %v344
  %v566 = vmax.f32 %v565, %v400
  %v567 = vmax.f32 %v566, %v456
  %v568 = vmax.f32 %v567, %v512
  %v569 = vmax.f32 %v127, %v183
  %v570 = vmax.f32 %v569, %v239
  %v571 = vmax.f32 %v570, %v295
  %v572 = vmax.f32 %v571, %v351
  %v573 = vmax.f32 %v572, %v407
  %v574 = vmax.f32 %v573, %v463
  %v575 = vmax.f32 %v574, %v519
  %v576 = vmax.f32 %v134, %v190
  %v577 = vmax.f32 %v576, %v246
  %v578 = vmax.f32 %v577, %v302
  %v579 = vmax.f32 %v578, %v358
  %v580 = vmax.f32 %v579, %v414
  %v581 = vmax.f32 %v580, %v470
  %v582 = vmax.f32 %v581, %v526
  %v583 = vmax.f32 %v141, %v197
  %v584 = vmax.f32 %v583, %v253
  %v585 = vmax.f32 %v584, %v309
  %v586 = vmax.f32 %v585, %v365
  %v587 = vmax.f32 %v586, %v421
  %v588 = vmax.f32 %v587, %v477
  %v589 = vmax.f32 %v588, %v533
  %v590 = vmax.f32 %v148, %v204
  %v591 = vmax.f32 %v590, %v260
  %v592 = vmax.f32 %v591, %v316
  %v593 = vmax.f32 %v592, %v372
  %v594 = vmax.f32 %v593, %v428
  %v595 = vmax.f32 %v594, %v484
  %v596 = vmax.f32 %v595, %v540
  %v597 = vmax.f32 %v155, %v211
  %v598 = vmax.f32 %v597, %v267
  %v599 = vmax.f32 %v598, %v323
  %v600 = vmax.f32 %v599, %v379
  %v601 = vmax.f32 %v600, %v435
  %v602 = vmax.f32 %v601, %v491
  %v603 = vmax.f32 %v602, %v547
  %v604 = vmax.f32 %v162, %v218
  %v605 = vmax.f32 %v604, %v274
  %v606 = vmax.f32 %v605, %v330
  %v607 = vmax.f32 %v606, %v386
  %v608 = vmax.f32 %v607, %v442
  %v609 = vmax.f32 %v608, %v498
  %v610 = vmax.f32 %v609, %v554
  %v611 = vmax.f32 %v169, %v225
  %v612 = vmax.f32 %v611, %v281
  %v613 = vmax.f32 %v612, %v337
  %v614 = vmax.f32 %v613, %v393
  %v615 = vmax.f32 %v614, %v449
  %v616 = vmax.f32 %v615, %v505
  %v617 = vmax.f32 %v616, %v561
  %v618 = vsub.f32 %v120, %v568
  %v619 = vsub.f32 %v127, %v575
  %v620 = vsub.f32 %v134, %v582
  %v621 = vsub.f32 %v141, %v589
  %v622 = vsub.f32 %v148, %v596
  %v623 = vsub.f32 %v155, %v603
  %v624 = vsub.f32 %v162, %v610
  %v625 = vsub.f32 %v169, %v617
  %v626 = vsub.f32 %v176, %v568
  %v627 = vsub.f32 %v183, %v575
  %v628 = vsub.f32 %v190, %v582
  %v629 = vsub.f32 %v197, %v589
  %v630 = vsub.f32 %v204, %v596
  %v631 = vsub.f32 %v211, %v603
  %v632 = vsub.f32 %v218, %v610
  %v633 = vsub.f32 %v225, %v617
  %v634 = vsub.f32 %v232, %v568
  %v635 = vsub.f32 %v239, %v575
  %v636 = vsub.f32 %v246, %v582
  %v637 = vsub.f32 %v253, %v589
  %v638 = vsub.f32 %v260, %v596
  %v639 = vsub.f32 %v267, %v603
  %v640 = vsub.f32 %v274, %v610
  %v641 = vsub.f32 %v281, %v617
  %v642 = vsub.f32 %v288, %v568
  %v643 = vsub.f32 %v295, %v575
  %v644 = vsub.f32 %v302, %v582
  %v645 = vsub.f32 %v309, %v589
  %v646 = vsub.f32 %v316, %v596
  %v647 = vsub.f32 %v323, %v603
  %v648 = vsub.f32 %v330, %v610
  %v649 = vsub.f32 %v337, %v617
  %v650 = vsub.f32 %v344, %v568
  %v651 = vsub.f32 %v351, %v575
  %v652 = vsub.f32 %v358, %v582
  %v653 = vsub.f32 %v365, %v589
  %v654 = vsub.f32 %v372, %v596
  %v655 = vsub.f32 %v379, %v603
  %v656 = vsub.f32 %v386, %v610
  %v657 = vsub.f32 %v393, %v617
  %v658 = vsub.f32 %v400, %v568
  %v659 = vsub.f32 %v407, %v575
  %v660 = vsub.f32 %v414, %v582
  %v661 = vsub.f32 %v421, %v589
  %v662 = vsub.f32 %v428, %v596
  %v663 = vsub.f32 %v435, %v603
  %v664 = vsub.f32 %v442, %v610
  %v665 = vsub.f32 %v449, %v617
  %v666 = vsub.f32 %v456, %v568
  %v667 = vsub.f32 %v463, %v575
  %v668 = vsub.f32 %v470, %v582
  %v669 = vsub.f32 %v477, %v589
  %v670 = vsub.f32 %v484, %v596
  %v671 = vsub.f32 %v491, %v603
  %v672 = vsub.f32 %v498, %v610
  %v673 = vsub.f32 %v505, %v617
  %v674 = vsub.f32 %v512, %v568
  %v675 = vsub.f32 %v519, %v575
  %v676 = vsub.f32 %v526, %v582
  %v677 = vsub.f32 %v533, %v589
  %v678 = vsub.f32 %v540, %v596
  %v679 = vsub.f32 %v547, %v603
  %v680 = vsub.f32 %v554, %v610
  %v681 = vsub.f32 %v561, %v617
  %v682 = vmul.f32 %v618, 1.442695
  %v683 = vpow.pop %v682
  %v684 = vmul.f32 %v619, 1.442695
  %v685 = vpow.pop %v684
  %v686 = vmul.f32 %v620, 1.442695
  %v687 = vpow.pop %v686
  %v688 = vmul.f32 %v621, 1.442695
  %v689 = vpow.pop %v688
  %v690 = vmul.f32 %v622, 1.442695
  %v691 = vpow.pop %v690
  %v692 = vmul.f32 %v623, 1.442695
  %v693 = vpow.pop %v692
  %v694 = vmul.f32 %v624, 1.442695
  %v695 = vpow.pop %v694
  %v696 = vmul.f32 %v625, 1.442695
  %v697 = vpow.pop %v696
  %v698 = vmul.f32 %v626, 1.442695
  %v699 = vpow.pop %v698
  %v700 = vmul.f32 %v627, 1.442695
  %v701 = vpow.pop %v700
  %v702 = vmul.f32 %v628, 1.442695
  %v703 = vpow.pop %v702
  %v704 = vmul.f32 %v629, 1.442695
  %v705 = vpow.pop %v704
  %v706 = vmul.f32 %v630, 1.442695
  %v707 = vpow.pop %v706
  %v708 = vmul.f32 %v631, 1.442695
  %v709 = vpow.pop %v708
  %v710 = vmul.f32 %v632, 1.442695
  %v711 = vpow.pop %v710
  %v712 = vmul.f32 %v633, 1.442695
  %v713 = vpow.pop %v712
  %v714 = vmul.f32 %v634, 1.442695
  %v715 = vpow.pop %v714
  %v716 = vmul.f32 %v635, 1.442695
  %v717 = vpow.pop %v716
  %v718 = vmul.f32 %v636, 1.442695
  %v719 = vpow.pop %v718
  %v720 = vmul.f32 %v637, 1.442695
  %v721 = vpow.pop %v720
  %v722 = vmul.f32 %v638, 1.442695
  %v723 = vpow.pop %v722
  %v724 = vmul.f32 %v639, 1.442695
  %v725 = vpow.pop %v724
  %v726 = vmul.f32 %v640, 1.442695
  %v727 = vpow.pop %v726
  %v728 = vmul.f32 %v641, 1.442695
  %v729 = vpow.pop %v728
  %v730 = vmul.f32 %v642, 1.442695
  %v731 = vpow.pop %v730
  %v732 = vmul.f32 %v643, 1.442695
  %v733 = vpow.pop %v732
  %v734 = vmul.f32 %v644, 1.442695
  %v735 = vpow.pop %v734
  %v736 = vmul.f32 %v645, 1.442695
  %v737 = vpow.pop %v736
  %v738 = vmul.f32 %v646, 1.442695
  %v739 = vpow.pop %v738
  %v740 = vmul.f32 %v647, 1.442695
  %v741 = vpow.pop %v740
  %v742 = vmul.f32 %v648, 1.442695
  %v743 = vpow.pop %v742
  %v744 = vmul.f32 %v649, 1.442695
  %v745 = vpow.pop %v744
  %v746 = vmul.f32 %v650, 1.442695
  %v747 = vpow.pop %v746
  %v748 = vmul.f32 %v651, 1.442695
  %v749 = vpow.pop %v748
  %v750 = vmul.f32 %v652, 1.442695
  %v751 = vpow.pop %v750
  %v752 = vmul.f32 %v653, 1.442695
  %v753 = vpow.pop %v752
  %v754 = vmul.f32 %v654, 1.442695
  %v755 = vpow.pop %v754
  %v756 = vmul.f32 %v655, 1.442695
  %v757 = vpow.pop %v756
  %v758 = vmul.f32 %v656, 1.442695
  %v759 = vpow.pop %v758
  %v760 = vmul.f32 %v657, 1.442695
  %v761 = vpow.pop %v760
  %v762 = vmul.f32 %v658, 1.442695
  %v763 = vpow.pop %v762
  %v764 = vmul.f32 %v659, 1.442695
  %v765 = vpow.pop %v764
  %v766 = vmul.f32 %v660, 1.442695
  %v767 = vpow.pop %v766
  %v768 = vmul.f32 %v661, 1.442695
  %v769 = vpow.pop %v768
  %v770 = vmul.f32 %v662, 1.442695
  %v771 = vpow.pop %v770
  %v772 = vmul.f32 %v663, 1.442695
  %v773 = vpow.pop %v772
  %v774 = vmul.f32 %v664, 1.442695
  %v775 = vpow.pop %v774
  %v776 = vmul.f32 %v665, 1.442695
  %v777 = vpow.pop %v776
  %v778 = vmul.f32 %v666, 1.442695
  %v779 = vpow.pop %v778
  %v780 = vmul.f32 %v667, 1.442695
  %v781 = vpow.pop %v780
  %v782 = vmul.f32 %v668, 1.442695
  %v783 = vpow.pop %v782
  %v784 = vmul.f32 %v669, 1.442695
  %v785 = vpow.pop %v784
  %v786 = vmul.f32 %v670, 1.442695
  %v787 = vpow.pop %v786
  %v788 = vmul.f32 %v671, 1.442695
  %v789 = vpow.pop %v788
  %v790 = vmul.f32 %v672, 1.442695
  %v791 = vpow.pop %v790
  %v792 = vmul.f32 %v673, 1.442695
  %v793 = vpow.pop %v792
  %v794 = vmul.f32 %v674, 1.442695
  %v795 = vpow.pop %v794
  %v796 = vmul.f32 %v675, 1.442695
  %v797 = vpow.pop %v796
  %v798 = vmul.f32 %v676, 1.442695
  %v799 = vpow.pop %v798
  %v800 = vmul.f32 %v677, 1.442695
  %v801 = vpow.pop %v800
  %v802 = vmul.f32 %v678, 1.442695
  %v803 = vpow.pop %v802
  %v804 = vmul.f32 %v679, 1.442695
  %v805 = vpow.pop %v804
  %v806 = vmul.f32 %v680, 1.442695
  %v807 = vpow.pop %v806
  %v808 = vmul.f32 %v681, 1.442695
  %v809 = vpow.pop %v808
  %v810 = vadd.f32 %v683, %v699
  %v811 = vadd.f32 %v810, %v715
  %v812 = vadd.f32 %v811, %v731
  %v813 = vadd.f32 %v812, %v747
  %v814 = vadd.f32 %v813, %v763
  %v815 = vadd.f32 %v814, %v779
  %v816 = vadd.f32 %v815, %v795
  %v817 = vadd.f32 %v685, %v701
  %v818 = vadd.f32 %v817, %v717
  %v819 = vadd.f32 %v818, %v733
  %v820 = vadd.f32 %v819, %v749
  %v821 = vadd.f32 %v820, %v765
  %v822 = vadd.f32 %v821, %v781
  %v823 = vadd.f32 %v822, %v797
  %v824 = vadd.f32 %v687, %v703
  %v825 = vadd.f32 %v824, %v719
  %v826 = vadd.f32 %v825, %v735
  %v827 = vadd.f32 %v826, %v751
  %v828 = vadd.f32 %v827, %v767
  %v829 = vadd.f32 %v828, %v783
  %v830 = vadd.f32 %v829, %v799
  %v831 = vadd.f32 %v689, %v705
  %v832 = vadd.f32 %v831, %v721
  %v833 = vadd.f32 %v832, %v737
  %v834 = vadd.f32 %v833, %v753
  %v835 = vadd.f32 %v834, %v769
  %v836 = vadd.f32 %v835, %v785
  %v837 = vadd.f32 %v836, %v801
  %v838 = vadd.f32 %v691, %v707
  %v839 = vadd.f32 %v838, %v723
  %v840 = vadd.f32 %v839, %v739
  %v841 = vadd.f32 %v840, %v755
  %v842 = vadd.f32 %v841, %v771
  %v843 = vadd.f32 %v842, %v787
  %v844 = vadd.f32 %v843, %v803
  %v845 = vadd.f32 %v693, %v709
  %v846 = vadd.f32 %v845, %v725
  %v847 = vadd.f32 %v846, %v741
  %v848 = vadd.f32 %v847, %v757
  %v849 = vadd.f32 %v848, %v773
  %v850 = vadd.f32 %v849, %v789
  %v851 = vadd.f32 %v850, %v805
  %v852 = vadd.f32 %v695, %v711
  %v853 = vadd.f32 %v852, %v727
  %v854 = vadd.f32 %v853, %v743
  %v855 = vadd.f32 %v854, %v759
  %v856 = vadd.f32 %v855, %v775
  %v857 = vadd.f32 %v856, %v791
  %v858 = vadd.f32 %v857, %v807
  %v859 = vadd.f32 %v697, %v713
  %v860 = vadd.f32 %v859, %v729
  %v861 = vadd.f32 %v860, %v745
  %v862 = vadd.f32 %v861, %v761
  %v863 = vadd.f32 %v862, %v777
  %v864 = vadd.f32 %v863, %v793
  %v865 = vadd.f32 %v864, %v809
  %v866 = vmul.f32 %v683, %v33
  %v867 = vmul.f32 %v683, %v34
  %v868 = vmul.f32 %v685, %v33
  %v869 = vmul.f32 %v685, %v34
  %v870 = vmul.f32 %v687, %v33
  %v871 = vmul.f32 %v687, %v34
  %v872 = vmul.f32 %v689, %v33
  %v873 = vmul.f32 %v689, %v34
  %v874 = vmul.f32 %v691, %v33
  %v875 = vmul.f32 %v691, %v34
  %v876 = vmul.f32 %v693, %v33
  %v877 = vmul.f32 %v693, %v34
  %v878 = vmul.f32 %v695, %v33
  %v879 = vmul.f32 %v695, %v34
  %v880 = vmul.f32 %v697, %v33
  %v881 = vmul.f32 %v697, %v34
  %v882 = vmul.f32 %v699, %v35
  %v883 = vmul.f32 %v699, %v36
  %v884 = vmul.f32 %v701, %v35
  %v885 = vmul.f32 %v701, %v36
  %v886 = vmul.f32 %v703, %v35
  %v887 = vmul.f32 %v703, %v36
  %v888 = vmul.f32 %v705, %v35
  %v889 = vmul.f32 %v705, %v36
  %v890 = vmul.f32 %v707, %v35
  %v891 = vmul.f32 %v707, %v36
  %v892 = vmul.f32 %v709, %v35
  %v893 = vmul.f32 %v709, %v36
  %v894 = vmul.f32 %v711, %v35
  %v895 = vmul.f32 %v711, %v36
  %v896 = vmul.f32 %v713, %v35
  %v897 = vmul.f32 %v713, %v36
  %v898 = vadd.f32 %v866, %v882
  %v899 = vadd.f32 %v867, %v883
  %v900 = vadd.f32 %v868, %v884
  %v901 = vadd.f32 %v869, %v885
  %v902 = vadd.f32 %v870, %v886
  %v903 = vadd.f32 %v871, %v887
  %v904 = vadd.f32 %v872, %v888
  %v905 = vadd.f32 %v873, %v889
  %v906 = vadd.f32 %v874, %v890
  %v907 = vadd.f32 %v875, %v891
  %v908 = vadd.f32 %v876, %v892
  %v909 = vadd.f32 %v877, %v893
  %v910 = vadd.f32 %v878, %v894
  %v911 = vadd.f32 %v879, %v895
  %v912 = vadd.f32 %v880, %v896
  %v913 = vadd.f32 %v881, %v897
  %v914 = vmul.f32 %v715, %v37
  %v915 = vmul.f32 %v715, %v38
  %v916 = vmul.f32 %v717, %v37
  %v917 = vmul.f32 %v717, %v38
  %v918 = vmul.f32 %v719, %v37
  %v919 = vmul.f32 %v719, %v38
  %v920 = vmul.f32 %v721, %v37
  %v921 = vmul.f32 %v721, %v38
  %v922 = vmul.f32 %v723, %v37
  %v923 = vmul.f32 %v723, %v38
  %v924 = vmul.f32 %v725, %v37
  %v925 = vmul.f32 %v725, %v38
  %v926 = vmul.f32 %v727, %v37
  %v927 = vmul.f32 %v727, %v38
  %v928 = vmul.f32 %v729, %v37
  %v929 = vmul.f32 %v729, %v38
  %v930 = vadd.f32 %v898, %v914
  %v931 = vadd.f32 %v899, %v915
  %v932 = vadd.f32 %v900, %v916
  %v933 = vadd.f32 %v901, %v917
  %v934 = vadd.f32 %v902, %v918
  %v935 = vadd.f32 %v903, %v919
  %v936 = vadd.f32 %v904, %v920
  %v937 = vadd.f32 %v905, %v921
  %v938 = vadd.f32 %v906, %v922
  %v939 = vadd.f32 %v907, %v923
  %v940 = vadd.f32 %v908, %v924
  %v941 = vadd.f32 %v909, %v925
  %v942 = vadd.f32 %v910, %v926
  %v943 = vadd.f32 %v911, %v927
  %v944 = vadd.f32 %v912, %v928
  %v945 = vadd.f32 %v913, %v929
  %v946 = vmul.f32 %v731, %v39
  %v947 = vmul.f32 %v731, %v40
  %v948 = vmul.f32 %v733, %v39
  %v949 = vmul.f32 %v733, %v40
  %v950 = vmul.f32 %v735, %v39
  %v951 = vmul.f32 %v735, %v40
  %v952 = vmul.f32 %v737, %v39
  %v953 = vmul.f32 %v737, %v40
  %v954 = vmul.f32 %v739, %v39
  %v955 = vmul.f32 %v739, %v40
  %v956 = vmul.f32 %v741, %v39
  %v957 = vmul.f32 %v741, %v40
  %v958 = vmul.f32 %v743, %v39
  %v959 = vmul.f32 %v743, %v40
  %v960 = vmul.f32 %v745, %v39
  %v961 = vmul.f32 %v745, %v40
  %v962 = vadd.f32 %v930, %v946
  %v963 = vadd.f32 %v931, %v947
  %v964 = vadd.f32 %v932, %v948
  %v965 = vadd.f32 %v933, %v949
  %v966 = vadd.f32 %v934, %v950
  %v967 = vadd.f32 %v935, %v951
  %v968 = vadd.f32 %v936, %v952
  %v969 = vadd.f32 %v937, %v953
  %v970 = vadd.f32 %v938, %v954
  %v971 = vadd.f32 %v939, %v955
  %v972 = vadd.f32 %v940, %v956
  %v973 = vadd.f32 %v941, %v957
  %v974 = vadd.f32 %v942, %v958
  %v975 = vadd.f32 %v943, %v959
  %v976 = vadd.f32 %v944, %v960
  %v977 = vadd.f32 %v945, %v961
  %v978 = vmul.f32 %v747, %v41
  %v979 = vmul.f32 %v747, %v42
  %v980 = vmul.f32 %v749, %v41
  %v981 = vmul.f32 %v749, %v42
  %v982 = vmul.f32 %v751, %v41
  %v983 = vmul.f32 %v751, %v42
  %v984 = vmul.f32 %v753, %v41
  %v985 = vmul.f32 %v753, %v42
  %v986 = vmul.f32 %v755, %v41
  %v987 = vmul.f32 %v755, %v42
  %v988 = vmul.f32 %v757, %v41
  %v989 = vmul.f32 %v757, %v42
  %v990 = vmul.f32 %v759, %v41
  %v991 = vmul.f32 %v759, %v42
  %v992 = vmul.f32 %v761, %v41
  %v993 = vmul.f32 %v761, %v42
  %v994 = vadd.f32 %v962, %v978
  %v995 = vadd.f32 %v963, %v979
  %v996 = vadd.f32 %v964, %v980
  %v997 = vadd.f32 %v965, %v981
  %v998 = vadd.f32 %v966, %v982
  %v999 = vadd.f32 %v967, %v983
  %v1000 = vadd.f32 %v968, %v984
  %v1001 = vadd.f32 %v969, %v985
  %v1002 = vadd.f32 %v970, %v986
  %v1003 = vadd.f32 %v971, %v987
  %v1004 = vadd.f32 %v972, %v988
  %v1005 = vadd.f32 %v973, %v989
  %v1006 = vadd.f32 %v974, %v990
  %v1007 = vadd.f32 %v975, %v991
  %v1008 = vadd.f32 %v976, %v992
  %v1009 = vadd.f32 %v977, %v993
  %v1010 = vmul.f32 %v763, %v43
  %v1011 = vmul.f32 %v763, %v44
  %v1012 = vmul.f32 %v765, %v43
  %v1013 = vmul.f32 %v765, %v44
  %v1014 = vmul.f32 %v767, %v43
  %v1015 = vmul.f32 %v767, %v44
  %v1016 = vmul.f32 %v769, %v43
  %v1017 = vmul.f32 %v769, %v44
  %v1018 = vmul.f32 %v771, %v43
  %v1019 = vmul.f32 %v771, %v44
  %v1020 = vmul.f32 %v773, %v43
  %v1021 = vmul.f32 %v773, %v44
  %v1022 = vmul.f32 %v775, %v43
  %v1023 = vmul.f32 %v775, %v44
  %v1024 = vmul.f32 %v777, %v43
  %v1025 = vmul.f32 %v777, %v44
  %v1026 = vadd.f32 %v994, %v1010
  %v1027 = vadd.f32 %v995, %v1011
  %v1028 = vadd.f32 %v996, %v1012
  %v1029 = vadd.f32 %v997, %v1013
  %v1030 = vadd.f32 %v998, %v1014
  %v1031 = vadd.f32 %v999, %v1015
  %v1032 = vadd.f32 %v1000, %v1016
  %v1033 = vadd.f32 %v1001, %v1017
  %v1034 = vadd.f32 %v1002, %v1018
  %v1035 = vadd.f32 %v1003, %v1019
  %v1036 = vadd.f32 %v1004, %v1020
  %v1037 = vadd.f32 %v1005, %v1021
  %v1038 = vadd.f32 %v1006, %v1022
  %v1039 = vadd.f32 %v1007, %v1023
  %v1040 = vadd.f32 %v1008, %v1024
  %v1041 = vadd.f32 %v1009, %v1025
  %v1042 = vmul.f32 %v779, %v45
  %v1043 = vmul.f32 %v779, %v46
  %v1044 = vmul.f32 %v781, %v45
  %v1045 = vmul.f32 %v781, %v46
  %v1046 = vmul.f32 %v783, %v45
  %v1047 = vmul.f32 %v783, %v46
  %v1048 = vmul.f32 %v785, %v45
  %v1049 = vmul.f32 %v785, %v46
  %v1050 = vmul.f32 %v787, %v45
  %v1051 = vmul.f32 %v787, %v46
  %v1052 = vmul.f32 %v789, %v45
  %v1053 = vmul.f32 %v789, %v46
  %v1054 = vmul.f32 %v791, %v45
  %v1055 = vmul.f32 %v791, %v46
  %v1056 = vmul.f32 %v793, %v45
  %v1057 = vmul.f32 %v793, %v46
  %v1058 = vadd.f32 %v1026, %v1042
  %v1059 = vadd.f32 %v1027, %v1043
  %v1060 = vadd.f32 %v1028, %v1044
  %v1061 = vadd.f32 %v1029, %v1045
  %v1062 = vadd.f32 %v1030, %v1046
  %v1063 = vadd.f32 %v1031, %v1047
  %v1064 = vadd.f32 %v1032, %v1048
  %v1065 = vadd.f32 %v1033, %v1049
  %v1066 = vadd.f32 %v1034, %v1050
  %v1067 = vadd.f32 %v1035, %v1051
  %v1068 = vadd.f32 %v1036, %v1052
  %v1069 = vadd.f32 %v1037, %v1053
  %v1070 = vadd.f32 %v1038, %v1054
  %v1071 = vadd.f32 %v1039, %v1055
  %v1072 = vadd.f32 %v1040, %v1056
  %v1073 = vadd.f32 %v1041, %v1057
  %v1074 = vmul.f32 %v795, %v47
  %v1075 = vmul.f32 %v795, %v48
  %v1076 = vmul.f32 %v797, %v47
  %v1077 = vmul.f32 %v797, %v48
  %v1078 = vmul.f32 %v799, %v47
  %v1079 = vmul.f32 %v799, %v48
  %v1080 = vmul.f32 %v801, %v47
  %v1081 = vmul.f32 %v801, %v48
  %v1082 = vmul.f32 %v803, %v47
  %v1083 = vmul.f32 %v803, %v48
  %v1084 = vmul.f32 %v805, %v47
  %v1085 = vmul.f32 %v805, %v48
  %v1086 = vmul.f32 %v807, %v47
  %v1087 = vmul.f32 %v807, %v48
  %v1088 = vmul.f32 %v809, %v47
  %v1089 = vmul.f32 %v809, %v48
  %v1090 = vadd.f32 %v1058, %v1074
  %v1091 = vadd.f32 %v1059, %v1075
  %v1092 = vadd.f32 %v1060, %v1076
  %v1093 = vadd.f32 %v1061, %v1077
  %v1094 = vadd.f32 %v1062, %v1078
  %v1095 = vadd.f32 %v1063, %v1079
  %v1096 = vadd.f32 %v1064, %v1080
  %v1097 = vadd.f32 %v1065, %v1081
  %v1098 = vadd.f32 %v1066, %v1082
  %v1099 = vadd.f32 %v1067, %v1083
  %v1100 = vadd.f32 %v1068, %v1084
  %v1101 = vadd.f32 %v1069, %v1085
  %v1102 = vadd.f32 %v1070, %v1086
  %v1103 = vadd.f32 %v1071, %v1087
  %v1104 = vadd.f32 %v1072, %v1088
  %v1105 = vadd.f32 %v1073, %v1089
  %1106 = vst [vmem:[%s3] sm:$0xff] %v1090
  %1107 = vst [vmem:[%s3 + $0x8] sm:$0xff] %v1091
  %1108 = vst [vmem:[%s3 + $0x10] sm:$0xff] %v1092
  %1109 = vst [vmem:[%s3 + $0x18] sm:$0xff] %v1093
  %1110 = vst [vmem:[%s3 + $0x20] sm:$0xff] %v1094
  %1111 = vst [vmem:[%s3 + $0x28] sm:$0xff] %v1095
  %1112 = vst [vmem:[%s3 + $0x30] sm:$0xff] %v1096
  %1113 = vst [vmem:[%s3 + $0x38] sm:$0xff] %v1097
  %1114 = vst [vmem:[%s3 + $0x40] sm:$0xff] %v1098
  %1115 = vst [vmem:[%s3 + $0x48] sm:$0xff] %v1099
  %1116 = vst [vmem:[%s3 + $0x50] sm:$0xff] %v1100
  %1117 = vst [vmem:[%s3 + $0x58] sm:$0xff] %v1101
  %1118 = vst [vmem:[%s3 + $0x60] sm:$0xff] %v1102
  %1119 = vst [vmem:[%s3 + $0x68] sm:$0xff] %v1103
  %1120 = vst [vmem:[%s3 + $0x70] sm:$0xff] %v1104
  %1121 = vst [vmem:[%s3 + $0x78] sm:$0xff] %v1105
  %1122 = vst [vmem:[%s4] sm:$0x1] %v568
  %1123 = vst [vmem:[%s4 + $0x1] sm:$0x1] %v575
  %1124 = vst [vmem:[%s4 + $0x2] sm:$0x1] %v582
  %1125 = vst [vmem:[%s4 + $0x3] sm:$0x1] %v589
  %1126 = vst [vmem:[%s4 + $0x4] sm:$0x1] %v596
  %1127 = vst [vmem:[%s4 + $0x5] sm:$0x1] %v603
  %1128 = vst [vmem:[%s4 + $0x6] sm:$0x1] %v610
  %1129 = vst [vmem:[%s4 + $0x7] sm:$0x1] %v617
  %1130 = vst [vmem:[%s5] sm:$0x1] %v816
  %1131 = vst [vmem:[%s5 + $0x1] sm:$0x1] %v823
  %1132 = vst [vmem:[%s5 + $0x2] sm:$0x1] %v830
  %1133 = vst [vmem:[%s5 + $0x3] sm:$0x1] %v837
  %1134 = vst [vmem:[%s5 + $0x4] sm:$0x1] %v844
  %1135 = vst [vmem:[%s5 + $0x5] sm:$0x1] %v851
  %1136 = vst [vmem:[%s5 + $0x6] sm:$0x1] %v858
  %1137 = vst [vmem:[%s5 + $0x7] sm:$0x1] %v865
  // Predicated region
  $region14: #{sia_forward.7} parent=0 // pred_check
    _
  $region15: #{sia_forward.7} parent=0 // pred_check_branch
    %1139 = sbr.rel (0) target = $region17
  $region16: #{sia_forward.7} parent=0 // pred_region
    _
  $region17: #{sia_forward.7} parent=0 // pred_fallthru
    _
  // Predicated region
  $region18: #{sia_forward.7} parent=0 // pred_check
    _
  $region19: #{sia_forward.7} parent=0 // pred_check_branch
    %1141 = sbr.rel (0) target = $region21
  $region20: #{sia_forward.7} parent=0 // pred_region
    _
  $region21: #{sia_forward.7} parent=0 // pred_fallthru
    _
  // Predicated region
  $region22: #{sia_forward.7} parent=0 // pred_check
    _
  $region23: #{sia_forward.7} parent=0 // pred_check_branch
    %1143 = sbr.rel (0) target = $region25
  $region24: #{sia_forward.7} parent=0 // pred_region
    _
  $region25: #{sia_forward.7} parent=0 // pred_fallthru
    _
  // Predicated region
  $region26: #{sia_forward.7} parent=0 // pred_check
    _
  $region27: #{sia_forward.7} parent=0 // pred_check_branch
    %1145 = sbr.rel (0) target = $region29
  $region28: #{sia_forward.7} parent=0 // pred_region
    _
  $region29: #{sia_forward.7} parent=0 // pred_fallthru
    _
  // Predicated region
  $region30: #{sia_forward.7} parent=0 // pred_check
    _
  $region31: #{sia_forward.7} parent=0 // pred_check_branch
    %1147 = sbr.rel (0) target = $region33
  $region32: #{sia_forward.7} parent=0 // pred_region
    _
  $region33: #{sia_forward.7} parent=0 // pred_fallthru
    _
  // Predicated region
  $region34: #{sia_forward.7} parent=0 // pred_check
    _
  $region35: #{sia_forward.7} parent=0 // pred_check_branch
    %1149 = sbr.rel (0) target = $region37
  $region36: #{sia_forward.7} parent=0 // pred_region
    _
  $region37: #{sia_forward.7} parent=0 // pred_fallthru
    _

// kernel: sia_forward.9
$region0: #{sia_forward.9}
  #allocation0 [shape = 'u32[]', space=smem, size = 0x4, offset = 0x4, fixed_abs, tag = 'smem constant byte address 0x4 - core index']
  #allocation1 [shape = 'u32[144,128]{1,0:T(1,128)}', space=vmem, size = 0x12000, scoped, tag = 'internal scratch']
  #allocation2 [shape = 'f32[1,1]{1,0:T(1,128)S(6)}', space=smem, size = 0x200, scoped, tag = 'scoped memory for sia_forward.9']
  %s0 = inlined_call_operand.vmem [shape: f32[2,16,512], index: 0, kind: input, shape index: {}]
  %s1 = inlined_call_operand.vmem [shape: f32[2,16,512], index: 1, kind: input, shape index: {}]
  %s2 = inlined_call_operand.vmem [shape: f32[2,16,512], index: 2, kind: input, shape index: {}]
  %s3 = inlined_call_operand.vmem [shape: f32[2,16,512], index: 3, kind: input, shape index: {}]
  %s4 = inlined_call_operand.vmem [shape: f32[2,1,512], index: 4, kind: input, shape index: {}]
  %s5 = inlined_call_operand.vmem [shape: f32[2,1,512], index: 5, kind: input, shape index: {}]
  %s6 = inlined_call_operand.vmem [shape: f32[2,1,512], index: 6, kind: input, shape index: {}]
  %s7 = inlined_call_operand.vmem [shape: f32[2,1,512], index: 7, kind: input, shape index: {}]
  %s8 = inlined_call_operand.vmem [shape: f32[2,1,512], index: 8, kind: input, shape index: {}]
  %s9 = inlined_call_operand.vmem [shape: f32[2,1,512], index: 9, kind: input, shape index: {}]
  %s10 = inlined_call_operand.<no memory space> [shape: f32[1,1], index: 10, kind: input, shape index: {}]
  %s11 = inlined_call_operand.vmem [shape: f32[2,16,512], index: 11, kind: output, shape index: {}]
  %s12 = sld [smem:[#allocation0]]
  $region77: #{sia_forward.9} parent=0
    _
  %s14 = ssub.s32 1, %s12
  %s15 = scalar_select 0, %s14, %s12
  %16 = sst [smem:[#allocation2]] %s10
  loop: start=0, step=1, limit=4
  $region2: #{sia_forward.9} parent=0 // loop_pre_header
    _
  $region3: #{sia_forward.9} parent=0 // loop_header
    %s18 = sphi 0, %s22
    %p19 = scmp.ge.s32.totalorder %s18, 4
    %s25 = sphi 0, %s37
    %s26 = sphi 0, %s33
    %s27 = sphi 0, %s25
    %s28 = sphi 0, %s26
    %s29 = sphi 0, %s27
    %s30 = sphi 0, %s28
    %s42 = sphi 0, %s44
    %s45 = sphi 0, %s42
    %s46 = sphi 0, %s45
    %s62 = sphi 0, %s46
    %s70 = sphi 0, %s72
    %s73 = sphi 0, %s70
    %s74 = sphi 0, %s73
    %s90 = sphi 0, %s74
    %s98 = sphi 0, %s100
    %s101 = sphi 0, %s98
    %s102 = sphi 0, %s101
    %s118 = sphi 0, %s102
    %s126 = sphi 0, %s128
    %s129 = sphi 0, %s126
    %s130 = sphi 0, %s129
    %s146 = sphi 0, %s130
    %s154 = sphi 0, %s156
    %s157 = sphi 0, %s154
    %s158 = sphi 0, %s157
    %s174 = sphi 0, %s158
    %s182 = sphi 0, %s184
    %s185 = sphi 0, %s182
    %s186 = sphi 0, %s185
    %s202 = sphi 0, %s186
    %s210 = sphi 0, %s212
    %s213 = sphi 0, %s210
    %s214 = sphi 0, %s213
    %s230 = sphi 0, %s214
    %s238 = sphi 0, %s240
    %s241 = sphi 0, %s238
    %s242 = sphi 0, %s241
    %s258 = sphi 0, %s242
    %s266 = sphi 0, %s268
    %s269 = sphi 0, %s266
    %s270 = sphi 0, %s269
    %s286 = sphi 0, %s270
    %s294 = sphi 0, %s296
    %s297 = sphi 0, %s294
    %s298 = sphi 0, %s297
    %s314 = sphi 0, %s298
    %s318 = sphi 0, %s318
    %s320 = sphi 0, %s318
    %s321 = sphi 0, %s320
    %s335 = sphi 0, %s321
    %s343 = sphi 0, %s345
    %s346 = sphi 0, %s343
    %s347 = sphi 0, %s346
    %s363 = sphi 0, %s347
  $region4: #{sia_forward.9} parent=0 // loop_header_branch
    %21 = sbr.rel (%p19) target = $region8
  $region5: #{sia_forward.9} parent=0 // loop_body
    %s23 = ssub.s32 %s18, 1
    %s24 = ssub.s32 %s18, 2
    %s31 = sadd.s32 1, %s26
    %p32 = scmp.ge.s32.totalorder %s31, 1
    %s33 = scalar_select %p32, 0, %s31
    %s34 = sadd.s32 1, %s25
    %s35 = scalar_select %p32, %s34, %s25
    %p36 = scmp.ge.s32.totalorder %s35, 2
    %s37 = scalar_select %p36, 0, %s35
    %s38 = ssub.s32 %s25, %s37
    %s39 = ssub.s32 %s26, %s33
    %s40 = sor.u32 %s38, %s39
    %p41 = scmp.eq.s32.totalorder %s40, 0
    %s43 = sadd.s32 %s42, 1
    %s44 = scalar_select %p41, %s42, %s43
    %p47 = pneg %p41
    %p48 = scmp.eq.s32.totalorder %s18, 1
    %p49 = por %p47, %p48
    %p50 = scmp.ne.s32.totalorder %s42, %s45
    %p51 = scmp.eq.s32.totalorder %s18, 0
    %p52 = por %p50, %p51
    %p53 = scmp.ne.s32.totalorder %s42, %s45
    %p54 = scmp.eq.s32.totalorder %s23, 1
    %p55 = por %p53, %p54
    %p56 = scmp.ne.s32.totalorder %s45, %s46
    %p57 = scmp.eq.s32.totalorder %s23, 0
    %p58 = por %p56, %p57
    %p59 = scmp.ne.s32.totalorder %s45, %s46
    %p60 = scmp.eq.s32.totalorder %s24, 1
    %p61 = por %p59, %p60
    %p63 = scmp.ne.s32.totalorder %s46, %s62
    %p64 = scmp.eq.s32.totalorder %s24, 0
    %p65 = por %p63, %p64
    %s66 = ssub.s32 %s25, %s37
    %s67 = ssub.s32 %s26, %s33
    %s68 = sor.u32 %s66, %s67
    %p69 = scmp.eq.s32.totalorder %s68, 0
    %s71 = sadd.s32 %s70, 1
    %s72 = scalar_select %p69, %s70, %s71
    %p75 = pneg %p69
    %p76 = scmp.eq.s32.totalorder %s18, 1
    %p77 = por %p75, %p76
    %p78 = scmp.ne.s32.totalorder %s70, %s73
    %p79 = scmp.eq.s32.totalorder %s18, 0
    %p80 = por %p78, %p79
    %p81 = scmp.ne.s32.totalorder %s70, %s73
    %p82 = scmp.eq.s32.totalorder %s23, 1
    %p83 = por %p81, %p82
    %p84 = scmp.ne.s32.totalorder %s73, %s74
    %p85 = scmp.eq.s32.totalorder %s23, 0
    %p86 = por %p84, %p85
    %p87 = scmp.ne.s32.totalorder %s73, %s74
    %p88 = scmp.eq.s32.totalorder %s24, 1
    %p89 = por %p87, %p88
    %p91 = scmp.ne.s32.totalorder %s74, %s90
    %p92 = scmp.eq.s32.totalorder %s24, 0
    %p93 = por %p91, %p92
    %s94 = ssub.s32 %s25, %s37
    %s95 = ssub.s32 %s26, %s33
    %s96 = sor.u32 %s94, %s95
    %p97 = scmp.eq.s32.totalorder %s96, 0
    %s99 = sadd.s32 %s98, 1
    %s100 = scalar_select %p97, %s98, %s99
    %p103 = pneg %p97
    %p104 = scmp.eq.s32.totalorder %s18, 1
    %p105 = por %p103, %p104
    %p106 = scmp.ne.s32.totalorder %s98, %s101
    %p107 = scmp.eq.s32.totalorder %s18, 0
    %p108 = por %p106, %p107
    %p109 = scmp.ne.s32.totalorder %s98, %s101
    %p110 = scmp.eq.s32.totalorder %s23, 1
    %p111 = por %p109, %p110
    %p112 = scmp.ne.s32.totalorder %s101, %s102
    %p113 = scmp.eq.s32.totalorder %s23, 0
    %p114 = por %p112, %p113
    %p115 = scmp.ne.s32.totalorder %s101, %s102
    %p116 = scmp.eq.s32.totalorder %s24, 1
    %p117 = por %p115, %p116
    %p119 = scmp.ne.s32.totalorder %s102, %s118
    %p120 = scmp.eq.s32.totalorder %s24, 0
    %p121 = por %p119, %p120
    %s122 = ssub.s32 %s25, %s37
    %s123 = ssub.s32 %s26, %s33
    %s124 = sor.u32 %s122, %s123
    %p125 = scmp.eq.s32.totalorder %s124, 0
    %s127 = sadd.s32 %s126, 1
    %s128 = scalar_select %p125, %s126, %s127
    %p131 = pneg %p125
    %p132 = scmp.eq.s32.totalorder %s18, 1
    %p133 = por %p131, %p132
    %p134 = scmp.ne.s32.totalorder %s126, %s129
    %p135 = scmp.eq.s32.totalorder %s18, 0
    %p136 = por %p134, %p135
    %p137 = scmp.ne.s32.totalorder %s126, %s129
    %p138 = scmp.eq.s32.totalorder %s23, 1
    %p139 = por %p137, %p138
    %p140 = scmp.ne.s32.totalorder %s129, %s130
    %p141 = scmp.eq.s32.totalorder %s23, 0
    %p142 = por %p140, %p141
    %p143 = scmp.ne.s32.totalorder %s129, %s130
    %p144 = scmp.eq.s32.totalorder %s24, 1
    %p145 = por %p143, %p144
    %p147 = scmp.ne.s32.totalorder %s130, %s146
    %p148 = scmp.eq.s32.totalorder %s24, 0
    %p149 = por %p147, %p148
    %s150 = ssub.s32 %s25, %s37
    %s151 = ssub.s32 %s26, %s33
    %s152 = sor.u32 %s150, %s151
    %p153 = scmp.eq.s32.totalorder %s152, 0
    %s155 = sadd.s32 %s154, 1
    %s156 = scalar_select %p153, %s154, %s155
    %p159 = pneg %p153
    %p160 = scmp.eq.s32.totalorder %s18, 1
    %p161 = por %p159, %p160
    %p162 = scmp.ne.s32.totalorder %s154, %s157
    %p163 = scmp.eq.s32.totalorder %s18, 0
    %p164 = por %p162, %p163
    %p165 = scmp.ne.s32.totalorder %s154, %s157
    %p166 = scmp.eq.s32.totalorder %s23, 1
    %p167 = por %p165, %p166
    %p168 = scmp.ne.s32.totalorder %s157, %s158
    %p169 = scmp.eq.s32.totalorder %s23, 0
    %p170 = por %p168, %p169
    %p171 = scmp.ne.s32.totalorder %s157, %s158
    %p172 = scmp.eq.s32.totalorder %s24, 1
    %p173 = por %p171, %p172
    %p175 = scmp.ne.s32.totalorder %s158, %s174
    %p176 = scmp.eq.s32.totalorder %s24, 0
    %p177 = por %p175, %p176
    %s178 = ssub.s32 %s25, %s37
    %s179 = ssub.s32 %s26, %s33
    %s180 = sor.u32 %s178, %s179
    %p181 = scmp.eq.s32.totalorder %s180, 0
    %s183 = sadd.s32 %s182, 1
    %s184 = scalar_select %p181, %s182, %s183
    %p187 = pneg %p181
    %p188 = scmp.eq.s32.totalorder %s18, 1
    %p189 = por %p187, %p188
    %p190 = scmp.ne.s32.totalorder %s182, %s185
    %p191 = scmp.eq.s32.totalorder %s18, 0
    %p192 = por %p190, %p191
    %p193 = scmp.ne.s32.totalorder %s182, %s185
    %p194 = scmp.eq.s32.totalorder %s23, 1
    %p195 = por %p193, %p194
    %p196 = scmp.ne.s32.totalorder %s185, %s186
    %p197 = scmp.eq.s32.totalorder %s23, 0
    %p198 = por %p196, %p197
    %p199 = scmp.ne.s32.totalorder %s185, %s186
    %p200 = scmp.eq.s32.totalorder %s24, 1
    %p201 = por %p199, %p200
    %p203 = scmp.ne.s32.totalorder %s186, %s202
    %p204 = scmp.eq.s32.totalorder %s24, 0
    %p205 = por %p203, %p204
    %s206 = ssub.s32 %s25, %s37
    %s207 = ssub.s32 %s26, %s33
    %s208 = sor.u32 %s206, %s207
    %p209 = scmp.eq.s32.totalorder %s208, 0
    %s211 = sadd.s32 %s210, 1
    %s212 = scalar_select %p209, %s210, %s211
    %p215 = pneg %p209
    %p216 = scmp.eq.s32.totalorder %s18, 1
    %p217 = por %p215, %p216
    %p218 = scmp.ne.s32.totalorder %s210, %s213
    %p219 = scmp.eq.s32.totalorder %s18, 0
    %p220 = por %p218, %p219
    %p221 = scmp.ne.s32.totalorder %s210, %s213
    %p222 = scmp.eq.s32.totalorder %s23, 1
    %p223 = por %p221, %p222
    %p224 = scmp.ne.s32.totalorder %s213, %s214
    %p225 = scmp.eq.s32.totalorder %s23, 0
    %p226 = por %p224, %p225
    %p227 = scmp.ne.s32.totalorder %s213, %s214
    %p228 = scmp.eq.s32.totalorder %s24, 1
    %p229 = por %p227, %p228
    %p231 = scmp.ne.s32.totalorder %s214, %s230
    %p232 = scmp.eq.s32.totalorder %s24, 0
    %p233 = por %p231, %p232
    %s234 = ssub.s32 %s25, %s37
    %s235 = ssub.s32 %s26, %s33
    %s236 = sor.u32 %s234, %s235
    %p237 = scmp.eq.s32.totalorder %s236, 0
    %s239 = sadd.s32 %s238, 1
    %s240 = scalar_select %p237, %s238, %s239
    %p243 = pneg %p237
    %p244 = scmp.eq.s32.totalorder %s18, 1
    %p245 = por %p243, %p244
    %p246 = scmp.ne.s32.totalorder %s238, %s241
    %p247 = scmp.eq.s32.totalorder %s18, 0
    %p248 = por %p246, %p247
    %p249 = scmp.ne.s32.totalorder %s238, %s241
    %p250 = scmp.eq.s32.totalorder %s23, 1
    %p251 = por %p249, %p250
    %p252 = scmp.ne.s32.totalorder %s241, %s242
    %p253 = scmp.eq.s32.totalorder %s23, 0
    %p254 = por %p252, %p253
    %p255 = scmp.ne.s32.totalorder %s241, %s242
    %p256 = scmp.eq.s32.totalorder %s24, 1
    %p257 = por %p255, %p256
    %p259 = scmp.ne.s32.totalorder %s242, %s258
    %p260 = scmp.eq.s32.totalorder %s24, 0
    %p261 = por %p259, %p260
    %s262 = ssub.s32 %s25, %s37
    %s263 = ssub.s32 %s26, %s33
    %s264 = sor.u32 %s262, %s263
    %p265 = scmp.eq.s32.totalorder %s264, 0
    %s267 = sadd.s32 %s266, 1
    %s268 = scalar_select %p265, %s266, %s267
    %p271 = pneg %p265
    %p272 = scmp.eq.s32.totalorder %s18, 1
    %p273 = por %p271, %p272
    %p274 = scmp.ne.s32.totalorder %s266, %s269
    %p275 = scmp.eq.s32.totalorder %s18, 0
    %p276 = por %p274, %p275
    %p277 = scmp.ne.s32.totalorder %s266, %s269
    %p278 = scmp.eq.s32.totalorder %s23, 1
    %p279 = por %p277, %p278
    %p280 = scmp.ne.s32.totalorder %s269, %s270
    %p281 = scmp.eq.s32.totalorder %s23, 0
    %p282 = por %p280, %p281
    %p283 = scmp.ne.s32.totalorder %s269, %s270
    %p284 = scmp.eq.s32.totalorder %s24, 1
    %p285 = por %p283, %p284
    %p287 = scmp.ne.s32.totalorder %s270, %s286
    %p288 = scmp.eq.s32.totalorder %s24, 0
    %p289 = por %p287, %p288
    %s290 = ssub.s32 %s25, %s37
    %s291 = ssub.s32 %s26, %s33
    %s292 = sor.u32 %s290, %s291
    %p293 = scmp.eq.s32.totalorder %s292, 0
    %s295 = sadd.s32 %s294, 1
    %s296 = scalar_select %p293, %s294, %s295
    %p299 = pneg %p293
    %p300 = scmp.eq.s32.totalorder %s18, 1
    %p301 = por %p299, %p300
    %p302 = scmp.ne.s32.totalorder %s294, %s297
    %p303 = scmp.eq.s32.totalorder %s18, 0
    %p304 = por %p302, %p303
    %p305 = scmp.ne.s32.totalorder %s294, %s297
    %p306 = scmp.eq.s32.totalorder %s23, 1
    %p307 = por %p305, %p306
    %p308 = scmp.ne.s32.totalorder %s297, %s298
    %p309 = scmp.eq.s32.totalorder %s23, 0
    %p310 = por %p308, %p309
    %p311 = scmp.ne.s32.totalorder %s297, %s298
    %p312 = scmp.eq.s32.totalorder %s24, 1
    %p313 = por %p311, %p312
    %p315 = scmp.ne.s32.totalorder %s298, %s314
    %p316 = scmp.eq.s32.totalorder %s24, 0
    %p317 = por %p315, %p316
    %s319 = sadd.s32 %s318, 1
    %p322 = scmp.eq.s32.totalorder %s18, 1
    %p323 = scmp.ne.s32.totalorder %s318, %s320
    %p324 = scmp.eq.s32.totalorder %s18, 0
    %p325 = por %p323, %p324
    %p326 = scmp.ne.s32.totalorder %s318, %s320
    %p327 = scmp.eq.s32.totalorder %s23, 1
    %p328 = por %p326, %p327
    %p329 = scmp.ne.s32.totalorder %s320, %s321
    %p330 = scmp.eq.s32.totalorder %s23, 0
    %p331 = por %p329, %p330
    %p332 = scmp.ne.s32.totalorder %s320, %s321
    %p333 = scmp.eq.s32.totalorder %s24, 1
    %p334 = por %p332, %p333
    %p336 = scmp.ne.s32.totalorder %s321, %s335
    %p337 = scmp.eq.s32.totalorder %s24, 0
    %p338 = por %p336, %p337
    %s339 = ssub.s32 %s25, %s37
    %s340 = ssub.s32 %s26, %s33
    %s341 = sor.u32 %s339, %s340
    %p342 = scmp.eq.s32.totalorder %s341, 0
    %s344 = sadd.s32 %s343, 1
    %s345 = scalar_select %p342, %s343, %s344
    %p348 = pneg %p342
    %p349 = scmp.eq.s32.totalorder %s18, 1
    %p350 = por %p348, %p349
    %p351 = scmp.ne.s32.totalorder %s343, %s346
    %p352 = scmp.eq.s32.totalorder %s18, 0
    %p353 = por %p351, %p352
    %p354 = scmp.ne.s32.totalorder %s343, %s346
    %p355 = scmp.eq.s32.totalorder %s23, 1
    %p356 = por %p354, %p355
    %p357 = scmp.ne.s32.totalorder %s346, %s347
    %p358 = scmp.eq.s32.totalorder %s23, 0
    %p359 = por %p357, %p358
    %p360 = scmp.ne.s32.totalorder %s346, %s347
    %p361 = scmp.eq.s32.totalorder %s24, 1
    %p362 = por %p360, %p361
    %p364 = scmp.ne.s32.totalorder %s347, %s363
    %p365 = scmp.eq.s32.totalorder %s24, 0
    %p366 = por %p364, %p365
    %p367 = scmp.le.s32.totalorder 1, %s18
    %p368 = scmp.lt.s32.totalorder %s18, 3
    %p369 = pnand %p367, %p368
    %p370 = pneg %p369
    // Predicated region
    $region9: #{sia_forward.9} parent=5 // pred_check
      _
    $region10: #{sia_forward.9} parent=5 // pred_check_branch
      %372 = sbr.rel (%p369) target = $region12
    $region11: #{sia_forward.9} parent=5 // pred_region
      %s373 = ssub.s32 %s18, 1
      // Predicated region
      $region13: #{sia_forward.9} parent=11 // pred_check
        %p374 = pneg %p331
      $region14: #{sia_forward.9} parent=11 // pred_check_branch
        %376 = sbr.rel (%p374) target = $region16
      $region15: #{sia_forward.9} parent=11 // pred_region
        _
      $region16: #{sia_forward.9} parent=11 // pred_fallthru
        _
    $region12: #{sia_forward.9} parent=5 // pred_fallthru
      _
    %p377 = scmp.lt.s32.totalorder %s18, 2
    // Predicated region
    $region17: #{sia_forward.9} parent=5 // pred_check
      %p378 = pneg %p377
    $region18: #{sia_forward.9} parent=5 // pred_check_branch
      %380 = sbr.rel (%p378) target = $region20
    $region19: #{sia_forward.9} parent=5 // pred_region
      // Predicated region
      $region21: #{sia_forward.9} parent=19 // pred_check
        %p381 = pneg %p52
      $region22: #{sia_forward.9} parent=19 // pred_check_branch
        %383 = sbr.rel (%p381) target = $region24
      $region23: #{sia_forward.9} parent=19 // pred_region
        %s384 = smul.u32 4, %s26
        %p385 = scmp.lt.s32.totalorder %s25, 1
        %s386 = scalar_select %p385, %s25, 1
        %p387 = scmp.lt.s32.totalorder %s384, 3
        %s388 = scalar_select %p387, %s384, 3
        %s389 = smul.addr %s386, 8
        %s390 = sadd.s32 %s388, %s389
        %s391 = smul.addr %s390, 8
        %s392 = scalar_lea.vmem %s0, %s391
        %s393 = smul.u32 4, %s26
      $region24: #{sia_forward.9} parent=19 // pred_fallthru
        _
      // Predicated region
      $region25: #{sia_forward.9} parent=19 // pred_check
        %p394 = pneg %p80
      $region26: #{sia_forward.9} parent=19 // pred_check_branch
        %396 = sbr.rel (%p394) target = $region28
      $region27: #{sia_forward.9} parent=19 // pred_region
        %s397 = smul.u32 4, %s26
        %p398 = scmp.lt.s32.totalorder %s25, 1
        %s399 = scalar_select %p398, %s25, 1
        %p400 = scmp.lt.s32.totalorder %s397, 3
        %s401 = scalar_select %p400, %s397, 3
        %s402 = smul.addr %s399, 8
        %s403 = sadd.s32 %s401, %s402
        %s404 = smul.addr %s403, 8
        %s405 = scalar_lea.vmem %s1, %s404
        %s406 = smul.u32 4, %s26
      $region28: #{sia_forward.9} parent=19 // pred_fallthru
        _
      // Predicated region
      $region29: #{sia_forward.9} parent=19 // pred_check
        %p407 = pneg %p108
      $region30: #{sia_forward.9} parent=19 // pred_check_branch
        %409 = sbr.rel (%p407) target = $region32
      $region31: #{sia_forward.9} parent=19 // pred_region
        %s410 = smul.u32 4, %s26
        %p411 = scmp.lt.s32.totalorder %s25, 1
        %s412 = scalar_select %p411, %s25, 1
        %p413 = scmp.lt.s32.totalorder %s410, 3
        %s414 = scalar_select %p413, %s410, 3
        %s415 = smul.addr %s412, 8
        %s416 = sadd.s32 %s414, %s415
        %s417 = smul.addr %s416, 8
        %s418 = scalar_lea.vmem %s2, %s417
        %s419 = smul.u32 4, %s26
      $region32: #{sia_forward.9} parent=19 // pred_fallthru
        _
      // Predicated region
      $region33: #{sia_forward.9} parent=19 // pred_check
        %p420 = pneg %p136
      $region34: #{sia_forward.9} parent=19 // pred_check_branch
        %422 = sbr.rel (%p420) target = $region36
      $region35: #{sia_forward.9} parent=19 // pred_region
        %s423 = smul.u32 4, %s26
        %p424 = scmp.lt.s32.totalorder %s25, 1
        %s425 = scalar_select %p424, %s25, 1
        %p426 = scmp.lt.s32.totalorder %s423, 3
        %s427 = scalar_select %p426, %s423, 3
        %s428 = smul.addr %s425, 8
        %s429 = sadd.s32 %s427, %s428
        %s430 = smul.addr %s429, 8
        %s431 = scalar_lea.vmem %s3, %s430
        %s432 = smul.u32 4, %s26
      $region36: #{sia_forward.9} parent=19 // pred_fallthru
        _
      // Predicated region
      $region37: #{sia_forward.9} parent=19 // pred_check
        %p433 = pneg %p164
      $region38: #{sia_forward.9} parent=19 // pred_check_branch
        %435 = sbr.rel (%p433) target = $region40
      $region39: #{sia_forward.9} parent=19 // pred_region
        %s436 = smul.u32 4, %s26
        %p437 = scmp.lt.s32.totalorder %s25, 1
        %s438 = scalar_select %p437, %s25, 1
        %p439 = scmp.lt.s32.totalorder %s436, 3
        %s440 = scalar_select %p439, %s436, 3
        %s441 = smul.addr %s438, 4
        %s442 = sadd.s32 %s440, %s441
        %s443 = scalar_lea.vmem %s4, %s442
        %s444 = smul.u32 4, %s26
      $region40: #{sia_forward.9} parent=19 // pred_fallthru
        _
      // Predicated region
      $region41: #{sia_forward.9} parent=19 // pred_check
        %p445 = pneg %p192
      $region42: #{sia_forward.9} parent=19 // pred_check_branch
        %447 = sbr.rel (%p445) target = $region44
      $region43: #{sia_forward.9} parent=19 // pred_region
        %s448 = smul.u32 4, %s26
        %p449 = scmp.lt.s32.totalorder %s25, 1
        %s450 = scalar_select %p449, %s25, 1
        %p451 = scmp.lt.s32.totalorder %s448, 3
        %s452 = scalar_select %p451, %s448, 3
        %s453 = smul.addr %s450, 4
        %s454 = sadd.s32 %s452, %s453
        %s455 = scalar_lea.vmem %s5, %s454
        %s456 = smul.u32 4, %s26
      $region44: #{sia_forward.9} parent=19 // pred_fallthru
        _
      // Predicated region
      $region45: #{sia_forward.9} parent=19 // pred_check
        %p457 = pneg %p220
      $region46: #{sia_forward.9} parent=19 // pred_check_branch
        %459 = sbr.rel (%p457) target = $region48
      $region47: #{sia_forward.9} parent=19 // pred_region
        %s460 = smul.u32 4, %s26
        %p461 = scmp.lt.s32.totalorder %s25, 1
        %s462 = scalar_select %p461, %s25, 1
        %p463 = scmp.lt.s32.totalorder %s460, 3
        %s464 = scalar_select %p463, %s460, 3
        %s465 = smul.addr %s462, 4
        %s466 = sadd.s32 %s464, %s465
        %s467 = scalar_lea.vmem %s6, %s466
        %s468 = smul.u32 4, %s26
      $region48: #{sia_forward.9} parent=19 // pred_fallthru
        _
      // Predicated region
      $region49: #{sia_forward.9} parent=19 // pred_check
        %p469 = pneg %p248
      $region50: #{sia_forward.9} parent=19 // pred_check_branch
        %471 = sbr.rel (%p469) target = $region52
      $region51: #{sia_forward.9} parent=19 // pred_region
        %s472 = smul.u32 4, %s26
        %p473 = scmp.lt.s32.totalorder %s25, 1
        %s474 = scalar_select %p473, %s25, 1
        %p475 = scmp.lt.s32.totalorder %s472, 3
        %s476 = scalar_select %p475, %s472, 3
        %s477 = smul.addr %s474, 4
        %s478 = sadd.s32 %s476, %s477
        %s479 = scalar_lea.vmem %s7, %s478
        %s480 = smul.u32 4, %s26
      $region52: #{sia_forward.9} parent=19 // pred_fallthru
        _
      // Predicated region
      $region53: #{sia_forward.9} parent=19 // pred_check
        %p481 = pneg %p276
      $region54: #{sia_forward.9} parent=19 // pred_check_branch
        %483 = sbr.rel (%p481) target = $region56
      $region55: #{sia_forward.9} parent=19 // pred_region
        %s484 = smul.u32 4, %s26
        %p485 = scmp.lt.s32.totalorder %s25, 1
        %s486 = scalar_select %p485, %s25, 1
        %p487 = scmp.lt.s32.totalorder %s484, 3
        %s488 = scalar_select %p487, %s484, 3
        %s489 = smul.addr %s486, 4
        %s490 = sadd.s32 %s488, %s489
        %s491 = scalar_lea.vmem %s8, %s490
        %s492 = smul.u32 4, %s26
      $region56: #{sia_forward.9} parent=19 // pred_fallthru
        _
      // Predicated region
      $region57: #{sia_forward.9} parent=19 // pred_check
        %p493 = pneg %p304
      $region58: #{sia_forward.9} parent=19 // pred_check_branch
        %495 = sbr.rel (%p493) target = $region60
      $region59: #{sia_forward.9} parent=19 // pred_region
        %s496 = smul.u32 4, %s26
        %p497 = scmp.lt.s32.totalorder %s25, 1
        %s498 = scalar_select %p497, %s25, 1
        %p499 = scmp.lt.s32.totalorder %s496, 3
        %s500 = scalar_select %p499, %s496, 3
        %s501 = smul.addr %s498, 4
        %s502 = sadd.s32 %s500, %s501
        %s503 = scalar_lea.vmem %s9, %s502
        %s504 = smul.u32 4, %s26
      $region60: #{sia_forward.9} parent=19 // pred_fallthru
        _
    $region20: #{sia_forward.9} parent=5 // pred_fallthru
      _
    %p505 = scmp.le.s32.totalorder 1, %s18
    %p506 = scmp.lt.s32.totalorder %s18, 3
    %p507 = pnand %p505, %p506
    %p508 = pneg %p507
    // Predicated region
    $region61: #{sia_forward.9} parent=5 // pred_check
      _
    $region62: #{sia_forward.9} parent=5 // pred_check_branch
      %510 = sbr.rel (%p507) target = $region64
    $region63: #{sia_forward.9} parent=5 // pred_region
      %s511 = ssub.s32 %s18, 1
      %s512 = smul.u32 4, %s28
      %p513 = scmp.lt.s32.totalorder %s27, 1
      %s514 = scalar_select %p513, %s27, 1
      %p515 = scmp.lt.s32.totalorder %s512, 3
      %s516 = scalar_select %p515, %s512, 3
      %s517 = smul.addr %s514, 8
      %s518 = sadd.s32 %s516, %s517
      %s519 = smul.addr %s518, 8
      %s520 = scalar_lea.vmem %s0, %s519
      %p521 = pneg %p58
      %p522 = pneg %p55
      %s523 = smul.u32 4, %s28
      %p524 = scmp.lt.s32.totalorder %s27, 1
      %s525 = scalar_select %p524, %s27, 1
      %p526 = scmp.lt.s32.totalorder %s523, 3
      %s527 = scalar_select %p526, %s523, 3
      %s528 = smul.addr %s525, 8
      %s529 = sadd.s32 %s527, %s528
      %s530 = smul.addr %s529, 8
      %s531 = scalar_lea.vmem %s1, %s530
      %p532 = pneg %p86
      %p533 = pneg %p83
      %s534 = smul.u32 4, %s28
      %p535 = scmp.lt.s32.totalorder %s27, 1
      %s536 = scalar_select %p535, %s27, 1
      %p537 = scmp.lt.s32.totalorder %s534, 3
      %s538 = scalar_select %p537, %s534, 3
      %s539 = smul.addr %s536, 8
      %s540 = sadd.s32 %s538, %s539
      %s541 = smul.addr %s540, 8
      %s542 = scalar_lea.vmem %s2, %s541
      %p543 = pneg %p114
      %p544 = pneg %p111
      %s545 = smul.u32 4, %s28
      %p546 = scmp.lt.s32.totalorder %s27, 1
      %s547 = scalar_select %p546, %s27, 1
      %p548 = scmp.lt.s32.totalorder %s545, 3
      %s549 = scalar_select %p548, %s545, 3
      %s550 = smul.addr %s547, 8
      %s551 = sadd.s32 %s549, %s550
      %s552 = smul.addr %s551, 8
      %s553 = scalar_lea.vmem %s3, %s552
      %p554 = pneg %p142
      %p555 = pneg %p139
      %s556 = smul.u32 4, %s28
      %p557 = scmp.lt.s32.totalorder %s27, 1
      %s558 = scalar_select %p557, %s27, 1
      %p559 = scmp.lt.s32.totalorder %s556, 3
      %s560 = scalar_select %p559, %s556, 3
      %s561 = smul.addr %s558, 4
      %s562 = sadd.s32 %s560, %s561
      %s563 = scalar_lea.vmem %s4, %s562
      %p564 = pneg %p170
      %p565 = pneg %p167
      %s566 = smul.u32 4, %s28
      %p567 = scmp.lt.s32.totalorder %s27, 1
      %s568 = scalar_select %p567, %s27, 1
      %p569 = scmp.lt.s32.totalorder %s566, 3
      %s570 = scalar_select %p569, %s566, 3
      %s571 = smul.addr %s568, 4
      %s572 = sadd.s32 %s570, %s571
      %s573 = scalar_lea.vmem %s5, %s572
      %p574 = pneg %p198
      %p575 = pneg %p195
      %s576 = smul.u32 4, %s28
      %p577 = scmp.lt.s32.totalorder %s27, 1
      %s578 = scalar_select %p577, %s27, 1
      %p579 = scmp.lt.s32.totalorder %s576, 3
      %s580 = scalar_select %p579, %s576, 3
      %s581 = smul.addr %s578, 4
      %s582 = sadd.s32 %s580, %s581
      %s583 = scalar_lea.vmem %s6, %s582
      %p584 = pneg %p226
      %p585 = pneg %p223
      %s586 = smul.u32 4, %s28
      %p587 = scmp.lt.s32.totalorder %s27, 1
      %s588 = scalar_select %p587, %s27, 1
      %p589 = scmp.lt.s32.totalorder %s586, 3
      %s590 = scalar_select %p589, %s586, 3
      %s591 = smul.addr %s588, 4
      %s592 = sadd.s32 %s590, %s591
      %s593 = scalar_lea.vmem %s7, %s592
      %p594 = pneg %p254
      %p595 = pneg %p251
      %s596 = smul.u32 4, %s28
      %p597 = scmp.lt.s32.totalorder %s27, 1
      %s598 = scalar_select %p597, %s27, 1
      %p599 = scmp.lt.s32.totalorder %s596, 3
      %s600 = scalar_select %p599, %s596, 3
      %s601 = smul.addr %s598, 4
      %s602 = sadd.s32 %s600, %s601
      %s603 = scalar_lea.vmem %s8, %s602
      %p604 = pneg %p282
      %p605 = pneg %p279
      %s606 = smul.u32 4, %s28
      %p607 = scmp.lt.s32.totalorder %s27, 1
      %s608 = scalar_select %p607, %s27, 1
      %p609 = scmp.lt.s32.totalorder %s606, 3
      %s610 = scalar_select %p609, %s606, 3
      %s611 = smul.addr %s608, 4
      %s612 = sadd.s32 %s610, %s611
      %s613 = scalar_lea.vmem %s9, %s612
      %p614 = pneg %p310
      %p615 = pneg %p307
      %p616 = pneg %p331
      %p617 = pneg %p328
      %p618 = pneg %p359
      %p619 = pneg %p356
      %s620 = smul.u32 4, %s28
      %p621 = scmp.lt.s32.totalorder %s27, 1
      %s622 = scalar_select %p621, %s27, 1
      %p623 = scmp.lt.s32.totalorder %s620, 3
      %s624 = scalar_select %p623, %s620, 3
      %s625 = smul.addr %s622, 8
      %s626 = sadd.s32 %s624, %s625
      %s627 = smul.addr %s626, 8
      %s628 = scalar_lea.vmem %s11, %s627
      %s629 = smul.u32 4, %s28
      %p630 = scmp.lt.s32.totalorder %s27, 1
      %s631 = scalar_select %p630, %s27, 1
      %p632 = scmp.lt.s32.totalorder %s629, 3
      %s633 = scalar_select %p632, %s629, 3
      %s634 = smul.addr %s631, 8
      %s635 = sadd.s32 %s633, %s634
      %s636 = smul.addr %s635, 8
      %s637 = scalar_lea.vmem %s0, %s636
      %s638 = smul.u32 4, %s28
      %s639 = smul.u32 4, %s28
      %p640 = scmp.lt.s32.totalorder %s27, 1
      %s641 = scalar_select %p640, %s27, 1
      %p642 = scmp.lt.s32.totalorder %s639, 3
      %s643 = scalar_select %p642, %s639, 3
      %s644 = smul.addr %s641, 8
      %s645 = sadd.s32 %s643, %s644
      %s646 = smul.addr %s645, 8
      %s647 = scalar_lea.vmem %s1, %s646
      %s648 = smul.u32 4, %s28
      %s649 = smul.u32 4, %s28
      %p650 = scmp.lt.s32.totalorder %s27, 1
      %s651 = scalar_select %p650, %s27, 1
      %p652 = scmp.lt.s32.totalorder %s649, 3
      %s653 = scalar_select %p652, %s649, 3
      %s654 = smul.addr %s651, 8
      %s655 = sadd.s32 %s653, %s654
      %s656 = smul.addr %s655, 8
      %s657 = scalar_lea.vmem %s2, %s656
      %s658 = smul.u32 4, %s28
      %s659 = smul.u32 4, %s28
      %p660 = scmp.lt.s32.totalorder %s27, 1
      %s661 = scalar_select %p660, %s27, 1
      %p662 = scmp.lt.s32.totalorder %s659, 3
      %s663 = scalar_select %p662, %s659, 3
      %s664 = smul.addr %s661, 8
      %s665 = sadd.s32 %s663, %s664
      %s666 = smul.addr %s665, 8
      %s667 = scalar_lea.vmem %s3, %s666
      %s668 = smul.u32 4, %s28
      %s669 = smul.u32 4, %s28
      %p670 = scmp.lt.s32.totalorder %s27, 1
      %s671 = scalar_select %p670, %s27, 1
      %p672 = scmp.lt.s32.totalorder %s669, 3
      %s673 = scalar_select %p672, %s669, 3
      %s674 = smul.addr %s671, 4
      %s675 = sadd.s32 %s673, %s674
      %s676 = scalar_lea.vmem %s4, %s675
      %s677 = smul.u32 4, %s28
      %s678 = smul.u32 4, %s28
      %p679 = scmp.lt.s32.totalorder %s27, 1
      %s680 = scalar_select %p679, %s27, 1
      %p681 = scmp.lt.s32.totalorder %s678, 3
      %s682 = scalar_select %p681, %s678, 3
      %s683 = smul.addr %s680, 4
      %s684 = sadd.s32 %s682, %s683
      %s685 = scalar_lea.vmem %s5, %s684
      %s686 = smul.u32 4, %s28
      %s687 = smul.u32 4, %s28
      %p688 = scmp.lt.s32.totalorder %s27, 1
      %s689 = scalar_select %p688, %s27, 1
      %p690 = scmp.lt.s32.totalorder %s687, 3
      %s691 = scalar_select %p690, %s687, 3
      %s692 = smul.addr %s689, 4
      %s693 = sadd.s32 %s691, %s692
      %s694 = scalar_lea.vmem %s6, %s693
      %s695 = smul.u32 4, %s28
      %s696 = smul.u32 4, %s28
      %p697 = scmp.lt.s32.totalorder %s27, 1
      %s698 = scalar_select %p697, %s27, 1
      %p699 = scmp.lt.s32.totalorder %s696, 3
      %s700 = scalar_select %p699, %s696, 3
      %s701 = smul.addr %s698, 4
      %s702 = sadd.s32 %s700, %s701
      %s703 = scalar_lea.vmem %s7, %s702
      %s704 = smul.u32 4, %s28
      %s705 = smul.u32 4, %s28
      %p706 = scmp.lt.s32.totalorder %s27, 1
      %s707 = scalar_select %p706, %s27, 1
      %p708 = scmp.lt.s32.totalorder %s705, 3
      %s709 = scalar_select %p708, %s705, 3
      %s710 = smul.addr %s707, 4
      %s711 = sadd.s32 %s709, %s710
      %s712 = scalar_lea.vmem %s8, %s711
      %s713 = smul.u32 4, %s28
      %s714 = smul.u32 4, %s28
      %p715 = scmp.lt.s32.totalorder %s27, 1
      %s716 = scalar_select %p715, %s27, 1
      %p717 = scmp.lt.s32.totalorder %s714, 3
      %s718 = scalar_select %p717, %s714, 3
      %s719 = smul.addr %s716, 4
      %s720 = sadd.s32 %s718, %s719
      %s721 = scalar_lea.vmem %s9, %s720
      %s722 = smul.u32 4, %s28
      %s723 = smul.u32 4, %s28
      %p724 = scmp.lt.s32.totalorder %s27, 1
      %s725 = scalar_select %p724, %s27, 1
      %p726 = scmp.lt.s32.totalorder %s723, 3
      %s727 = scalar_select %p726, %s723, 3
      %s728 = smul.addr %s725, 8
      %s729 = sadd.s32 %s727, %s728
      %s730 = smul.addr %s729, 8
      %s731 = scalar_lea.vmem %s11, %s730
      %s732 = smul.u32 4, %s28
      %v733 = vld [vmem:[%s676] sm:$0xf]
      %v734 = vld [vmem:[%s694] sm:$0xf]
      %v735 = vld [vmem:[%s712] sm:$0xf]
      %v736 = vmax.f32 %v733, %v734
      %v737 = vmax.f32 %v736, %v735
      %v738 = vsub.f32 %v733, %v737
      %v739 = vmul.f32 %v738, 1.442695
      %v740 = vpow.pop %v739
      %v741 = vsub.f32 %v734, %v737
      %v742 = vmul.f32 %v741, 1.442695
      %v743 = vpow.pop %v742
      %v744 = vsub.f32 %v735, %v737
      %v745 = vmul.f32 %v744, 1.442695
      %v746 = vpow.pop %v745
      %v747 = vld [vmem:[%s685] sm:$0xf]
      %v748 = vmul.f32 %v747, %v740
      %v749 = vld [vmem:[%s703] sm:$0xf]
      %v750 = vmul.f32 %v749, %v743
      %v751 = vadd.f32 %v748, %v750
      %v752 = vld [vmem:[%s721] sm:$0xf]
      %v753 = vmul.f32 %v752, %v746
      %v754 = vadd.f32 %v751, %v753
      %v755 = vld [vmem:[%s647] sm:$0xff]
      %v756 = vld [vmem:[%s647 + $0x8] sm:$0xff]
      %v757 = vld [vmem:[%s647 + $0x10] sm:$0xff]
      %v758 = vld [vmem:[%s647 + $0x18] sm:$0xff]
      %v759 = vld [vmem:[%s647 + $0x20] sm:$0xff]
      %v760 = vld [vmem:[%s647 + $0x28] sm:$0xff]
      %v761 = vld [vmem:[%s647 + $0x30] sm:$0xff]
      %v762 = vld [vmem:[%s647 + $0x38] sm:$0xff]
      %v764 = vlaneseq
      %v765 = vshrl.u32 %v764, 7
      %v766 = vsub.s32 0, %v765
      %v767 = vrot.slane %v740, %v766
      %v768 = vlaneseq
      %v769 = vshrl.u32 %v768, 7
      %v770 = vsub.s32 1, %v769
      %v771 = vrot.slane %v740, %v770
      %v772 = vlaneseq
      %v773 = vshrl.u32 %v772, 7
      %v774 = vsub.s32 2, %v773
      %v775 = vrot.slane %v740, %v774
      %v776 = vlaneseq
      %v777 = vshrl.u32 %v776, 7
      %v778 = vsub.s32 3, %v777
      %v779 = vrot.slane %v740, %v778
      %v784 = vmul.f32 %v755, %v767
      %v785 = vmul.f32 %v756, %v771
      %v786 = vmul.f32 %v757, %v775
      %v787 = vmul.f32 %v758, %v779
      %v788 = vmul.f32 %v759, %v767
      %v789 = vmul.f32 %v760, %v771
      %v790 = vmul.f32 %v761, %v775
      %v791 = vmul.f32 %v762, %v779
      %v792 = vld [vmem:[%s657] sm:$0xff]
      %v793 = vld [vmem:[%s657 + $0x8] sm:$0xff]
      %v794 = vld [vmem:[%s657 + $0x10] sm:$0xff]
      %v795 = vld [vmem:[%s657 + $0x18] sm:$0xff]
      %v796 = vld [vmem:[%s657 + $0x20] sm:$0xff]
      %v797 = vld [vmem:[%s657 + $0x28] sm:$0xff]
      %v798 = vld [vmem:[%s657 + $0x30] sm:$0xff]
      %v799 = vld [vmem:[%s657 + $0x38] sm:$0xff]
      %v801 = vlaneseq
      %v802 = vshrl.u32 %v801, 7
      %v803 = vsub.s32 0, %v802
      %v804 = vrot.slane %v743, %v803
      %v805 = vlaneseq
      %v806 = vshrl.u32 %v805, 7
      %v807 = vsub.s32 1, %v806
      %v808 = vrot.slane %v743, %v807
      %v809 = vlaneseq
      %v810 = vshrl.u32 %v809, 7
      %v811 = vsub.s32 2, %v810
      %v812 = vrot.slane %v743, %v811
      %v813 = vlaneseq
      %v814 = vshrl.u32 %v813, 7
      %v815 = vsub.s32 3, %v814
      %v816 = vrot.slane %v743, %v815
      %v821 = vmul.f32 %v792, %v804
      %v822 = vmul.f32 %v793, %v808
      %v823 = vmul.f32 %v794, %v812
      %v824 = vmul.f32 %v795, %v816
      %v825 = vmul.f32 %v796, %v804
      %v826 = vmul.f32 %v797, %v808
      %v827 = vmul.f32 %v798, %v812
      %v828 = vmul.f32 %v799, %v816
      %v829 = vadd.f32 %v784, %v821
      %v830 = vadd.f32 %v785, %v822
      %v831 = vadd.f32 %v786, %v823
      %v832 = vadd.f32 %v787, %v824
      %v833 = vadd.f32 %v788, %v825
      %v834 = vadd.f32 %v789, %v826
      %v835 = vadd.f32 %v790, %v827
      %v836 = vadd.f32 %v791, %v828
      %v837 = vld [vmem:[%s667] sm:$0xff]
      %v838 = vld [vmem:[%s667 + $0x8] sm:$0xff]
      %v839 = vld [vmem:[%s667 + $0x10] sm:$0xff]
      %v840 = vld [vmem:[%s667 + $0x18] sm:$0xff]
      %v841 = vld [vmem:[%s667 + $0x20] sm:$0xff]
      %v842 = vld [vmem:[%s667 + $0x28] sm:$0xff]
      %v843 = vld [vmem:[%s667 + $0x30] sm:$0xff]
      %v844 = vld [vmem:[%s667 + $0x38] sm:$0xff]
      %v846 = vlaneseq
      %v847 = vshrl.u32 %v846, 7
      %v848 = vsub.s32 0, %v847
      %v849 = vrot.slane %v746, %v848
      %v850 = vlaneseq
      %v851 = vshrl.u32 %v850, 7
      %v852 = vsub.s32 1, %v851
      %v853 = vrot.slane %v746, %v852
      %v854 = vlaneseq
      %v855 = vshrl.u32 %v854, 7
      %v856 = vsub.s32 2, %v855
      %v857 = vrot.slane %v746, %v856
      %v858 = vlaneseq
      %v859 = vshrl.u32 %v858, 7
      %v860 = vsub.s32 3, %v859
      %v861 = vrot.slane %v746, %v860
      %v866 = vmul.f32 %v837, %v849
      %v867 = vmul.f32 %v838, %v853
      %v868 = vmul.f32 %v839, %v857
      %v869 = vmul.f32 %v840, %v861
      %v870 = vmul.f32 %v841, %v849
      %v871 = vmul.f32 %v842, %v853
      %v872 = vmul.f32 %v843, %v857
      %v873 = vmul.f32 %v844, %v861
      %v874 = vadd.f32 %v829, %v866
      %v875 = vadd.f32 %v830, %v867
      %v876 = vadd.f32 %v831, %v868
      %v877 = vadd.f32 %v832, %v869
      %v878 = vadd.f32 %v833, %v870
      %v879 = vadd.f32 %v834, %v871
      %v880 = vadd.f32 %v835, %v872
      %v881 = vadd.f32 %v836, %v873
      %s882 = sld [smem:[#allocation2]]
      %v884 = vlaneseq
      %v885 = vshrl.u32 %v884, 7
      %v886 = vsub.s32 0, %v885
      %v887 = vrot.slane %v754, %v886
      %v888 = vlaneseq
      %v889 = vshrl.u32 %v888, 7
      %v890 = vsub.s32 1, %v889
      %v891 = vrot.slane %v754, %v890
      %v892 = vlaneseq
      %v893 = vshrl.u32 %v892, 7
      %v894 = vsub.s32 2, %v893
      %v895 = vrot.slane %v754, %v894
      %v896 = vlaneseq
      %v897 = vshrl.u32 %v896, 7
      %v898 = vsub.s32 3, %v897
      %v899 = vrot.slane %v754, %v898
      %v904 = vrcp.pop %v887
      %v905 = vmul.f32 %v874, %v904
      %v906 = vrcp.pop %v891
      %v907 = vmul.f32 %v875, %v906
      %v908 = vrcp.pop %v895
      %v909 = vmul.f32 %v876, %v908
      %v910 = vrcp.pop %v899
      %v911 = vmul.f32 %v877, %v910
      %v912 = vmul.f32 %v878, %v904
      %v913 = vmul.f32 %v879, %v906
      %v914 = vmul.f32 %v880, %v908
      %v915 = vmul.f32 %v881, %v910
      %v916 = vstv %s882
      %v917 = vmul.f32 %v916, %v905
      %v918 = vmul.f32 %v916, %v907
      %v919 = vmul.f32 %v916, %v909
      %v920 = vmul.f32 %v916, %v911
      %v921 = vmul.f32 %v916, %v912
      %v922 = vmul.f32 %v916, %v913
      %v923 = vmul.f32 %v916, %v914
      %v924 = vmul.f32 %v916, %v915
      %v925 = vld [vmem:[%s637] sm:$0xff]
      %v926 = vld [vmem:[%s637 + $0x8] sm:$0xff]
      %v927 = vld [vmem:[%s637 + $0x10] sm:$0xff]
      %v928 = vld [vmem:[%s637 + $0x18] sm:$0xff]
      %v929 = vld [vmem:[%s637 + $0x20] sm:$0xff]
      %v930 = vld [vmem:[%s637 + $0x28] sm:$0xff]
      %v931 = vld [vmem:[%s637 + $0x30] sm:$0xff]
      %v932 = vld [vmem:[%s637 + $0x38] sm:$0xff]
      %v933 = vadd.f32 %v917, %v925
      %v934 = vadd.f32 %v918, %v926
      %v935 = vadd.f32 %v919, %v927
      %v936 = vadd.f32 %v920, %v928
      %v937 = vadd.f32 %v921, %v929
      %v938 = vadd.f32 %v922, %v930
      %v939 = vadd.f32 %v923, %v931
      %v940 = vadd.f32 %v924, %v932
      %941 = vst [vmem:[%s731] sm:$0xff] %v933
      %942 = vst [vmem:[%s731 + $0x8] sm:$0xff] %v934
      %943 = vst [vmem:[%s731 + $0x10] sm:$0xff] %v935
      %944 = vst [vmem:[%s731 + $0x18] sm:$0xff] %v936
      %945 = vst [vmem:[%s731 + $0x20] sm:$0xff] %v937
      %946 = vst [vmem:[%s731 + $0x28] sm:$0xff] %v938
      %947 = vst [vmem:[%s731 + $0x30] sm:$0xff] %v939
      %948 = vst [vmem:[%s731 + $0x38] sm:$0xff] %v940
      %s949 = smul.u32 4, %s28
      %p950 = scmp.lt.s32.totalorder %s27, 1
      %s951 = scalar_select %p950, %s27, 1
      %p952 = scmp.lt.s32.totalorder %s949, 3
      %s953 = scalar_select %p952, %s949, 3
      %s954 = smul.addr %s951, 8
      %s955 = sadd.s32 %s953, %s954
      %s956 = smul.addr %s955, 8
      %s957 = scalar_lea.vmem %s11, %s956
      // Predicated region
      $region65: #{sia_forward.9} parent=63 // pred_check
        %p958 = pneg %p356
      $region66: #{sia_forward.9} parent=63 // pred_check_branch
        %960 = sbr.rel (%p958) target = $region68
      $region67: #{sia_forward.9} parent=63 // pred_region
        %s961 = smul.u32 4, %s28
      $region68: #{sia_forward.9} parent=63 // pred_fallthru
        _
    $region64: #{sia_forward.9} parent=5 // pred_fallthru
      _
    %p962 = scmp.le.s32.totalorder 2, %s18
    // Predicated region
    $region69: #{sia_forward.9} parent=5 // pred_check
      %p963 = pneg %p962
    $region70: #{sia_forward.9} parent=5 // pred_check_branch
      %965 = sbr.rel (%p963) target = $region72
    $region71: #{sia_forward.9} parent=5 // pred_region
      %s966 = ssub.s32 %s18, 2
      // Predicated region
      $region73: #{sia_forward.9} parent=71 // pred_check
        %p967 = pneg %p362
      $region74: #{sia_forward.9} parent=71 // pred_check_branch
        %969 = sbr.rel (%p967) target = $region76
      $region75: #{sia_forward.9} parent=71 // pred_region
        %s970 = smul.u32 4, %s30
        %p971 = scmp.lt.s32.totalorder %s29, 1
        %s972 = scalar_select %p971, %s29, 1
        %p973 = scmp.lt.s32.totalorder %s970, 3
        %s974 = scalar_select %p973, %s970, 3
        %s975 = smul.addr %s972, 8
        %s976 = sadd.s32 %s974, %s975
        %s977 = smul.addr %s976, 8
        %s978 = scalar_lea.vmem %s11, %s977
      $region76: #{sia_forward.9} parent=71 // pred_fallthru
        _
    $region72: #{sia_forward.9} parent=5 // pred_fallthru
      _
  $region6: #{sia_forward.9} parent=0 // loop_footer
    %s22 = sadd.s32 1, %s18
  $region7: #{sia_forward.9} parent=0 // loop_footer_branch
    %17 = sbr.rel target = $region3
  $region8: #{sia_forward.9} parent=0 // loop_exit
    _

</llo_original>
